<compile_context>
chip_gen: v5e
topology: v5e:2x2
jax: 0.10.0
libtpu: 0.0.40
codegen_flags: <defaults>
</compile_context>

<pallas_src>
import jax
import jax.numpy as jnp
from jax.experimental import pallas as pl
from jax.experimental.pallas import tpu as pltpu

BN_EPS = 1e-5


# --------------------------------------------------------------------------
# Fused kernel: maxpool -> conv1+BN1+ReLU -> conv2+BN2+ReLU
# --------------------------------------------------------------------------
def downconv_kernel(x_ref, w1_ref, b1_ref, g1_ref, bt1_ref,
                    w2_ref, b2_ref, g2_ref, bt2_ref,
                    o_ref, p1_ref, p2_ref):
    # x_ref : (N, H0, W0, Cin)   NHWC input (full batch)
    # w*_ref: (9*C_in_stage, Cout)  im2col-ordered weights
    # b/g/bt: (1, Cout)          conv bias / BN gamma / BN beta
    # o_ref : (N, Cout, H*W)     output (NCHW up to a free wrapper reshape)
    # p1_ref: (N, H+2, W+2, Cin)  VMEM scratch, zero-padded pooled input
    # p2_ref: (N, H+2, W+2, Cout) VMEM scratch, zero-padded stage-1 activation
    N, H0, W0, Cin = x_ref.shape
    H, W = H0 // 2, W0 // 2
    HW = H * W
    Cout = w1_ref.shape[1]
    cnt = float(N * HW)

    # ---- MaxPool2d(2), fully in VMEM (no host-side gather) ----------------
    x = x_ref[...]                                    # (N, H0, W0, Cin)
    x = x.reshape(N, H, 2, W0, Cin)                   # split rows -> (H, 2)
    x = jnp.maximum(x[:, :, 0], x[:, :, 1])           # (N, H, W0, Cin)
    x = x.reshape(N, H, W, 2, Cin)                    # split cols -> (W, 2)
    pooled = jnp.maximum(x[:, :, :, 0, :], x[:, :, :, 1, :])   # (N, H, W, Cin)

    def conv_bn_relu(src, pad_ref, w_ref, b_ref, g_ref, bt_ref):
        # src: (N, H, W, C) -> returns post-BN/ReLU activation (N*H*W, Cout)
        C = src.shape[-1]
        pad_ref[...] = jnp.zeros_like(pad_ref)
        pad_ref[:, 1:H + 1, 1:W + 1, :] = src
        taps = [pad_ref[:, dy:dy + H, dx:dx + W, :]     # (N, H, W, C) each
                for dy in range(3) for dx in range(3)]
        im = jnp.concatenate(taps, axis=-1).reshape(N * HW, 9 * C)
        y = jnp.dot(im, w_ref[...],
                    preferred_element_type=jnp.float32) + b_ref[...]
        # BatchNorm, training-mode forward: batch mean + biased variance
        # (two-pass / centered to avoid E[x^2]-E[x]^2 cancellation).
        mean = jnp.sum(y, axis=0, keepdims=True) / cnt
        var = jnp.sum((y - mean) * (y - mean), axis=0, keepdims=True) / cnt
        scale = g_ref[...] * jax.lax.rsqrt(var + BN_EPS)
        shift = bt_ref[...] - mean * scale
        return jnp.maximum(y * scale + shift, 0.0)      # (N*HW, Cout)

    a1 = conv_bn_relu(pooled, p1_ref, w1_ref, b1_ref, g1_ref, bt1_ref)
    a2 = conv_bn_relu(a1.reshape(N, H, W, Cout), p2_ref,
                      w2_ref, b2_ref, g2_ref, bt2_ref)

    # ---- store as (N, Cout, H*W): channels-major per sample (NCHW order) ---
    a2t = a2.T                                          # (Cout, N*HW)
    for n in range(N):                                  # N is small & static
        o_ref[n] = a2t[:, n * HW:(n + 1) * HW]


# --------------------------------------------------------------------------
# Wrapper (NCHW in / NCHW out, matching the PyTorch module)
# --------------------------------------------------------------------------
@jax.jit
def down_conv_forward(x_nchw, params):
    N, Cin, H0, W0 = x_nchw.shape
    Cout = params["w1"].shape[-1]
    H, W = H0 // 2, W0 // 2

    x_nhwc = jnp.transpose(x_nchw, (0, 2, 3, 1)).astype(jnp.float32)
    w1m = params["w1"].reshape(9 * Cin, Cout).astype(jnp.float32)
    w2m = params["w2"].reshape(9 * Cout, Cout).astype(jnp.float32)
    row = lambda v: v.reshape(1, Cout).astype(jnp.float32)

    vec_spec = pl.BlockSpec((1, Cout), lambda i: (0, 0))
    out = pl.pallas_call(
        downconv_kernel,
        out_shape=jax.ShapeDtypeStruct((N, Cout, H * W), jnp.float32),
        grid=(1,),
        in_specs=[
            pl.BlockSpec((N, H0, W0, Cin), lambda i: (0, 0, 0, 0)),
            pl.BlockSpec((9 * Cin, Cout), lambda i: (0, 0)),
            vec_spec, vec_spec, vec_spec,
            pl.BlockSpec((9 * Cout, Cout), lambda i: (0, 0)),
            vec_spec, vec_spec, vec_spec,
        ],
        out_specs=pl.BlockSpec((N, Cout, H * W), lambda i: (0, 0, 0)),
        scratch_shapes=[
            pltpu.VMEM((N, H + 2, W + 2, Cin), jnp.float32),
            pltpu.VMEM((N, H + 2, W + 2, Cout), jnp.float32),
        ],
        compiler_params=pltpu.CompilerParams(
            dimension_semantics=("arbitrary",)),
    )(x_nhwc, w1m, row(params["b1"]), row(params["g1"]), row(params["beta1"]),
      w2m, row(params["b2"]), row(params["g2"]), row(params["beta2"]))
    # Contiguous (free) reshape back to NCHW.
    return out.reshape(N, Cout, H, W)


# --------------------------------------------------------------------------
# Pure-JAX reference (for correctness check)
# --------------------------------------------------------------------------
def _ref_stage(x_nhwc, w, b, gamma, beta):
    N, H, W, Cin = x_nhwc.shape
    Cout = w.shape[-1]
    xp = jnp.pad(x_nhwc, ((0, 0), (1, 1), (1, 1), (0, 0)))
    out = jnp.zeros((N, H, W, Cout), jnp.float32)
    for dy in range(3):
        for dx in range(3):
            out = out + jnp.einsum("nhwc,co->nhwo",
                                   xp[:, dy:dy + H, dx:dx + W, :], w[dy, dx])
    out = out + b
    mean = out.mean(axis=(0, 1, 2))
    var = out.var(axis=(0, 1, 2))
    out = (out - mean) * jax.lax.rsqrt(var + BN_EPS) * gamma + beta
    return jnp.maximum(out, 0.0)


def ref_forward(x_nchw, p):
    N, C, H, W = x_nchw.shape
    x = x_nchw.reshape(N, C, H // 2, 2, W // 2, 2).max(axis=(3, 5))
    x = jnp.transpose(x, (0, 2, 3, 1))
    x = _ref_stage(x, p["w1"], p["b1"], p["g1"], p["beta1"])
    x = _ref_stage(x, p["w2"], p["b2"], p["g2"], p["beta2"])
    return jnp.transpose(x, (0, 3, 1, 2))


# --------------------------------------------------------------------------
if __name__ == "__main__":
    in_chan, out_chan = 4, 8
    N, H, W = 2, 16, 16

    key = jax.random.PRNGKey(0)
    ks = jax.random.split(key, 9)
    params = {
        "w1": 0.1 * jax.random.normal(ks[0], (3, 3, in_chan, out_chan), jnp.float32),
        "b1": 0.1 * jax.random.normal(ks[1], (out_chan,), jnp.float32),
        "g1": 1.0 + 0.1 * jax.random.normal(ks[2], (out_chan,), jnp.float32),
        "beta1": 0.1 * jax.random.normal(ks[3], (out_chan,), jnp.float32),
        "w2": 0.1 * jax.random.normal(ks[4], (3, 3, out_chan, out_chan), jnp.float32),
        "b2": 0.1 * jax.random.normal(ks[5], (out_chan,), jnp.float32),
        "g2": 1.0 + 0.1 * jax.random.normal(ks[6], (out_chan,), jnp.float32),
        "beta2": 0.1 * jax.random.normal(ks[7], (out_chan,), jnp.float32),
    }
    x = jax.random.normal(ks[8], (N, in_chan, H, W), jnp.float32)

    out = jax.block_until_ready(down_conv_forward(x, params))

    ref = ref_forward(x, params)
    assert out.shape == (N, out_chan, H // 2, W // 2), out.shape
    max_err = float(jnp.max(jnp.abs(out - ref)))
    assert jnp.allclose(out, ref, atol=1e-4, rtol=1e-4), max_err

    print("KERNEL_OK")
</pallas_src>

<mosaic_0001>
module attributes {stable_mosaic.version = 11 : i64} {
  func.func @downconv_kernel(%arg0: i32, %arg1: memref<2x16x16x4xf32, #tpu.memory_space<vmem>>, %arg2: memref<36x8xf32, #tpu.memory_space<vmem>>, %arg3: memref<1x8xf32, #tpu.memory_space<vmem>>, %arg4: memref<1x8xf32, #tpu.memory_space<vmem>>, %arg5: memref<1x8xf32, #tpu.memory_space<vmem>>, %arg6: memref<72x8xf32, #tpu.memory_space<vmem>>, %arg7: memref<1x8xf32, #tpu.memory_space<vmem>>, %arg8: memref<1x8xf32, #tpu.memory_space<vmem>>, %arg9: memref<1x8xf32, #tpu.memory_space<vmem>>, %arg10: memref<2x8x64xf32, #tpu.memory_space<vmem>>, %arg11: memref<2x10x10x4xf32, #tpu.memory_space<vmem>>, %arg12: memref<2x10x10x8xf32, #tpu.memory_space<vmem>>) attributes {dimension_semantics = [#tpu.dimension_semantics<arbitrary>], iteration_bounds = array<i64: 1>, scalar_prefetch = 0 : i64, scratch_operands = 2 : i64, tpu.core_type = #tpu.core_type<tc>, window_params = [{pipeline_mode = #tpu.pipeline_mode<synchronous>, transform_indices = @transform_0, window_bounds = array<i64: 2, 16, 16, 4>}, {pipeline_mode = #tpu.pipeline_mode<synchronous>, transform_indices = @transform_1, window_bounds = array<i64: 36, 8>}, {pipeline_mode = #tpu.pipeline_mode<synchronous>, transform_indices = @transform_2, window_bounds = array<i64: 1, 8>}, {pipeline_mode = #tpu.pipeline_mode<synchronous>, transform_indices = @transform_3, window_bounds = array<i64: 1, 8>}, {pipeline_mode = #tpu.pipeline_mode<synchronous>, transform_indices = @transform_4, window_bounds = array<i64: 1, 8>}, {pipeline_mode = #tpu.pipeline_mode<synchronous>, transform_indices = @transform_5, window_bounds = array<i64: 72, 8>}, {pipeline_mode = #tpu.pipeline_mode<synchronous>, transform_indices = @transform_6, window_bounds = array<i64: 1, 8>}, {pipeline_mode = #tpu.pipeline_mode<synchronous>, transform_indices = @transform_7, window_bounds = array<i64: 1, 8>}, {pipeline_mode = #tpu.pipeline_mode<synchronous>, transform_indices = @transform_8, window_bounds = array<i64: 1, 8>}, {pipeline_mode = #tpu.pipeline_mode<synchronous>, transform_indices = @transform_9, window_bounds = array<i64: 2, 8, 64>}]} {
    %c0 = arith.constant 0 : index
    %c0_0 = arith.constant 0 : index
    %c0_1 = arith.constant 0 : index
    %c0_2 = arith.constant 0 : index
    %0 = vector.load %arg1[%c0, %c0_0, %c0_1, %c0_2] : memref<2x16x16x4xf32, #tpu.memory_space<vmem>>, vector<2x16x16x4xf32>
    %1 = vector.shape_cast %0 : vector<2x16x16x4xf32> to vector<2x8x2x16x4xf32>
    %2 = vector.extract_strided_slice %1 {offsets = [0, 0, 0, 0, 0], sizes = [2, 8, 1, 16, 4], strides = [1, 1, 1, 1, 1]} : vector<2x8x2x16x4xf32> to vector<2x8x1x16x4xf32>
    %3 = vector.shape_cast %2 : vector<2x8x1x16x4xf32> to vector<2x8x16x4xf32>
    %4 = vector.extract_strided_slice %1 {offsets = [0, 0, 1, 0, 0], sizes = [2, 8, 1, 16, 4], strides = [1, 1, 1, 1, 1]} : vector<2x8x2x16x4xf32> to vector<2x8x1x16x4xf32>
    %5 = vector.shape_cast %4 : vector<2x8x1x16x4xf32> to vector<2x8x16x4xf32>
    %6 = arith.maximumf %3, %5 : vector<2x8x16x4xf32>
    %7 = vector.shape_cast %6 : vector<2x8x16x4xf32> to vector<2x8x8x2x4xf32>
    %8 = vector.extract_strided_slice %7 {offsets = [0, 0, 0, 0, 0], sizes = [2, 8, 8, 1, 4], strides = [1, 1, 1, 1, 1]} : vector<2x8x8x2x4xf32> to vector<2x8x8x1x4xf32>
    %9 = vector.shape_cast %8 : vector<2x8x8x1x4xf32> to vector<2x8x8x4xf32>
    %10 = vector.extract_strided_slice %7 {offsets = [0, 0, 0, 1, 0], sizes = [2, 8, 8, 1, 4], strides = [1, 1, 1, 1, 1]} : vector<2x8x8x2x4xf32> to vector<2x8x8x1x4xf32>
    %11 = vector.shape_cast %10 : vector<2x8x8x1x4xf32> to vector<2x8x8x4xf32>
    %12 = arith.maximumf %9, %11 : vector<2x8x8x4xf32>
    %cst = arith.constant 0.000000e+00 : f32
    %13 = vector.broadcast %cst : f32 to vector<2x10x10x4xf32>
    %c0_3 = arith.constant 0 : index
    %c0_4 = arith.constant 0 : index
    %c0_5 = arith.constant 0 : index
    %c0_6 = arith.constant 0 : index
    %14 = vector.load %arg11[%c0_3, %c0_4, %c0_5, %c0_6] : memref<2x10x10x4xf32, #tpu.memory_space<vmem>>, vector<2x10x10x4xf32>
    tpu.vector_store %arg11[%c0_3, %c0_4, %c0_5, %c0_6], %13 {strides = array<i32>} : memref<2x10x10x4xf32, #tpu.memory_space<vmem>>, vector<2x10x10x4xf32>,
    %c0_7 = arith.constant 0 : index
    %c1 = arith.constant 1 : index
    %c1_8 = arith.constant 1 : index
    %c0_9 = arith.constant 0 : index
    %15 = vector.load %arg11[%c0_7, %c1, %c1_8, %c0_9] : memref<2x10x10x4xf32, #tpu.memory_space<vmem>>, vector<2x8x8x4xf32>
    tpu.vector_store %arg11[%c0_7, %c1, %c1_8, %c0_9], %12 {strides = array<i32>} : memref<2x10x10x4xf32, #tpu.memory_space<vmem>>, vector<2x8x8x4xf32>,
    %c0_10 = arith.constant 0 : index
    %c0_11 = arith.constant 0 : index
    %c0_12 = arith.constant 0 : index
    %c0_13 = arith.constant 0 : index
    %16 = vector.load %arg11[%c0_10, %c0_11, %c0_12, %c0_13] : memref<2x10x10x4xf32, #tpu.memory_space<vmem>>, vector<2x8x8x4xf32>
    %c0_14 = arith.constant 0 : index
    %c0_15 = arith.constant 0 : index
    %c1_16 = arith.constant 1 : index
    %c0_17 = arith.constant 0 : index
    %17 = vector.load %arg11[%c0_14, %c0_15, %c1_16, %c0_17] : memref<2x10x10x4xf32, #tpu.memory_space<vmem>>, vector<2x8x8x4xf32>
    %c0_18 = arith.constant 0 : index
    %c0_19 = arith.constant 0 : index
    %c2 = arith.constant 2 : index
    %c0_20 = arith.constant 0 : index
    %18 = vector.load %arg11[%c0_18, %c0_19, %c2, %c0_20] : memref<2x10x10x4xf32, #tpu.memory_space<vmem>>, vector<2x8x8x4xf32>
    %c0_21 = arith.constant 0 : index
    %c1_22 = arith.constant 1 : index
    %c0_23 = arith.constant 0 : index
    %c0_24 = arith.constant 0 : index
    %19 = vector.load %arg11[%c0_21, %c1_22, %c0_23, %c0_24] : memref<2x10x10x4xf32, #tpu.memory_space<vmem>>, vector<2x8x8x4xf32>
    %c0_25 = arith.constant 0 : index
    %c1_26 = arith.constant 1 : index
    %c1_27 = arith.constant 1 : index
    %c0_28 = arith.constant 0 : index
    %20 = vector.load %arg11[%c0_25, %c1_26, %c1_27, %c0_28] : memref<2x10x10x4xf32, #tpu.memory_space<vmem>>, vector<2x8x8x4xf32>
    %c0_29 = arith.constant 0 : index
    %c1_30 = arith.constant 1 : index
    %c2_31 = arith.constant 2 : index
    %c0_32 = arith.constant 0 : index
    %21 = vector.load %arg11[%c0_29, %c1_30, %c2_31, %c0_32] : memref<2x10x10x4xf32, #tpu.memory_space<vmem>>, vector<2x8x8x4xf32>
    %c0_33 = arith.constant 0 : index
    %c2_34 = arith.constant 2 : index
    %c0_35 = arith.constant 0 : index
    %c0_36 = arith.constant 0 : index
    %22 = vector.load %arg11[%c0_33, %c2_34, %c0_35, %c0_36] : memref<2x10x10x4xf32, #tpu.memory_space<vmem>>, vector<2x8x8x4xf32>
    %c0_37 = arith.constant 0 : index
    %c2_38 = arith.constant 2 : index
    %c1_39 = arith.constant 1 : index
    %c0_40 = arith.constant 0 : index
    %23 = vector.load %arg11[%c0_37, %c2_38, %c1_39, %c0_40] : memref<2x10x10x4xf32, #tpu.memory_space<vmem>>, vector<2x8x8x4xf32>
    %c0_41 = arith.constant 0 : index
    %c2_42 = arith.constant 2 : index
    %c2_43 = arith.constant 2 : index
    %c0_44 = arith.constant 0 : index
    %24 = vector.load %arg11[%c0_41, %c2_42, %c2_43, %c0_44] : memref<2x10x10x4xf32, #tpu.memory_space<vmem>>, vector<2x8x8x4xf32>
    %25 = tpu.concatenate %16, %17, %18, %19, %20, %21, %22, %23, %24 in 3 : vector<2x8x8x4xf32>, vector<2x8x8x4xf32>, vector<2x8x8x4xf32>, vector<2x8x8x4xf32>, vector<2x8x8x4xf32>, vector<2x8x8x4xf32>, vector<2x8x8x4xf32>, vector<2x8x8x4xf32>, vector<2x8x8x4xf32> -> vector<2x8x8x36xf32>
    %26 = vector.shape_cast %25 : vector<2x8x8x36xf32> to vector<128x36xf32>
    %c0_45 = arith.constant 0 : index
    %c0_46 = arith.constant 0 : index
    %27 = vector.load %arg2[%c0_45, %c0_46] : memref<36x8xf32, #tpu.memory_space<vmem>>, vector<36x8xf32>
    %cst_47 = arith.constant dense<0.000000e+00> : vector<128x8xf32>
    %28 = tpu.matmul %26, %27, %cst_47 {dimension_numbers = #tpu.dot_dimension_numbers<[1], [0], [0], [1], [0, 0, 1, 1], [], []>} : vector<128x36xf32>, vector<36x8xf32>, vector<128x8xf32> -> vector<128x8xf32>
    %c0_48 = arith.constant 0 : index
    %c0_49 = arith.constant 0 : index
    %29 = vector.load %arg3[%c0_48, %c0_49] : memref<1x8xf32, #tpu.memory_space<vmem>>, vector<1x8xf32>
    %30 = vector.broadcast %29 : vector<1x8xf32> to vector<128x8xf32>
    %31 = arith.addf %28, %30 : vector<128x8xf32>
    %cst_50 = arith.constant dense<0.000000e+00> : vector<8xf32>
    %32 = vector.multi_reduction <add>, %31, %cst_50 [0] : vector<128x8xf32> to vector<8xf32>
    %33 = vector.shape_cast %32 : vector<8xf32> to vector<1x8xf32>
    %cst_51 = arith.constant 1.280000e+02 : f32
    %34 = vector.broadcast %cst_51 : f32 to vector<1x8xf32>
    %35 = arith.divf %33, %34 : vector<1x8xf32>
    %36 = vector.broadcast %35 : vector<1x8xf32> to vector<128x8xf32>
    %37 = arith.subf %31, %36 : vector<128x8xf32>
    %38 = vector.broadcast %35 : vector<1x8xf32> to vector<128x8xf32>
    %39 = arith.subf %31, %38 : vector<128x8xf32>
    %40 = arith.mulf %37, %39 : vector<128x8xf32>
    %cst_52 = arith.constant dense<0.000000e+00> : vector<8xf32>
    %41 = vector.multi_reduction <add>, %40, %cst_52 [0] : vector<128x8xf32> to vector<8xf32>
    %42 = vector.shape_cast %41 : vector<8xf32> to vector<1x8xf32>
    %cst_53 = arith.constant 1.280000e+02 : f32
    %43 = vector.broadcast %cst_53 : f32 to vector<1x8xf32>
    %44 = arith.divf %42, %43 : vector<1x8xf32>
    %c0_54 = arith.constant 0 : index
    %c0_55 = arith.constant 0 : index
    %45 = vector.load %arg4[%c0_54, %c0_55] : memref<1x8xf32, #tpu.memory_space<vmem>>, vector<1x8xf32>
    %cst_56 = arith.constant 9.99999974E-6 : f32
    %46 = vector.broadcast %cst_56 : f32 to vector<1x8xf32>
    %47 = arith.addf %44, %46 : vector<1x8xf32>
    %48 = math.rsqrt %47 : vector<1x8xf32>
    %49 = arith.mulf %45, %48 : vector<1x8xf32>
    %c0_57 = arith.constant 0 : index
    %c0_58 = arith.constant 0 : index
    %50 = vector.load %arg5[%c0_57, %c0_58] : memref<1x8xf32, #tpu.memory_space<vmem>>, vector<1x8xf32>
    %51 = arith.mulf %35, %49 : vector<1x8xf32>
    %52 = arith.subf %50, %51 : vector<1x8xf32>
    %53 = vector.broadcast %49 : vector<1x8xf32> to vector<128x8xf32>
    %54 = arith.mulf %31, %53 : vector<128x8xf32>
    %55 = vector.broadcast %52 : vector<1x8xf32> to vector<128x8xf32>
    %56 = arith.addf %54, %55 : vector<128x8xf32>
    %cst_59 = arith.constant 0.000000e+00 : f32
    %57 = vector.broadcast %cst_59 : f32 to vector<128x8xf32>
    %58 = arith.maximumf %56, %57 : vector<128x8xf32>
    %59 = vector.shape_cast %58 : vector<128x8xf32> to vector<2x8x8x8xf32>
    %cst_60 = arith.constant 0.000000e+00 : f32
    %60 = vector.broadcast %cst_60 : f32 to vector<2x10x10x8xf32>
    %c0_61 = arith.constant 0 : index
    %c0_62 = arith.constant 0 : index
    %c0_63 = arith.constant 0 : index
    %c0_64 = arith.constant 0 : index
    %61 = vector.load %arg12[%c0_61, %c0_62, %c0_63, %c0_64] : memref<2x10x10x8xf32, #tpu.memory_space<vmem>>, vector<2x10x10x8xf32>
    tpu.vector_store %arg12[%c0_61, %c0_62, %c0_63, %c0_64], %60 {strides = array<i32>} : memref<2x10x10x8xf32, #tpu.memory_space<vmem>>, vector<2x10x10x8xf32>,
    %c0_65 = arith.constant 0 : index
    %c1_66 = arith.constant 1 : index
    %c1_67 = arith.constant 1 : index
    %c0_68 = arith.constant 0 : index
    %62 = vector.load %arg12[%c0_65, %c1_66, %c1_67, %c0_68] : memref<2x10x10x8xf32, #tpu.memory_space<vmem>>, vector<2x8x8x8xf32>
    tpu.vector_store %arg12[%c0_65, %c1_66, %c1_67, %c0_68], %59 {strides = array<i32>} : memref<2x10x10x8xf32, #tpu.memory_space<vmem>>, vector<2x8x8x8xf32>,
    %c0_69 = arith.constant 0 : index
    %c0_70 = arith.constant 0 : index
    %c0_71 = arith.constant 0 : index
    %c0_72 = arith.constant 0 : index
    %63 = vector.load %arg12[%c0_69, %c0_70, %c0_71, %c0_72] : memref<2x10x10x8xf32, #tpu.memory_space<vmem>>, vector<2x8x8x8xf32>
    %c0_73 = arith.constant 0 : index
    %c0_74 = arith.constant 0 : index
    %c1_75 = arith.constant 1 : index
    %c0_76 = arith.constant 0 : index
    %64 = vector.load %arg12[%c0_73, %c0_74, %c1_75, %c0_76] : memref<2x10x10x8xf32, #tpu.memory_space<vmem>>, vector<2x8x8x8xf32>
    %c0_77 = arith.constant 0 : index
    %c0_78 = arith.constant 0 : index
    %c2_79 = arith.constant 2 : index
    %c0_80 = arith.constant 0 : index
    %65 = vector.load %arg12[%c0_77, %c0_78, %c2_79, %c0_80] : memref<2x10x10x8xf32, #tpu.memory_space<vmem>>, vector<2x8x8x8xf32>
    %c0_81 = arith.constant 0 : index
    %c1_82 = arith.constant 1 : index
    %c0_83 = arith.constant 0 : index
    %c0_84 = arith.constant 0 : index
    %66 = vector.load %arg12[%c0_81, %c1_82, %c0_83, %c0_84] : memref<2x10x10x8xf32, #tpu.memory_space<vmem>>, vector<2x8x8x8xf32>
    %c0_85 = arith.constant 0 : index
    %c1_86 = arith.constant 1 : index
    %c1_87 = arith.constant 1 : index
    %c0_88 = arith.constant 0 : index
    %67 = vector.load %arg12[%c0_85, %c1_86, %c1_87, %c0_88] : memref<2x10x10x8xf32, #tpu.memory_space<vmem>>, vector<2x8x8x8xf32>
    %c0_89 = arith.constant 0 : index
    %c1_90 = arith.constant 1 : index
    %c2_91 = arith.constant 2 : index
    %c0_92 = arith.constant 0 : index
    %68 = vector.load %arg12[%c0_89, %c1_90, %c2_91, %c0_92] : memref<2x10x10x8xf32, #tpu.memory_space<vmem>>, vector<2x8x8x8xf32>
    %c0_93 = arith.constant 0 : index
    %c2_94 = arith.constant 2 : index
    %c0_95 = arith.constant 0 : index
    %c0_96 = arith.constant 0 : index
    %69 = vector.load %arg12[%c0_93, %c2_94, %c0_95, %c0_96] : memref<2x10x10x8xf32, #tpu.memory_space<vmem>>, vector<2x8x8x8xf32>
    %c0_97 = arith.constant 0 : index
    %c2_98 = arith.constant 2 : index
    %c1_99 = arith.constant 1 : index
    %c0_100 = arith.constant 0 : index
    %70 = vector.load %arg12[%c0_97, %c2_98, %c1_99, %c0_100] : memref<2x10x10x8xf32, #tpu.memory_space<vmem>>, vector<2x8x8x8xf32>
    %c0_101 = arith.constant 0 : index
    %c2_102 = arith.constant 2 : index
    %c2_103 = arith.constant 2 : index
    %c0_104 = arith.constant 0 : index
    %71 = vector.load %arg12[%c0_101, %c2_102, %c2_103, %c0_104] : memref<2x10x10x8xf32, #tpu.memory_space<vmem>>, vector<2x8x8x8xf32>
    %72 = tpu.concatenate %63, %64, %65, %66, %67, %68, %69, %70, %71 in 3 : vector<2x8x8x8xf32>, vector<2x8x8x8xf32>, vector<2x8x8x8xf32>, vector<2x8x8x8xf32>, vector<2x8x8x8xf32>, vector<2x8x8x8xf32>, vector<2x8x8x8xf32>, vector<2x8x8x8xf32>, vector<2x8x8x8xf32> -> vector<2x8x8x72xf32>
    %73 = vector.shape_cast %72 : vector<2x8x8x72xf32> to vector<128x72xf32>
    %c0_105 = arith.constant 0 : index
    %c0_106 = arith.constant 0 : index
    %74 = vector.load %arg6[%c0_105, %c0_106] : memref<72x8xf32, #tpu.memory_space<vmem>>, vector<72x8xf32>
    %cst_107 = arith.constant dense<0.000000e+00> : vector<128x8xf32>
    %75 = tpu.matmul %73, %74, %cst_107 {dimension_numbers = #tpu.dot_dimension_numbers<[1], [0], [0], [1], [0, 0, 1, 1], [], []>} : vector<128x72xf32>, vector<72x8xf32>, vector<128x8xf32> -> vector<128x8xf32>
    %c0_108 = arith.constant 0 : index
    %c0_109 = arith.constant 0 : index
    %76 = vector.load %arg7[%c0_108, %c0_109] : memref<1x8xf32, #tpu.memory_space<vmem>>, vector<1x8xf32>
    %77 = vector.broadcast %76 : vector<1x8xf32> to vector<128x8xf32>
    %78 = arith.addf %75, %77 : vector<128x8xf32>
    %cst_110 = arith.constant dense<0.000000e+00> : vector<8xf32>
    %79 = vector.multi_reduction <add>, %78, %cst_110 [0] : vector<128x8xf32> to vector<8xf32>
    %80 = vector.shape_cast %79 : vector<8xf32> to vector<1x8xf32>
    %cst_111 = arith.constant 1.280000e+02 : f32
    %81 = vector.broadcast %cst_111 : f32 to vector<1x8xf32>
    %82 = arith.divf %80, %81 : vector<1x8xf32>
    %83 = vector.broadcast %82 : vector<1x8xf32> to vector<128x8xf32>
    %84 = arith.subf %78, %83 : vector<128x8xf32>
    %85 = vector.broadcast %82 : vector<1x8xf32> to vector<128x8xf32>
    %86 = arith.subf %78, %85 : vector<128x8xf32>
    %87 = arith.mulf %84, %86 : vector<128x8xf32>
    %cst_112 = arith.constant dense<0.000000e+00> : vector<8xf32>
    %88 = vector.multi_reduction <add>, %87, %cst_112 [0] : vector<128x8xf32> to vector<8xf32>
    %89 = vector.shape_cast %88 : vector<8xf32> to vector<1x8xf32>
    %cst_113 = arith.constant 1.280000e+02 : f32
    %90 = vector.broadcast %cst_113 : f32 to vector<1x8xf32>
    %91 = arith.divf %89, %90 : vector<1x8xf32>
    %c0_114 = arith.constant 0 : index
    %c0_115 = arith.constant 0 : index
    %92 = vector.load %arg8[%c0_114, %c0_115] : memref<1x8xf32, #tpu.memory_space<vmem>>, vector<1x8xf32>
    %cst_116 = arith.constant 9.99999974E-6 : f32
    %93 = vector.broadcast %cst_116 : f32 to vector<1x8xf32>
    %94 = arith.addf %91, %93 : vector<1x8xf32>
    %95 = math.rsqrt %94 : vector<1x8xf32>
    %96 = arith.mulf %92, %95 : vector<1x8xf32>
    %c0_117 = arith.constant 0 : index
    %c0_118 = arith.constant 0 : index
    %97 = vector.load %arg9[%c0_117, %c0_118] : memref<1x8xf32, #tpu.memory_space<vmem>>, vector<1x8xf32>
    %98 = arith.mulf %82, %96 : vector<1x8xf32>
    %99 = arith.subf %97, %98 : vector<1x8xf32>
    %100 = vector.broadcast %96 : vector<1x8xf32> to vector<128x8xf32>
    %101 = arith.mulf %78, %100 : vector<128x8xf32>
    %102 = vector.broadcast %99 : vector<1x8xf32> to vector<128x8xf32>
    %103 = arith.addf %101, %102 : vector<128x8xf32>
    %cst_119 = arith.constant 0.000000e+00 : f32
    %104 = vector.broadcast %cst_119 : f32 to vector<128x8xf32>
    %105 = arith.maximumf %103, %104 : vector<128x8xf32>
    %106 = tpu.transpose %105, [1, 0] : vector<128x8xf32> -> vector<8x128xf32>
    %107 = vector.extract_strided_slice %106 {offsets = [0, 0], sizes = [8, 64], strides = [1, 1]} : vector<8x128xf32> to vector<8x64xf32>
    %c0_120 = arith.constant 0 : index
    %c0_121 = arith.constant 0 : index
    %c0_122 = arith.constant 0 : index
    %108 = vector.load %arg10[%c0_120, %c0_121, %c0_122] : memref<2x8x64xf32, #tpu.memory_space<vmem>>, vector<1x8x64xf32>
    %109 = vector.shape_cast %108 : vector<1x8x64xf32> to vector<8x64xf32>
    %110 = vector.shape_cast %107 : vector<8x64xf32> to vector<1x8x64xf32>
    tpu.vector_store %arg10[%c0_120, %c0_121, %c0_122], %110 {strides = array<i32>} : memref<2x8x64xf32, #tpu.memory_space<vmem>>, vector<1x8x64xf32>,
    %111 = vector.extract_strided_slice %106 {offsets = [0, 64], sizes = [8, 64], strides = [1, 1]} : vector<8x128xf32> to vector<8x64xf32>
    %c1_123 = arith.constant 1 : index
    %c0_124 = arith.constant 0 : index
    %c0_125 = arith.constant 0 : index
    %112 = vector.load %arg10[%c1_123, %c0_124, %c0_125] : memref<2x8x64xf32, #tpu.memory_space<vmem>>, vector<1x8x64xf32>
    %113 = vector.shape_cast %112 : vector<1x8x64xf32> to vector<8x64xf32>
    %114 = vector.shape_cast %111 : vector<8x64xf32> to vector<1x8x64xf32>
    tpu.vector_store %arg10[%c1_123, %c0_124, %c0_125], %114 {strides = array<i32>} : memref<2x8x64xf32, #tpu.memory_space<vmem>>, vector<1x8x64xf32>,
    return
  }
  func.func @transform_0(%arg0: i32) -> (i32, i32, i32, i32) {
    %c0_i32 = arith.constant 0 : i32
    %c0_i32_0 = arith.constant 0 : i32
    %c0_i32_1 = arith.constant 0 : i32
    %c0_i32_2 = arith.constant 0 : i32
    %c0_i32_3 = arith.constant 0 : i32
    return %c0_i32, %c0_i32_0, %c0_i32_1, %c0_i32_2 : i32, i32, i32, i32
  }
  func.func @transform_1(%arg0: i32) -> (i32, i32) {
    %c0_i32 = arith.constant 0 : i32
    %c0_i32_0 = arith.constant 0 : i32
    %c0_i32_1 = arith.constant 0 : i32
    return %c0_i32, %c0_i32_0 : i32, i32
  }
  func.func @transform_2(%arg0: i32) -> (i32, i32) {
    %c0_i32 = arith.constant 0 : i32
    %c0_i32_0 = arith.constant 0 : i32
    %c0_i32_1 = arith.constant 0 : i32
    return %c0_i32, %c0_i32_0 : i32, i32
  }
  func.func @transform_3(%arg0: i32) -> (i32, i32) {
    %c0_i32 = arith.constant 0 : i32
    %c0_i32_0 = arith.constant 0 : i32
    %c0_i32_1 = arith.constant 0 : i32
    return %c0_i32, %c0_i32_0 : i32, i32
  }
  func.func @transform_4(%arg0: i32) -> (i32, i32) {
    %c0_i32 = arith.constant 0 : i32
    %c0_i32_0 = arith.constant 0 : i32
    %c0_i32_1 = arith.constant 0 : i32
    return %c0_i32, %c0_i32_0 : i32, i32
  }
  func.func @transform_5(%arg0: i32) -> (i32, i32) {
    %c0_i32 = arith.constant 0 : i32
    %c0_i32_0 = arith.constant 0 : i32
    %c0_i32_1 = arith.constant 0 : i32
    return %c0_i32, %c0_i32_0 : i32, i32
  }
  func.func @transform_6(%arg0: i32) -> (i32, i32) {
    %c0_i32 = arith.constant 0 : i32
    %c0_i32_0 = arith.constant 0 : i32
    %c0_i32_1 = arith.constant 0 : i32
    return %c0_i32, %c0_i32_0 : i32, i32
  }
  func.func @transform_7(%arg0: i32) -> (i32, i32) {
    %c0_i32 = arith.constant 0 : i32
    %c0_i32_0 = arith.constant 0 : i32
    %c0_i32_1 = arith.constant 0 : i32
    return %c0_i32, %c0_i32_0 : i32, i32
  }
  func.func @transform_8(%arg0: i32) -> (i32, i32) {
    %c0_i32 = arith.constant 0 : i32
    %c0_i32_0 = arith.constant 0 : i32
    %c0_i32_1 = arith.constant 0 : i32
    return %c0_i32, %c0_i32_0 : i32, i32
  }
  func.func @transform_9(%arg0: i32) -> (i32, i32, i32) {
    %c0_i32 = arith.constant 0 : i32
    %c0_i32_0 = arith.constant 0 : i32
    %c0_i32_1 = arith.constant 0 : i32
    %c0_i32_2 = arith.constant 0 : i32
    return %c0_i32, %c0_i32_0, %c0_i32_1 : i32, i32, i32
  }
}

</mosaic_0001>

<llo_original>
// kernel: down_conv_forward.1
$region0: #{down_conv_forward.1}
  #allocation0 [shape = 'u32[]', space=smem, size = 0x4, offset = 0x4, fixed_abs, tag = 'smem constant byte address 0x4 - core index']
  #allocation1 [shape = 'u32[72,128]{1,0:T(1,128)}', space=vmem, size = 0x9000, scoped, tag = 'internal scratch']
  #allocation2 [shape = 'f32[2,10,10,4]{3,2,1,0:T(8,128)}', space=vmem, size = 0x28000, scoped, tag = 'scratch operand']
  #allocation3 [shape = 'f32[2,10,10,8]{3,2,1,0:T(8,128)}', space=vmem, size = 0x28000, scoped, tag = 'scratch operand']
  %s0 = inlined_call_operand.vmem [shape: f32[2,16,16,4], index: 0, kind: input, shape index: {}]
  %s1 = inlined_call_operand.vmem [shape: f32[36,8], index: 1, kind: input, shape index: {}]
  %s2 = inlined_call_operand.vmem [shape: f32[1,8], index: 2, kind: input, shape index: {}]
  %s3 = inlined_call_operand.vmem [shape: f32[1,8], index: 3, kind: input, shape index: {}]
  %s4 = inlined_call_operand.vmem [shape: f32[1,8], index: 4, kind: input, shape index: {}]
  %s5 = inlined_call_operand.vmem [shape: f32[72,8], index: 5, kind: input, shape index: {}]
  %s6 = inlined_call_operand.vmem [shape: f32[1,8], index: 6, kind: input, shape index: {}]
  %s7 = inlined_call_operand.vmem [shape: f32[1,8], index: 7, kind: input, shape index: {}]
  %s8 = inlined_call_operand.vmem [shape: f32[1,8], index: 8, kind: input, shape index: {}]
  %s9 = inlined_call_operand.vmem [shape: f32[2,8,64], index: 9, kind: output, shape index: {}]
  %s10 = sld [smem:[#allocation0]]
  $region46: #{down_conv_forward.1} parent=0
    _
  %s12 = ssub.s32 1, %s10
  %s13 = scalar_select 0, %s12, %s10
  // Predicated region
  $region2: #{down_conv_forward.1} parent=0 // pred_check
    _
  $region3: #{down_conv_forward.1} parent=0 // pred_check_branch
    %15 = sbr.rel (0) target = $region5
  $region4: #{down_conv_forward.1} parent=0 // pred_region
    _
  $region5: #{down_conv_forward.1} parent=0 // pred_fallthru
    _
  // Predicated region
  $region6: #{down_conv_forward.1} parent=0 // pred_check
    _
  $region7: #{down_conv_forward.1} parent=0 // pred_check_branch
    %17 = sbr.rel (0) target = $region9
  $region8: #{down_conv_forward.1} parent=0 // pred_region
    _
  $region9: #{down_conv_forward.1} parent=0 // pred_fallthru
    _
  // Predicated region
  $region10: #{down_conv_forward.1} parent=0 // pred_check
    _
  $region11: #{down_conv_forward.1} parent=0 // pred_check_branch
    %19 = sbr.rel (0) target = $region13
  $region12: #{down_conv_forward.1} parent=0 // pred_region
    _
  $region13: #{down_conv_forward.1} parent=0 // pred_fallthru
    _
  // Predicated region
  $region14: #{down_conv_forward.1} parent=0 // pred_check
    _
  $region15: #{down_conv_forward.1} parent=0 // pred_check_branch
    %21 = sbr.rel (0) target = $region17
  $region16: #{down_conv_forward.1} parent=0 // pred_region
    _
  $region17: #{down_conv_forward.1} parent=0 // pred_fallthru
    _
  // Predicated region
  $region18: #{down_conv_forward.1} parent=0 // pred_check
    _
  $region19: #{down_conv_forward.1} parent=0 // pred_check_branch
    %23 = sbr.rel (0) target = $region21
  $region20: #{down_conv_forward.1} parent=0 // pred_region
    _
  $region21: #{down_conv_forward.1} parent=0 // pred_fallthru
    _
  // Predicated region
  $region22: #{down_conv_forward.1} parent=0 // pred_check
    _
  $region23: #{down_conv_forward.1} parent=0 // pred_check_branch
    %25 = sbr.rel (0) target = $region25
  $region24: #{down_conv_forward.1} parent=0 // pred_region
    _
  $region25: #{down_conv_forward.1} parent=0 // pred_fallthru
    _
  // Predicated region
  $region26: #{down_conv_forward.1} parent=0 // pred_check
    _
  $region27: #{down_conv_forward.1} parent=0 // pred_check_branch
    %27 = sbr.rel (0) target = $region29
  $region28: #{down_conv_forward.1} parent=0 // pred_region
    _
  $region29: #{down_conv_forward.1} parent=0 // pred_fallthru
    _
  // Predicated region
  $region30: #{down_conv_forward.1} parent=0 // pred_check
    _
  $region31: #{down_conv_forward.1} parent=0 // pred_check_branch
    %29 = sbr.rel (0) target = $region33
  $region32: #{down_conv_forward.1} parent=0 // pred_region
    _
  $region33: #{down_conv_forward.1} parent=0 // pred_fallthru
    _
  // Predicated region
  $region34: #{down_conv_forward.1} parent=0 // pred_check
    _
  $region35: #{down_conv_forward.1} parent=0 // pred_check_branch
    %31 = sbr.rel (0) target = $region37
  $region36: #{down_conv_forward.1} parent=0 // pred_region
    _
  $region37: #{down_conv_forward.1} parent=0 // pred_fallthru
    _
  %v32 = vld [vmem:[%s0] sm:$0xff]
  %v33 = vld [vmem:[%s0 + $0x8] sm:$0xff]
  %v34 = vld [vmem:[%s0 + $0x10] sm:$0xff]
  %v35 = vld [vmem:[%s0 + $0x18] sm:$0xff]
  %v36 = vld [vmem:[%s0 + $0x20] sm:$0xff]
  %v37 = vld [vmem:[%s0 + $0x28] sm:$0xff]
  %v38 = vld [vmem:[%s0 + $0x30] sm:$0xff]
  %v39 = vld [vmem:[%s0 + $0x38] sm:$0xff]
  %v40 = vld [vmem:[%s0 + $0x40] sm:$0xff]
  %v41 = vld [vmem:[%s0 + $0x48] sm:$0xff]
  %v42 = vld [vmem:[%s0 + $0x50] sm:$0xff]
  %v43 = vld [vmem:[%s0 + $0x58] sm:$0xff]
  %v44 = vld [vmem:[%s0 + $0x60] sm:$0xff]
  %v45 = vld [vmem:[%s0 + $0x68] sm:$0xff]
  %v46 = vld [vmem:[%s0 + $0x70] sm:$0xff]
  %v47 = vld [vmem:[%s0 + $0x78] sm:$0xff]
  %v48 = vld [vmem:[%s0 + $0x80] sm:$0xff]
  %v49 = vld [vmem:[%s0 + $0x88] sm:$0xff]
  %v50 = vld [vmem:[%s0 + $0x90] sm:$0xff]
  %v51 = vld [vmem:[%s0 + $0x98] sm:$0xff]
  %v52 = vld [vmem:[%s0 + $0xa0] sm:$0xff]
  %v53 = vld [vmem:[%s0 + $0xa8] sm:$0xff]
  %v54 = vld [vmem:[%s0 + $0xb0] sm:$0xff]
  %v55 = vld [vmem:[%s0 + $0xb8] sm:$0xff]
  %v56 = vld [vmem:[%s0 + $0xc0] sm:$0xff]
  %v57 = vld [vmem:[%s0 + $0xc8] sm:$0xff]
  %v58 = vld [vmem:[%s0 + $0xd0] sm:$0xff]
  %v59 = vld [vmem:[%s0 + $0xd8] sm:$0xff]
  %v60 = vld [vmem:[%s0 + $0xe0] sm:$0xff]
  %v61 = vld [vmem:[%s0 + $0xe8] sm:$0xff]
  %v62 = vld [vmem:[%s0 + $0xf0] sm:$0xff]
  %v63 = vld [vmem:[%s0 + $0xf8] sm:$0xff]
  %v64 = vld [vmem:[%s0 + $0x100] sm:$0xff]
  %v65 = vld [vmem:[%s0 + $0x108] sm:$0xff]
  %v66 = vld [vmem:[%s0 + $0x110] sm:$0xff]
  %v67 = vld [vmem:[%s0 + $0x118] sm:$0xff]
  %v68 = vld [vmem:[%s0 + $0x120] sm:$0xff]
  %v69 = vld [vmem:[%s0 + $0x128] sm:$0xff]
  %v70 = vld [vmem:[%s0 + $0x130] sm:$0xff]
  %v71 = vld [vmem:[%s0 + $0x138] sm:$0xff]
  %v72 = vld [vmem:[%s0 + $0x140] sm:$0xff]
  %v73 = vld [vmem:[%s0 + $0x148] sm:$0xff]
  %v74 = vld [vmem:[%s0 + $0x150] sm:$0xff]
  %v75 = vld [vmem:[%s0 + $0x158] sm:$0xff]
  %v76 = vld [vmem:[%s0 + $0x160] sm:$0xff]
  %v77 = vld [vmem:[%s0 + $0x168] sm:$0xff]
  %v78 = vld [vmem:[%s0 + $0x170] sm:$0xff]
  %v79 = vld [vmem:[%s0 + $0x178] sm:$0xff]
  %v80 = vld [vmem:[%s0 + $0x180] sm:$0xff]
  %v81 = vld [vmem:[%s0 + $0x188] sm:$0xff]
  %v82 = vld [vmem:[%s0 + $0x190] sm:$0xff]
  %v83 = vld [vmem:[%s0 + $0x198] sm:$0xff]
  %v84 = vld [vmem:[%s0 + $0x1a0] sm:$0xff]
  %v85 = vld [vmem:[%s0 + $0x1a8] sm:$0xff]
  %v86 = vld [vmem:[%s0 + $0x1b0] sm:$0xff]
  %v87 = vld [vmem:[%s0 + $0x1b8] sm:$0xff]
  %v88 = vld [vmem:[%s0 + $0x1c0] sm:$0xff]
  %v89 = vld [vmem:[%s0 + $0x1c8] sm:$0xff]
  %v90 = vld [vmem:[%s0 + $0x1d0] sm:$0xff]
  %v91 = vld [vmem:[%s0 + $0x1d8] sm:$0xff]
  %v92 = vld [vmem:[%s0 + $0x1e0] sm:$0xff]
  %v93 = vld [vmem:[%s0 + $0x1e8] sm:$0xff]
  %v94 = vld [vmem:[%s0 + $0x1f0] sm:$0xff]
  %v95 = vld [vmem:[%s0 + $0x1f8] sm:$0xff]
  %v96 = vmax.f32 %v32, %v34
  %v97 = vmax.f32 %v33, %v35
  %v98 = vmax.f32 %v36, %v38
  %v99 = vmax.f32 %v37, %v39
  %v100 = vmax.f32 %v40, %v42
  %v101 = vmax.f32 %v41, %v43
  %v102 = vmax.f32 %v44, %v46
  %v103 = vmax.f32 %v45, %v47
  %v104 = vmax.f32 %v48, %v50
  %v105 = vmax.f32 %v49, %v51
  %v106 = vmax.f32 %v52, %v54
  %v107 = vmax.f32 %v53, %v55
  %v108 = vmax.f32 %v56, %v58
  %v109 = vmax.f32 %v57, %v59
  %v110 = vmax.f32 %v60, %v62
  %v111 = vmax.f32 %v61, %v63
  %v112 = vmax.f32 %v64, %v66
  %v113 = vmax.f32 %v65, %v67
  %v114 = vmax.f32 %v68, %v70
  %v115 = vmax.f32 %v69, %v71
  %v116 = vmax.f32 %v72, %v74
  %v117 = vmax.f32 %v73, %v75
  %v118 = vmax.f32 %v76, %v78
  %v119 = vmax.f32 %v77, %v79
  %v120 = vmax.f32 %v80, %v82
  %v121 = vmax.f32 %v81, %v83
  %v122 = vmax.f32 %v84, %v86
  %v123 = vmax.f32 %v85, %v87
  %v124 = vmax.f32 %v88, %v90
  %v125 = vmax.f32 %v89, %v91
  %v126 = vmax.f32 %v92, %v94
  %v127 = vmax.f32 %v93, %v95
  %v160 = vrot.slane %v96, 2
  %v161 = vrot.slane %v96, 4
  %v162 = vrot.slane %v96, 6
  %v163 = vrot.slane %v97, 2
  %v164 = vrot.slane %v97, 4
  %v165 = vrot.slane %v97, 6
  %v166 = vrot.slane %v98, 2
  %v167 = vrot.slane %v98, 4
  %v168 = vrot.slane %v98, 6
  %v169 = vrot.slane %v99, 2
  %v170 = vrot.slane %v99, 4
  %v171 = vrot.slane %v99, 6
  %v172 = vrot.slane %v100, 2
  %v173 = vrot.slane %v100, 4
  %v174 = vrot.slane %v100, 6
  %v175 = vrot.slane %v101, 2
  %v176 = vrot.slane %v101, 4
  %v177 = vrot.slane %v101, 6
  %v178 = vrot.slane %v102, 2
  %v179 = vrot.slane %v102, 4
  %v180 = vrot.slane %v102, 6
  %v181 = vrot.slane %v103, 2
  %v182 = vrot.slane %v103, 4
  %v183 = vrot.slane %v103, 6
  %v184 = vrot.slane %v104, 2
  %v185 = vrot.slane %v104, 4
  %v186 = vrot.slane %v104, 6
  %v187 = vrot.slane %v105, 2
  %v188 = vrot.slane %v105, 4
  %v189 = vrot.slane %v105, 6
  %v190 = vrot.slane %v106, 2
  %v191 = vrot.slane %v106, 4
  %v192 = vrot.slane %v106, 6
  %v193 = vrot.slane %v107, 2
  %v194 = vrot.slane %v107, 4
  %v195 = vrot.slane %v107, 6
  %v196 = vrot.slane %v108, 2
  %v197 = vrot.slane %v108, 4
  %v198 = vrot.slane %v108, 6
  %v199 = vrot.slane %v109, 2
  %v200 = vrot.slane %v109, 4
  %v201 = vrot.slane %v109, 6
  %v202 = vrot.slane %v110, 2
  %v203 = vrot.slane %v110, 4
  %v204 = vrot.slane %v110, 6
  %v205 = vrot.slane %v111, 2
  %v206 = vrot.slane %v111, 4
  %v207 = vrot.slane %v111, 6
  %v208 = vrot.slane %v112, 2
  %v209 = vrot.slane %v112, 4
  %v210 = vrot.slane %v112, 6
  %v211 = vrot.slane %v113, 2
  %v212 = vrot.slane %v113, 4
  %v213 = vrot.slane %v113, 6
  %v214 = vrot.slane %v114, 2
  %v215 = vrot.slane %v114, 4
  %v216 = vrot.slane %v114, 6
  %v217 = vrot.slane %v115, 2
  %v218 = vrot.slane %v115, 4
  %v219 = vrot.slane %v115, 6
  %v220 = vrot.slane %v116, 2
  %v221 = vrot.slane %v116, 4
  %v222 = vrot.slane %v116, 6
  %v223 = vrot.slane %v117, 2
  %v224 = vrot.slane %v117, 4
  %v225 = vrot.slane %v117, 6
  %v226 = vrot.slane %v118, 2
  %v227 = vrot.slane %v118, 4
  %v228 = vrot.slane %v118, 6
  %v229 = vrot.slane %v119, 2
  %v230 = vrot.slane %v119, 4
  %v231 = vrot.slane %v119, 6
  %v232 = vrot.slane %v120, 2
  %v233 = vrot.slane %v120, 4
  %v234 = vrot.slane %v120, 6
  %v235 = vrot.slane %v121, 2
  %v236 = vrot.slane %v121, 4
  %v237 = vrot.slane %v121, 6
  %v238 = vrot.slane %v122, 2
  %v239 = vrot.slane %v122, 4
  %v240 = vrot.slane %v122, 6
  %v241 = vrot.slane %v123, 2
  %v242 = vrot.slane %v123, 4
  %v243 = vrot.slane %v123, 6
  %v244 = vrot.slane %v124, 2
  %v245 = vrot.slane %v124, 4
  %v246 = vrot.slane %v124, 6
  %v247 = vrot.slane %v125, 2
  %v248 = vrot.slane %v125, 4
  %v249 = vrot.slane %v125, 6
  %v250 = vrot.slane %v126, 2
  %v251 = vrot.slane %v126, 4
  %v252 = vrot.slane %v126, 6
  %v253 = vrot.slane %v127, 2
  %v254 = vrot.slane %v127, 4
  %v255 = vrot.slane %v127, 6
  %v352 = vrot.slane %v96, 7
  %v353 = vrot.slane %v352, 2
  %v354 = vrot.slane %v160, 7
  %v355 = vrot.slane %v354, 2
  %v356 = vrot.slane %v161, 7
  %v357 = vrot.slane %v356, 2
  %v358 = vrot.slane %v162, 7
  %v359 = vrot.slane %v358, 2
  %v360 = vrot.slane %v97, 7
  %v361 = vrot.slane %v360, 2
  %v362 = vrot.slane %v163, 7
  %v363 = vrot.slane %v362, 2
  %v364 = vrot.slane %v164, 7
  %v365 = vrot.slane %v364, 2
  %v366 = vrot.slane %v165, 7
  %v367 = vrot.slane %v366, 2
  %v368 = vrot.slane %v98, 7
  %v369 = vrot.slane %v368, 2
  %v370 = vrot.slane %v166, 7
  %v371 = vrot.slane %v370, 2
  %v372 = vrot.slane %v167, 7
  %v373 = vrot.slane %v372, 2
  %v374 = vrot.slane %v168, 7
  %v375 = vrot.slane %v374, 2
  %v376 = vrot.slane %v99, 7
  %v377 = vrot.slane %v376, 2
  %v378 = vrot.slane %v169, 7
  %v379 = vrot.slane %v378, 2
  %v380 = vrot.slane %v170, 7
  %v381 = vrot.slane %v380, 2
  %v382 = vrot.slane %v171, 7
  %v383 = vrot.slane %v382, 2
  %v384 = vrot.slane %v100, 7
  %v385 = vrot.slane %v384, 2
  %v386 = vrot.slane %v172, 7
  %v387 = vrot.slane %v386, 2
  %v388 = vrot.slane %v173, 7
  %v389 = vrot.slane %v388, 2
  %v390 = vrot.slane %v174, 7
  %v391 = vrot.slane %v390, 2
  %v392 = vrot.slane %v101, 7
  %v393 = vrot.slane %v392, 2
  %v394 = vrot.slane %v175, 7
  %v395 = vrot.slane %v394, 2
  %v396 = vrot.slane %v176, 7
  %v397 = vrot.slane %v396, 2
  %v398 = vrot.slane %v177, 7
  %v399 = vrot.slane %v398, 2
  %v400 = vrot.slane %v102, 7
  %v401 = vrot.slane %v400, 2
  %v402 = vrot.slane %v178, 7
  %v403 = vrot.slane %v402, 2
  %v404 = vrot.slane %v179, 7
  %v405 = vrot.slane %v404, 2
  %v406 = vrot.slane %v180, 7
  %v407 = vrot.slane %v406, 2
  %v408 = vrot.slane %v103, 7
  %v409 = vrot.slane %v408, 2
  %v410 = vrot.slane %v181, 7
  %v411 = vrot.slane %v410, 2
  %v412 = vrot.slane %v182, 7
  %v413 = vrot.slane %v412, 2
  %v414 = vrot.slane %v183, 7
  %v415 = vrot.slane %v414, 2
  %v416 = vrot.slane %v104, 7
  %v417 = vrot.slane %v416, 2
  %v418 = vrot.slane %v184, 7
  %v419 = vrot.slane %v418, 2
  %v420 = vrot.slane %v185, 7
  %v421 = vrot.slane %v420, 2
  %v422 = vrot.slane %v186, 7
  %v423 = vrot.slane %v422, 2
  %v424 = vrot.slane %v105, 7
  %v425 = vrot.slane %v424, 2
  %v426 = vrot.slane %v187, 7
  %v427 = vrot.slane %v426, 2
  %v428 = vrot.slane %v188, 7
  %v429 = vrot.slane %v428, 2
  %v430 = vrot.slane %v189, 7
  %v431 = vrot.slane %v430, 2
  %v432 = vrot.slane %v106, 7
  %v433 = vrot.slane %v432, 2
  %v434 = vrot.slane %v190, 7
  %v435 = vrot.slane %v434, 2
  %v436 = vrot.slane %v191, 7
  %v437 = vrot.slane %v436, 2
  %v438 = vrot.slane %v192, 7
  %v439 = vrot.slane %v438, 2
  %v440 = vrot.slane %v107, 7
  %v441 = vrot.slane %v440, 2
  %v442 = vrot.slane %v193, 7
  %v443 = vrot.slane %v442, 2
  %v444 = vrot.slane %v194, 7
  %v445 = vrot.slane %v444, 2
  %v446 = vrot.slane %v195, 7
  %v447 = vrot.slane %v446, 2
  %v448 = vrot.slane %v108, 7
  %v449 = vrot.slane %v448, 2
  %v450 = vrot.slane %v196, 7
  %v451 = vrot.slane %v450, 2
  %v452 = vrot.slane %v197, 7
  %v453 = vrot.slane %v452, 2
  %v454 = vrot.slane %v198, 7
  %v455 = vrot.slane %v454, 2
  %v456 = vrot.slane %v109, 7
  %v457 = vrot.slane %v456, 2
  %v458 = vrot.slane %v199, 7
  %v459 = vrot.slane %v458, 2
  %v460 = vrot.slane %v200, 7
  %v461 = vrot.slane %v460, 2
  %v462 = vrot.slane %v201, 7
  %v463 = vrot.slane %v462, 2
  %v464 = vrot.slane %v110, 7
  %v465 = vrot.slane %v464, 2
  %v466 = vrot.slane %v202, 7
  %v467 = vrot.slane %v466, 2
  %v468 = vrot.slane %v203, 7
  %v469 = vrot.slane %v468, 2
  %v470 = vrot.slane %v204, 7
  %v471 = vrot.slane %v470, 2
  %v472 = vrot.slane %v111, 7
  %v473 = vrot.slane %v472, 2
  %v474 = vrot.slane %v205, 7
  %v475 = vrot.slane %v474, 2
  %v476 = vrot.slane %v206, 7
  %v477 = vrot.slane %v476, 2
  %v478 = vrot.slane %v207, 7
  %v479 = vrot.slane %v478, 2
  %v480 = vrot.slane %v112, 7
  %v481 = vrot.slane %v480, 2
  %v482 = vrot.slane %v208, 7
  %v483 = vrot.slane %v482, 2
  %v484 = vrot.slane %v209, 7
  %v485 = vrot.slane %v484, 2
  %v486 = vrot.slane %v210, 7
  %v487 = vrot.slane %v486, 2
  %v488 = vrot.slane %v113, 7
  %v489 = vrot.slane %v488, 2
  %v490 = vrot.slane %v211, 7
  %v491 = vrot.slane %v490, 2
  %v492 = vrot.slane %v212, 7
  %v493 = vrot.slane %v492, 2
  %v494 = vrot.slane %v213, 7
  %v495 = vrot.slane %v494, 2
  %v496 = vrot.slane %v114, 7
  %v497 = vrot.slane %v496, 2
  %v498 = vrot.slane %v214, 7
  %v499 = vrot.slane %v498, 2
  %v500 = vrot.slane %v215, 7
  %v501 = vrot.slane %v500, 2
  %v502 = vrot.slane %v216, 7
  %v503 = vrot.slane %v502, 2
  %v504 = vrot.slane %v115, 7
  %v505 = vrot.slane %v504, 2
  %v506 = vrot.slane %v217, 7
  %v507 = vrot.slane %v506, 2
  %v508 = vrot.slane %v218, 7
  %v509 = vrot.slane %v508, 2
  %v510 = vrot.slane %v219, 7
  %v511 = vrot.slane %v510, 2
  %v512 = vrot.slane %v116, 7
  %v513 = vrot.slane %v512, 2
  %v514 = vrot.slane %v220, 7
  %v515 = vrot.slane %v514, 2
  %v516 = vrot.slane %v221, 7
  %v517 = vrot.slane %v516, 2
  %v518 = vrot.slane %v222, 7
  %v519 = vrot.slane %v518, 2
  %v520 = vrot.slane %v117, 7
  %v521 = vrot.slane %v520, 2
  %v522 = vrot.slane %v223, 7
  %v523 = vrot.slane %v522, 2
  %v524 = vrot.slane %v224, 7
  %v525 = vrot.slane %v524, 2
  %v526 = vrot.slane %v225, 7
  %v527 = vrot.slane %v526, 2
  %v528 = vrot.slane %v118, 7
  %v529 = vrot.slane %v528, 2
  %v530 = vrot.slane %v226, 7
  %v531 = vrot.slane %v530, 2
  %v532 = vrot.slane %v227, 7
  %v533 = vrot.slane %v532, 2
  %v534 = vrot.slane %v228, 7
  %v535 = vrot.slane %v534, 2
  %v536 = vrot.slane %v119, 7
  %v537 = vrot.slane %v536, 2
  %v538 = vrot.slane %v229, 7
  %v539 = vrot.slane %v538, 2
  %v540 = vrot.slane %v230, 7
  %v541 = vrot.slane %v540, 2
  %v542 = vrot.slane %v231, 7
  %v543 = vrot.slane %v542, 2
  %v544 = vrot.slane %v120, 7
  %v545 = vrot.slane %v544, 2
  %v546 = vrot.slane %v232, 7
  %v547 = vrot.slane %v546, 2
  %v548 = vrot.slane %v233, 7
  %v549 = vrot.slane %v548, 2
  %v550 = vrot.slane %v234, 7
  %v551 = vrot.slane %v550, 2
  %v552 = vrot.slane %v121, 7
  %v553 = vrot.slane %v552, 2
  %v554 = vrot.slane %v235, 7
  %v555 = vrot.slane %v554, 2
  %v556 = vrot.slane %v236, 7
  %v557 = vrot.slane %v556, 2
  %v558 = vrot.slane %v237, 7
  %v559 = vrot.slane %v558, 2
  %v560 = vrot.slane %v122, 7
  %v561 = vrot.slane %v560, 2
  %v562 = vrot.slane %v238, 7
  %v563 = vrot.slane %v562, 2
  %v564 = vrot.slane %v239, 7
  %v565 = vrot.slane %v564, 2
  %v566 = vrot.slane %v240, 7
  %v567 = vrot.slane %v566, 2
  %v568 = vrot.slane %v123, 7
  %v569 = vrot.slane %v568, 2
  %v570 = vrot.slane %v241, 7
  %v571 = vrot.slane %v570, 2
  %v572 = vrot.slane %v242, 7
  %v573 = vrot.slane %v572, 2
  %v574 = vrot.slane %v243, 7
  %v575 = vrot.slane %v574, 2
  %v576 = vrot.slane %v124, 7
  %v577 = vrot.slane %v576, 2
  %v578 = vrot.slane %v244, 7
  %v579 = vrot.slane %v578, 2
  %v580 = vrot.slane %v245, 7
  %v581 = vrot.slane %v580, 2
  %v582 = vrot.slane %v246, 7
  %v583 = vrot.slane %v582, 2
  %v584 = vrot.slane %v125, 7
  %v585 = vrot.slane %v584, 2
  %v586 = vrot.slane %v247, 7
  %v587 = vrot.slane %v586, 2
  %v588 = vrot.slane %v248, 7
  %v589 = vrot.slane %v588, 2
  %v590 = vrot.slane %v249, 7
  %v591 = vrot.slane %v590, 2
  %v592 = vrot.slane %v126, 7
  %v593 = vrot.slane %v592, 2
  %v594 = vrot.slane %v250, 7
  %v595 = vrot.slane %v594, 2
  %v596 = vrot.slane %v251, 7
  %v597 = vrot.slane %v596, 2
  %v598 = vrot.slane %v252, 7
  %v599 = vrot.slane %v598, 2
  %v600 = vrot.slane %v127, 7
  %v601 = vrot.slane %v600, 2
  %v602 = vrot.slane %v253, 7
  %v603 = vrot.slane %v602, 2
  %v604 = vrot.slane %v254, 7
  %v605 = vrot.slane %v604, 2
  %v606 = vrot.slane %v255, 7
  %v607 = vrot.slane %v606, 2
  %v736 = vmax.f32 %v96, %v353
  %v737 = vmax.f32 %v160, %v355
  %v738 = vmax.f32 %v161, %v357
  %v739 = vmax.f32 %v162, %v359
  %v740 = vmax.f32 %v97, %v361
  %v741 = vmax.f32 %v163, %v363
  %v742 = vmax.f32 %v164, %v365
  %v743 = vmax.f32 %v165, %v367
  %v744 = vmax.f32 %v98, %v369
  %v745 = vmax.f32 %v166, %v371
  %v746 = vmax.f32 %v167, %v373
  %v747 = vmax.f32 %v168, %v375
  %v748 = vmax.f32 %v99, %v377
  %v749 = vmax.f32 %v169, %v379
  %v750 = vmax.f32 %v170, %v381
  %v751 = vmax.f32 %v171, %v383
  %v752 = vmax.f32 %v100, %v385
  %v753 = vmax.f32 %v172, %v387
  %v754 = vmax.f32 %v173, %v389
  %v755 = vmax.f32 %v174, %v391
  %v756 = vmax.f32 %v101, %v393
  %v757 = vmax.f32 %v175, %v395
  %v758 = vmax.f32 %v176, %v397
  %v759 = vmax.f32 %v177, %v399
  %v760 = vmax.f32 %v102, %v401
  %v761 = vmax.f32 %v178, %v403
  %v762 = vmax.f32 %v179, %v405
  %v763 = vmax.f32 %v180, %v407
  %v764 = vmax.f32 %v103, %v409
  %v765 = vmax.f32 %v181, %v411
  %v766 = vmax.f32 %v182, %v413
  %v767 = vmax.f32 %v183, %v415
  %v768 = vmax.f32 %v104, %v417
  %v769 = vmax.f32 %v184, %v419
  %v770 = vmax.f32 %v185, %v421
  %v771 = vmax.f32 %v186, %v423
  %v772 = vmax.f32 %v105, %v425
  %v773 = vmax.f32 %v187, %v427
  %v774 = vmax.f32 %v188, %v429
  %v775 = vmax.f32 %v189, %v431
  %v776 = vmax.f32 %v106, %v433
  %v777 = vmax.f32 %v190, %v435
  %v778 = vmax.f32 %v191, %v437
  %v779 = vmax.f32 %v192, %v439
  %v780 = vmax.f32 %v107, %v441
  %v781 = vmax.f32 %v193, %v443
  %v782 = vmax.f32 %v194, %v445
  %v783 = vmax.f32 %v195, %v447
  %v784 = vmax.f32 %v108, %v449
  %v785 = vmax.f32 %v196, %v451
  %v786 = vmax.f32 %v197, %v453
  %v787 = vmax.f32 %v198, %v455
  %v788 = vmax.f32 %v109, %v457
  %v789 = vmax.f32 %v199, %v459
  %v790 = vmax.f32 %v200, %v461
  %v791 = vmax.f32 %v201, %v463
  %v792 = vmax.f32 %v110, %v465
  %v793 = vmax.f32 %v202, %v467
  %v794 = vmax.f32 %v203, %v469
  %v795 = vmax.f32 %v204, %v471
  %v796 = vmax.f32 %v111, %v473
  %v797 = vmax.f32 %v205, %v475
  %v798 = vmax.f32 %v206, %v477
  %v799 = vmax.f32 %v207, %v479
  %v800 = vmax.f32 %v112, %v481
  %v801 = vmax.f32 %v208, %v483
  %v802 = vmax.f32 %v209, %v485
  %v803 = vmax.f32 %v210, %v487
  %v804 = vmax.f32 %v113, %v489
  %v805 = vmax.f32 %v211, %v491
  %v806 = vmax.f32 %v212, %v493
  %v807 = vmax.f32 %v213, %v495
  %v808 = vmax.f32 %v114, %v497
  %v809 = vmax.f32 %v214, %v499
  %v810 = vmax.f32 %v215, %v501
  %v811 = vmax.f32 %v216, %v503
  %v812 = vmax.f32 %v115, %v505
  %v813 = vmax.f32 %v217, %v507
  %v814 = vmax.f32 %v218, %v509
  %v815 = vmax.f32 %v219, %v511
  %v816 = vmax.f32 %v116, %v513
  %v817 = vmax.f32 %v220, %v515
  %v818 = vmax.f32 %v221, %v517
  %v819 = vmax.f32 %v222, %v519
  %v820 = vmax.f32 %v117, %v521
  %v821 = vmax.f32 %v223, %v523
  %v822 = vmax.f32 %v224, %v525
  %v823 = vmax.f32 %v225, %v527
  %v824 = vmax.f32 %v118, %v529
  %v825 = vmax.f32 %v226, %v531
  %v826 = vmax.f32 %v227, %v533
  %v827 = vmax.f32 %v228, %v535
  %v828 = vmax.f32 %v119, %v537
  %v829 = vmax.f32 %v229, %v539
  %v830 = vmax.f32 %v230, %v541
  %v831 = vmax.f32 %v231, %v543
  %v832 = vmax.f32 %v120, %v545
  %v833 = vmax.f32 %v232, %v547
  %v834 = vmax.f32 %v233, %v549
  %v835 = vmax.f32 %v234, %v551
  %v836 = vmax.f32 %v121, %v553
  %v837 = vmax.f32 %v235, %v555
  %v838 = vmax.f32 %v236, %v557
  %v839 = vmax.f32 %v237, %v559
  %v840 = vmax.f32 %v122, %v561
  %v841 = vmax.f32 %v238, %v563
  %v842 = vmax.f32 %v239, %v565
  %v843 = vmax.f32 %v240, %v567
  %v844 = vmax.f32 %v123, %v569
  %v845 = vmax.f32 %v241, %v571
  %v846 = vmax.f32 %v242, %v573
  %v847 = vmax.f32 %v243, %v575
  %v848 = vmax.f32 %v124, %v577
  %v849 = vmax.f32 %v244, %v579
  %v850 = vmax.f32 %v245, %v581
  %v851 = vmax.f32 %v246, %v583
  %v852 = vmax.f32 %v125, %v585
  %v853 = vmax.f32 %v247, %v587
  %v854 = vmax.f32 %v248, %v589
  %v855 = vmax.f32 %v249, %v591
  %v856 = vmax.f32 %v126, %v593
  %v857 = vmax.f32 %v250, %v595
  %v858 = vmax.f32 %v251, %v597
  %v859 = vmax.f32 %v252, %v599
  %v860 = vmax.f32 %v127, %v601
  %v861 = vmax.f32 %v253, %v603
  %v862 = vmax.f32 %v254, %v605
  %v863 = vmax.f32 %v255, %v607
  %vm864 = vcmask 31744
  %865 = vst.msk [vmem:[#allocation2] sm:$0xff] %vm864, 0.0
  %vm866 = vcmask 25600
  %867 = vst.msk [vmem:[#allocation2 + $0x8] sm:$0x3] %vm866, 0.0
  %868 = vst.msk [vmem:[#allocation2 + $0x10] sm:$0xff] %vm864, 0.0
  %869 = vst.msk [vmem:[#allocation2 + $0x18] sm:$0x3] %vm866, 0.0
  %870 = vst.msk [vmem:[#allocation2 + $0x20] sm:$0xff] %vm864, 0.0
  %871 = vst.msk [vmem:[#allocation2 + $0x28] sm:$0x3] %vm866, 0.0
  %872 = vst.msk [vmem:[#allocation2 + $0x30] sm:$0xff] %vm864, 0.0
  %873 = vst.msk [vmem:[#allocation2 + $0x38] sm:$0x3] %vm866, 0.0
  %874 = vst.msk [vmem:[#allocation2 + $0x40] sm:$0xff] %vm864, 0.0
  %875 = vst.msk [vmem:[#allocation2 + $0x48] sm:$0x3] %vm866, 0.0
  %876 = vst.msk [vmem:[#allocation2 + $0x50] sm:$0xff] %vm864, 0.0
  %877 = vst.msk [vmem:[#allocation2 + $0x58] sm:$0x3] %vm866, 0.0
  %878 = vst.msk [vmem:[#allocation2 + $0x60] sm:$0xff] %vm864, 0.0
  %879 = vst.msk [vmem:[#allocation2 + $0x68] sm:$0x3] %vm866, 0.0
  %880 = vst.msk [vmem:[#allocation2 + $0x70] sm:$0xff] %vm864, 0.0
  %881 = vst.msk [vmem:[#allocation2 + $0x78] sm:$0x3] %vm866, 0.0
  %882 = vst.msk [vmem:[#allocation2 + $0x80] sm:$0xff] %vm864, 0.0
  %883 = vst.msk [vmem:[#allocation2 + $0x88] sm:$0x3] %vm866, 0.0
  %884 = vst.msk [vmem:[#allocation2 + $0x90] sm:$0xff] %vm864, 0.0
  %885 = vst.msk [vmem:[#allocation2 + $0x98] sm:$0x3] %vm866, 0.0
  %886 = vst.msk [vmem:[#allocation2 + $0xa0] sm:$0xff] %vm864, 0.0
  %887 = vst.msk [vmem:[#allocation2 + $0xa8] sm:$0x3] %vm866, 0.0
  %888 = vst.msk [vmem:[#allocation2 + $0xb0] sm:$0xff] %vm864, 0.0
  %889 = vst.msk [vmem:[#allocation2 + $0xb8] sm:$0x3] %vm866, 0.0
  %890 = vst.msk [vmem:[#allocation2 + $0xc0] sm:$0xff] %vm864, 0.0
  %891 = vst.msk [vmem:[#allocation2 + $0xc8] sm:$0x3] %vm866, 0.0
  %892 = vst.msk [vmem:[#allocation2 + $0xd0] sm:$0xff] %vm864, 0.0
  %893 = vst.msk [vmem:[#allocation2 + $0xd8] sm:$0x3] %vm866, 0.0
  %894 = vst.msk [vmem:[#allocation2 + $0xe0] sm:$0xff] %vm864, 0.0
  %895 = vst.msk [vmem:[#allocation2 + $0xe8] sm:$0x3] %vm866, 0.0
  %896 = vst.msk [vmem:[#allocation2 + $0xf0] sm:$0xff] %vm864, 0.0
  %897 = vst.msk [vmem:[#allocation2 + $0xf8] sm:$0x3] %vm866, 0.0
  %898 = vst.msk [vmem:[#allocation2 + $0x100] sm:$0xff] %vm864, 0.0
  %899 = vst.msk [vmem:[#allocation2 + $0x108] sm:$0x3] %vm866, 0.0
  %900 = vst.msk [vmem:[#allocation2 + $0x110] sm:$0xff] %vm864, 0.0
  %901 = vst.msk [vmem:[#allocation2 + $0x118] sm:$0x3] %vm866, 0.0
  %902 = vst.msk [vmem:[#allocation2 + $0x120] sm:$0xff] %vm864, 0.0
  %903 = vst.msk [vmem:[#allocation2 + $0x128] sm:$0x3] %vm866, 0.0
  %904 = vst.msk [vmem:[#allocation2 + $0x130] sm:$0xff] %vm864, 0.0
  %905 = vst.msk [vmem:[#allocation2 + $0x138] sm:$0x3] %vm866, 0.0
  %v1034 = vperm.slane %v736, 0
  %v1035 = vperm.slane %v737, 0
  %v1036 = vperm.slane %v738, 0
  %v1037 = vperm.slane %v739, 0
  %v1038 = vperm.slane %v740, 0
  %v1039 = vperm.slane %v741, 0
  %v1040 = vperm.slane %v742, 0
  %v1041 = vperm.slane %v743, 0
  %v1042 = vperm.slane %v744, 0
  %v1043 = vperm.slane %v745, 0
  %v1044 = vperm.slane %v746, 0
  %v1045 = vperm.slane %v747, 0
  %v1046 = vperm.slane %v748, 0
  %v1047 = vperm.slane %v749, 0
  %v1048 = vperm.slane %v750, 0
  %v1049 = vperm.slane %v751, 0
  %v1050 = vperm.slane %v752, 0
  %v1051 = vperm.slane %v753, 0
  %v1052 = vperm.slane %v754, 0
  %v1053 = vperm.slane %v755, 0
  %v1054 = vperm.slane %v756, 0
  %v1055 = vperm.slane %v757, 0
  %v1056 = vperm.slane %v758, 0
  %v1057 = vperm.slane %v759, 0
  %v1058 = vperm.slane %v760, 0
  %v1059 = vperm.slane %v761, 0
  %v1060 = vperm.slane %v762, 0
  %v1061 = vperm.slane %v763, 0
  %v1062 = vperm.slane %v764, 0
  %v1063 = vperm.slane %v765, 0
  %v1064 = vperm.slane %v766, 0
  %v1065 = vperm.slane %v767, 0
  %v1066 = vperm.slane %v768, 0
  %v1067 = vperm.slane %v769, 0
  %v1068 = vperm.slane %v770, 0
  %v1069 = vperm.slane %v771, 0
  %v1070 = vperm.slane %v772, 0
  %v1071 = vperm.slane %v773, 0
  %v1072 = vperm.slane %v774, 0
  %v1073 = vperm.slane %v775, 0
  %v1074 = vperm.slane %v776, 0
  %v1075 = vperm.slane %v777, 0
  %v1076 = vperm.slane %v778, 0
  %v1077 = vperm.slane %v779, 0
  %v1078 = vperm.slane %v780, 0
  %v1079 = vperm.slane %v781, 0
  %v1080 = vperm.slane %v782, 0
  %v1081 = vperm.slane %v783, 0
  %v1082 = vperm.slane %v784, 0
  %v1083 = vperm.slane %v785, 0
  %v1084 = vperm.slane %v786, 0
  %v1085 = vperm.slane %v787, 0
  %v1086 = vperm.slane %v788, 0
  %v1087 = vperm.slane %v789, 0
  %v1088 = vperm.slane %v790, 0
  %v1089 = vperm.slane %v791, 0
  %v1090 = vperm.slane %v792, 0
  %v1091 = vperm.slane %v793, 0
  %v1092 = vperm.slane %v794, 0
  %v1093 = vperm.slane %v795, 0
  %v1094 = vperm.slane %v796, 0
  %v1095 = vperm.slane %v797, 0
  %v1096 = vperm.slane %v798, 0
  %v1097 = vperm.slane %v799, 0
  %v1098 = vperm.slane %v800, 0
  %v1099 = vperm.slane %v801, 0
  %v1100 = vperm.slane %v802, 0
  %v1101 = vperm.slane %v803, 0
  %v1102 = vperm.slane %v804, 0
  %v1103 = vperm.slane %v805, 0
  %v1104 = vperm.slane %v806, 0
  %v1105 = vperm.slane %v807, 0
  %v1106 = vperm.slane %v808, 0
  %v1107 = vperm.slane %v809, 0
  %v1108 = vperm.slane %v810, 0
  %v1109 = vperm.slane %v811, 0
  %v1110 = vperm.slane %v812, 0
  %v1111 = vperm.slane %v813, 0
  %v1112 = vperm.slane %v814, 0
  %v1113 = vperm.slane %v815, 0
  %v1114 = vperm.slane %v816, 0
  %v1115 = vperm.slane %v817, 0
  %v1116 = vperm.slane %v818, 0
  %v1117 = vperm.slane %v819, 0
  %v1118 = vperm.slane %v820, 0
  %v1119 = vperm.slane %v821, 0
  %v1120 = vperm.slane %v822, 0
  %v1121 = vperm.slane %v823, 0
  %v1122 = vperm.slane %v824, 0
  %v1123 = vperm.slane %v825, 0
  %v1124 = vperm.slane %v826, 0
  %v1125 = vperm.slane %v827, 0
  %v1126 = vperm.slane %v828, 0
  %v1127 = vperm.slane %v829, 0
  %v1128 = vperm.slane %v830, 0
  %v1129 = vperm.slane %v831, 0
  %v1130 = vperm.slane %v832, 0
  %v1131 = vperm.slane %v833, 0
  %v1132 = vperm.slane %v834, 0
  %v1133 = vperm.slane %v835, 0
  %v1134 = vperm.slane %v836, 0
  %v1135 = vperm.slane %v837, 0
  %v1136 = vperm.slane %v838, 0
  %v1137 = vperm.slane %v839, 0
  %v1138 = vperm.slane %v840, 0
  %v1139 = vperm.slane %v841, 0
  %v1140 = vperm.slane %v842, 0
  %v1141 = vperm.slane %v843, 0
  %v1142 = vperm.slane %v844, 0
  %v1143 = vperm.slane %v845, 0
  %v1144 = vperm.slane %v846, 0
  %v1145 = vperm.slane %v847, 0
  %v1146 = vperm.slane %v848, 0
  %v1147 = vperm.slane %v849, 0
  %v1148 = vperm.slane %v850, 0
  %v1149 = vperm.slane %v851, 0
  %v1150 = vperm.slane %v852, 0
  %v1151 = vperm.slane %v853, 0
  %v1152 = vperm.slane %v854, 0
  %v1153 = vperm.slane %v855, 0
  %v1154 = vperm.slane %v856, 0
  %v1155 = vperm.slane %v857, 0
  %v1156 = vperm.slane %v858, 0
  %v1157 = vperm.slane %v859, 0
  %v1158 = vperm.slane %v860, 0
  %v1159 = vperm.slane %v861, 0
  %v1160 = vperm.slane %v862, 0
  %v1161 = vperm.slane %v863, 0
  %vm1162 = vcmask 1041409
  %v1163 = vsel %vm1162, %v1035, %v1034
  %vm1164 = vcmask 1042434
  %v1165 = vsel %vm1164, %v1036, %v1163
  %vm1166 = vcmask 1043459
  %v1167 = vsel %vm1166, %v1037, %v1165
  %vm1168 = vcmask 1044484
  %v1169 = vsel %vm1168, %v1038, %v1167
  %vm1170 = vcmask 1045509
  %v1171 = vsel %vm1170, %v1039, %v1169
  %vm1172 = vcmask 1046534
  %v1173 = vsel %vm1172, %v1040, %v1171
  %vm1174 = vcmask 1047559
  %v1175 = vsel %vm1174, %v1041, %v1173
  %v1176 = vsel %vm1162, %v1043, %v1042
  %v1177 = vsel %vm1164, %v1044, %v1176
  %v1178 = vsel %vm1166, %v1045, %v1177
  %v1179 = vsel %vm1168, %v1046, %v1178
  %v1180 = vsel %vm1170, %v1047, %v1179
  %v1181 = vsel %vm1172, %v1048, %v1180
  %v1182 = vsel %vm1174, %v1049, %v1181
  %v1183 = vsel %vm1162, %v1051, %v1050
  %v1184 = vsel %vm1164, %v1052, %v1183
  %v1185 = vsel %vm1166, %v1053, %v1184
  %v1186 = vsel %vm1168, %v1054, %v1185
  %v1187 = vsel %vm1170, %v1055, %v1186
  %v1188 = vsel %vm1172, %v1056, %v1187
  %v1189 = vsel %vm1174, %v1057, %v1188
  %v1190 = vsel %vm1162, %v1059, %v1058
  %v1191 = vsel %vm1164, %v1060, %v1190
  %v1192 = vsel %vm1166, %v1061, %v1191
  %v1193 = vsel %vm1168, %v1062, %v1192
  %v1194 = vsel %vm1170, %v1063, %v1193
  %v1195 = vsel %vm1172, %v1064, %v1194
  %v1196 = vsel %vm1174, %v1065, %v1195
  %v1197 = vsel %vm1162, %v1067, %v1066
  %v1198 = vsel %vm1164, %v1068, %v1197
  %v1199 = vsel %vm1166, %v1069, %v1198
  %v1200 = vsel %vm1168, %v1070, %v1199
  %v1201 = vsel %vm1170, %v1071, %v1200
  %v1202 = vsel %vm1172, %v1072, %v1201
  %v1203 = vsel %vm1174, %v1073, %v1202
  %v1204 = vsel %vm1162, %v1075, %v1074
  %v1205 = vsel %vm1164, %v1076, %v1204
  %v1206 = vsel %vm1166, %v1077, %v1205
  %v1207 = vsel %vm1168, %v1078, %v1206
  %v1208 = vsel %vm1170, %v1079, %v1207
  %v1209 = vsel %vm1172, %v1080, %v1208
  %v1210 = vsel %vm1174, %v1081, %v1209
  %v1211 = vsel %vm1162, %v1083, %v1082
  %v1212 = vsel %vm1164, %v1084, %v1211
  %v1213 = vsel %vm1166, %v1085, %v1212
  %v1214 = vsel %vm1168, %v1086, %v1213
  %v1215 = vsel %vm1170, %v1087, %v1214
  %v1216 = vsel %vm1172, %v1088, %v1215
  %v1217 = vsel %vm1174, %v1089, %v1216
  %v1218 = vsel %vm1162, %v1091, %v1090
  %v1219 = vsel %vm1164, %v1092, %v1218
  %v1220 = vsel %vm1166, %v1093, %v1219
  %v1221 = vsel %vm1168, %v1094, %v1220
  %v1222 = vsel %vm1170, %v1095, %v1221
  %v1223 = vsel %vm1172, %v1096, %v1222
  %v1224 = vsel %vm1174, %v1097, %v1223
  %v1225 = vsel %vm1162, %v1099, %v1098
  %v1226 = vsel %vm1164, %v1100, %v1225
  %v1227 = vsel %vm1166, %v1101, %v1226
  %v1228 = vsel %vm1168, %v1102, %v1227
  %v1229 = vsel %vm1170, %v1103, %v1228
  %v1230 = vsel %vm1172, %v1104, %v1229
  %v1231 = vsel %vm1174, %v1105, %v1230
  %v1232 = vsel %vm1162, %v1107, %v1106
  %v1233 = vsel %vm1164, %v1108, %v1232
  %v1234 = vsel %vm1166, %v1109, %v1233
  %v1235 = vsel %vm1168, %v1110, %v1234
  %v1236 = vsel %vm1170, %v1111, %v1235
  %v1237 = vsel %vm1172, %v1112, %v1236
  %v1238 = vsel %vm1174, %v1113, %v1237
  %v1239 = vsel %vm1162, %v1115, %v1114
  %v1240 = vsel %vm1164, %v1116, %v1239
  %v1241 = vsel %vm1166, %v1117, %v1240
  %v1242 = vsel %vm1168, %v1118, %v1241
  %v1243 = vsel %vm1170, %v1119, %v1242
  %v1244 = vsel %vm1172, %v1120, %v1243
  %v1245 = vsel %vm1174, %v1121, %v1244
  %v1246 = vsel %vm1162, %v1123, %v1122
  %v1247 = vsel %vm1164, %v1124, %v1246
  %v1248 = vsel %vm1166, %v1125, %v1247
  %v1249 = vsel %vm1168, %v1126, %v1248
  %v1250 = vsel %vm1170, %v1127, %v1249
  %v1251 = vsel %vm1172, %v1128, %v1250
  %v1252 = vsel %vm1174, %v1129, %v1251
  %v1253 = vsel %vm1162, %v1131, %v1130
  %v1254 = vsel %vm1164, %v1132, %v1253
  %v1255 = vsel %vm1166, %v1133, %v1254
  %v1256 = vsel %vm1168, %v1134, %v1255
  %v1257 = vsel %vm1170, %v1135, %v1256
  %v1258 = vsel %vm1172, %v1136, %v1257
  %v1259 = vsel %vm1174, %v1137, %v1258
  %v1260 = vsel %vm1162, %v1139, %v1138
  %v1261 = vsel %vm1164, %v1140, %v1260
  %v1262 = vsel %vm1166, %v1141, %v1261
  %v1263 = vsel %vm1168, %v1142, %v1262
  %v1264 = vsel %vm1170, %v1143, %v1263
  %v1265 = vsel %vm1172, %v1144, %v1264
  %v1266 = vsel %vm1174, %v1145, %v1265
  %v1267 = vsel %vm1162, %v1147, %v1146
  %v1268 = vsel %vm1164, %v1148, %v1267
  %v1269 = vsel %vm1166, %v1149, %v1268
  %v1270 = vsel %vm1168, %v1150, %v1269
  %v1271 = vsel %vm1170, %v1151, %v1270
  %v1272 = vsel %vm1172, %v1152, %v1271
  %v1273 = vsel %vm1174, %v1153, %v1272
  %v1274 = vsel %vm1162, %v1155, %v1154
  %v1275 = vsel %vm1164, %v1156, %v1274
  %v1276 = vsel %vm1166, %v1157, %v1275
  %v1277 = vsel %vm1168, %v1158, %v1276
  %v1278 = vsel %vm1170, %v1159, %v1277
  %v1279 = vsel %vm1172, %v1160, %v1278
  %v1280 = vsel %vm1174, %v1161, %v1279
  %s1297 = scalar_lea.vmem [#allocation2], 16
  %1298 = vst.msk [vmem:[%s1297 + $0x1] sm:$0xff] %vm864, %v1175
  %1299 = vst.msk [vmem:[%s1297 + $0x11] sm:$0xff] %vm864, %v1182
  %1300 = vst.msk [vmem:[%s1297 + $0x21] sm:$0xff] %vm864, %v1189
  %1301 = vst.msk [vmem:[%s1297 + $0x31] sm:$0xff] %vm864, %v1196
  %1302 = vst.msk [vmem:[%s1297 + $0x41] sm:$0xff] %vm864, %v1203
  %1303 = vst.msk [vmem:[%s1297 + $0x51] sm:$0xff] %vm864, %v1210
  %1304 = vst.msk [vmem:[%s1297 + $0x61] sm:$0xff] %vm864, %v1217
  %1305 = vst.msk [vmem:[%s1297 + $0x71] sm:$0xff] %vm864, %v1224
  %1306 = vst.msk [vmem:[%s1297 + $0xa1] sm:$0xff] %vm864, %v1231
  %1307 = vst.msk [vmem:[%s1297 + $0xb1] sm:$0xff] %vm864, %v1238
  %1308 = vst.msk [vmem:[%s1297 + $0xc1] sm:$0xff] %vm864, %v1245
  %1309 = vst.msk [vmem:[%s1297 + $0xd1] sm:$0xff] %vm864, %v1252
  %1310 = vst.msk [vmem:[%s1297 + $0xe1] sm:$0xff] %vm864, %v1259
  %1311 = vst.msk [vmem:[%s1297 + $0xf1] sm:$0xff] %vm864, %v1266
  %1312 = vst.msk [vmem:[%s1297 + $0x101] sm:$0xff] %vm864, %v1273
  %1313 = vst.msk [vmem:[%s1297 + $0x111] sm:$0xff] %vm864, %v1280
  %v1314 = vld [vmem:[#allocation2] sm:$0xff]
  %v1315 = vld [vmem:[#allocation2 + $0x10] sm:$0xff]
  %v1316 = vld [vmem:[#allocation2 + $0x20] sm:$0xff]
  %v1317 = vld [vmem:[#allocation2 + $0x30] sm:$0xff]
  %v1318 = vld [vmem:[#allocation2 + $0x40] sm:$0xff]
  %v1319 = vld [vmem:[#allocation2 + $0x50] sm:$0xff]
  %v1320 = vld [vmem:[#allocation2 + $0x60] sm:$0xff]
  %v1321 = vld [vmem:[#allocation2 + $0x70] sm:$0xff]
  %v1322 = vld [vmem:[#allocation2 + $0xa0] sm:$0xff]
  %v1323 = vld [vmem:[#allocation2 + $0xb0] sm:$0xff]
  %v1324 = vld [vmem:[#allocation2 + $0xc0] sm:$0xff]
  %v1325 = vld [vmem:[#allocation2 + $0xd0] sm:$0xff]
  %v1326 = vld [vmem:[#allocation2 + $0xe0] sm:$0xff]
  %v1327 = vld [vmem:[#allocation2 + $0xf0] sm:$0xff]
  %v1328 = vld [vmem:[#allocation2 + $0x100] sm:$0xff]
  %v1329 = vld [vmem:[#allocation2 + $0x110] sm:$0xff]
  %v1330 = vld [vmem:[#allocation2 + $0x1] sm:$0xff]
  %v1331 = vld [vmem:[#allocation2 + $0x11] sm:$0xff]
  %v1332 = vld [vmem:[#allocation2 + $0x21] sm:$0xff]
  %v1333 = vld [vmem:[#allocation2 + $0x31] sm:$0xff]
  %v1334 = vld [vmem:[#allocation2 + $0x41] sm:$0xff]
  %v1335 = vld [vmem:[#allocation2 + $0x51] sm:$0xff]
  %v1336 = vld [vmem:[#allocation2 + $0x61] sm:$0xff]
  %v1337 = vld [vmem:[#allocation2 + $0x71] sm:$0xff]
  %v1338 = vld [vmem:[#allocation2 + $0xa1] sm:$0xff]
  %v1339 = vld [vmem:[#allocation2 + $0xb1] sm:$0xff]
  %v1340 = vld [vmem:[#allocation2 + $0xc1] sm:$0xff]
  %v1341 = vld [vmem:[#allocation2 + $0xd1] sm:$0xff]
  %v1342 = vld [vmem:[#allocation2 + $0xe1] sm:$0xff]
  %v1343 = vld [vmem:[#allocation2 + $0xf1] sm:$0xff]
  %v1344 = vld [vmem:[#allocation2 + $0x101] sm:$0xff]
  %v1345 = vld [vmem:[#allocation2 + $0x111] sm:$0xff]
  %v1346 = vld [vmem:[#allocation2 + $0x2] sm:$0xff]
  %v1347 = vld [vmem:[#allocation2 + $0x12] sm:$0xff]
  %v1348 = vld [vmem:[#allocation2 + $0x22] sm:$0xff]
  %v1349 = vld [vmem:[#allocation2 + $0x32] sm:$0xff]
  %v1350 = vld [vmem:[#allocation2 + $0x42] sm:$0xff]
  %v1351 = vld [vmem:[#allocation2 + $0x52] sm:$0xff]
  %v1352 = vld [vmem:[#allocation2 + $0x62] sm:$0xff]
  %v1353 = vld [vmem:[#allocation2 + $0x72] sm:$0xff]
  %v1354 = vld [vmem:[#allocation2 + $0xa2] sm:$0xff]
  %v1355 = vld [vmem:[#allocation2 + $0xb2] sm:$0xff]
  %v1356 = vld [vmem:[#allocation2 + $0xc2] sm:$0xff]
  %v1357 = vld [vmem:[#allocation2 + $0xd2] sm:$0xff]
  %v1358 = vld [vmem:[#allocation2 + $0xe2] sm:$0xff]
  %v1359 = vld [vmem:[#allocation2 + $0xf2] sm:$0xff]
  %v1360 = vld [vmem:[#allocation2 + $0x102] sm:$0xff]
  %v1361 = vld [vmem:[#allocation2 + $0x112] sm:$0xff]
  %v1362 = vld [vmem:[%s1297] sm:$0xff]
  %v1363 = vld [vmem:[%s1297 + $0x10] sm:$0xff]
  %v1364 = vld [vmem:[%s1297 + $0x20] sm:$0xff]
  %v1365 = vld [vmem:[%s1297 + $0x30] sm:$0xff]
  %v1366 = vld [vmem:[%s1297 + $0x40] sm:$0xff]
  %v1367 = vld [vmem:[%s1297 + $0x50] sm:$0xff]
  %v1368 = vld [vmem:[%s1297 + $0x60] sm:$0xff]
  %v1369 = vld [vmem:[%s1297 + $0x70] sm:$0xff]
  %v1370 = vld [vmem:[%s1297 + $0xa0] sm:$0xff]
  %v1371 = vld [vmem:[%s1297 + $0xb0] sm:$0xff]
  %v1372 = vld [vmem:[%s1297 + $0xc0] sm:$0xff]
  %v1373 = vld [vmem:[%s1297 + $0xd0] sm:$0xff]
  %v1374 = vld [vmem:[%s1297 + $0xe0] sm:$0xff]
  %v1375 = vld [vmem:[%s1297 + $0xf0] sm:$0xff]
  %v1376 = vld [vmem:[%s1297 + $0x100] sm:$0xff]
  %v1377 = vld [vmem:[%s1297 + $0x110] sm:$0xff]
  %v1378 = vld [vmem:[%s1297 + $0x1] sm:$0xff]
  %v1379 = vld [vmem:[%s1297 + $0x11] sm:$0xff]
  %v1380 = vld [vmem:[%s1297 + $0x21] sm:$0xff]
  %v1381 = vld [vmem:[%s1297 + $0x31] sm:$0xff]
  %v1382 = vld [vmem:[%s1297 + $0x41] sm:$0xff]
  %v1383 = vld [vmem:[%s1297 + $0x51] sm:$0xff]
  %v1384 = vld [vmem:[%s1297 + $0x61] sm:$0xff]
  %v1385 = vld [vmem:[%s1297 + $0x71] sm:$0xff]
  %v1386 = vld [vmem:[%s1297 + $0xa1] sm:$0xff]
  %v1387 = vld [vmem:[%s1297 + $0xb1] sm:$0xff]
  %v1388 = vld [vmem:[%s1297 + $0xc1] sm:$0xff]
  %v1389 = vld [vmem:[%s1297 + $0xd1] sm:$0xff]
  %v1390 = vld [vmem:[%s1297 + $0xe1] sm:$0xff]
  %v1391 = vld [vmem:[%s1297 + $0xf1] sm:$0xff]
  %v1392 = vld [vmem:[%s1297 + $0x101] sm:$0xff]
  %v1393 = vld [vmem:[%s1297 + $0x111] sm:$0xff]
  %v1394 = vld [vmem:[%s1297 + $0x2] sm:$0xff]
  %v1395 = vld [vmem:[%s1297 + $0x12] sm:$0xff]
  %v1396 = vld [vmem:[%s1297 + $0x22] sm:$0xff]
  %v1397 = vld [vmem:[%s1297 + $0x32] sm:$0xff]
  %v1398 = vld [vmem:[%s1297 + $0x42] sm:$0xff]
  %v1399 = vld [vmem:[%s1297 + $0x52] sm:$0xff]
  %v1400 = vld [vmem:[%s1297 + $0x62] sm:$0xff]
  %v1401 = vld [vmem:[%s1297 + $0x72] sm:$0xff]
  %v1402 = vld [vmem:[%s1297 + $0xa2] sm:$0xff]
  %v1403 = vld [vmem:[%s1297 + $0xb2] sm:$0xff]
  %v1404 = vld [vmem:[%s1297 + $0xc2] sm:$0xff]
  %v1405 = vld [vmem:[%s1297 + $0xd2] sm:$0xff]
  %v1406 = vld [vmem:[%s1297 + $0xe2] sm:$0xff]
  %v1407 = vld [vmem:[%s1297 + $0xf2] sm:$0xff]
  %v1408 = vld [vmem:[%s1297 + $0x102] sm:$0xff]
  %v1409 = vld [vmem:[%s1297 + $0x112] sm:$0xff]
  %s1410 = scalar_lea.vmem [#allocation2], 32
  %v1411 = vld [vmem:[%s1410] sm:$0xff]
  %v1412 = vld [vmem:[%s1410 + $0x10] sm:$0xff]
  %v1413 = vld [vmem:[%s1410 + $0x20] sm:$0xff]
  %v1414 = vld [vmem:[%s1410 + $0x30] sm:$0xff]
  %v1415 = vld [vmem:[%s1410 + $0x40] sm:$0xff]
  %v1416 = vld [vmem:[%s1410 + $0x50] sm:$0xff]
  %v1417 = vld [vmem:[%s1410 + $0x60] sm:$0xff]
  %v1418 = vld [vmem:[%s1410 + $0x70] sm:$0xff]
  %v1419 = vld [vmem:[%s1410 + $0xa0] sm:$0xff]
  %v1420 = vld [vmem:[%s1410 + $0xb0] sm:$0xff]
  %v1421 = vld [vmem:[%s1410 + $0xc0] sm:$0xff]
  %v1422 = vld [vmem:[%s1410 + $0xd0] sm:$0xff]
  %v1423 = vld [vmem:[%s1410 + $0xe0] sm:$0xff]
  %v1424 = vld [vmem:[%s1410 + $0xf0] sm:$0xff]
  %v1425 = vld [vmem:[%s1410 + $0x100] sm:$0xff]
  %v1426 = vld [vmem:[%s1410 + $0x110] sm:$0xff]
  %v1427 = vld [vmem:[%s1410 + $0x1] sm:$0xff]
  %v1428 = vld [vmem:[%s1410 + $0x11] sm:$0xff]
  %v1429 = vld [vmem:[%s1410 + $0x21] sm:$0xff]
  %v1430 = vld [vmem:[%s1410 + $0x31] sm:$0xff]
  %v1431 = vld [vmem:[%s1410 + $0x41] sm:$0xff]
  %v1432 = vld [vmem:[%s1410 + $0x51] sm:$0xff]
  %v1433 = vld [vmem:[%s1410 + $0x61] sm:$0xff]
  %v1434 = vld [vmem:[%s1410 + $0x71] sm:$0xff]
  %v1435 = vld [vmem:[%s1410 + $0xa1] sm:$0xff]
  %v1436 = vld [vmem:[%s1410 + $0xb1] sm:$0xff]
  %v1437 = vld [vmem:[%s1410 + $0xc1] sm:$0xff]
  %v1438 = vld [vmem:[%s1410 + $0xd1] sm:$0xff]
  %v1439 = vld [vmem:[%s1410 + $0xe1] sm:$0xff]
  %v1440 = vld [vmem:[%s1410 + $0xf1] sm:$0xff]
  %v1441 = vld [vmem:[%s1410 + $0x101] sm:$0xff]
  %v1442 = vld [vmem:[%s1410 + $0x111] sm:$0xff]
  %v1443 = vld [vmem:[%s1410 + $0x2] sm:$0xff]
  %v1444 = vld [vmem:[%s1410 + $0x12] sm:$0xff]
  %v1445 = vld [vmem:[%s1410 + $0x22] sm:$0xff]
  %v1446 = vld [vmem:[%s1410 + $0x32] sm:$0xff]
  %v1447 = vld [vmem:[%s1410 + $0x42] sm:$0xff]
  %v1448 = vld [vmem:[%s1410 + $0x52] sm:$0xff]
  %v1449 = vld [vmem:[%s1410 + $0x62] sm:$0xff]
  %v1450 = vld [vmem:[%s1410 + $0x72] sm:$0xff]
  %v1451 = vld [vmem:[%s1410 + $0xa2] sm:$0xff]
  %v1452 = vld [vmem:[%s1410 + $0xb2] sm:$0xff]
  %v1453 = vld [vmem:[%s1410 + $0xc2] sm:$0xff]
  %v1454 = vld [vmem:[%s1410 + $0xd2] sm:$0xff]
  %v1455 = vld [vmem:[%s1410 + $0xe2] sm:$0xff]
  %v1456 = vld [vmem:[%s1410 + $0xf2] sm:$0xff]
  %v1457 = vld [vmem:[%s1410 + $0x102] sm:$0xff]
  %v1458 = vld [vmem:[%s1410 + $0x112] sm:$0xff]
  %1475 = vrot.lane.b32.xlu0 %v1330, 4
  %v1476 = vpop.permute.xlu0 %1475
  %1477 = vrot.lane.b32.xlu0 %v1331, 4
  %v1478 = vpop.permute.xlu0 %1477
  %1479 = vrot.lane.b32.xlu0 %v1332, 4
  %v1480 = vpop.permute.xlu0 %1479
  %1481 = vrot.lane.b32.xlu0 %v1333, 4
  %v1482 = vpop.permute.xlu0 %1481
  %1483 = vrot.lane.b32.xlu0 %v1334, 4
  %v1484 = vpop.permute.xlu0 %1483
  %1485 = vrot.lane.b32.xlu0 %v1335, 4
  %v1486 = vpop.permute.xlu0 %1485
  %1487 = vrot.lane.b32.xlu0 %v1336, 4
  %v1488 = vpop.permute.xlu0 %1487
  %1489 = vrot.lane.b32.xlu0 %v1337, 4
  %v1490 = vpop.permute.xlu0 %1489
  %1491 = vrot.lane.b32.xlu0 %v1338, 4
  %v1492 = vpop.permute.xlu0 %1491
  %1493 = vrot.lane.b32.xlu0 %v1339, 4
  %v1494 = vpop.permute.xlu0 %1493
  %1495 = vrot.lane.b32.xlu0 %v1340, 4
  %v1496 = vpop.permute.xlu0 %1495
  %1497 = vrot.lane.b32.xlu0 %v1341, 4
  %v1498 = vpop.permute.xlu0 %1497
  %1499 = vrot.lane.b32.xlu0 %v1342, 4
  %v1500 = vpop.permute.xlu0 %1499
  %1501 = vrot.lane.b32.xlu0 %v1343, 4
  %v1502 = vpop.permute.xlu0 %1501
  %1503 = vrot.lane.b32.xlu0 %v1344, 4
  %v1504 = vpop.permute.xlu0 %1503
  %1505 = vrot.lane.b32.xlu0 %v1345, 4
  %v1506 = vpop.permute.xlu0 %1505
  %1539 = vrot.lane.b32.xlu0 %v1346, 8
  %v1540 = vpop.permute.xlu0 %1539
  %1541 = vrot.lane.b32.xlu0 %v1347, 8
  %v1542 = vpop.permute.xlu0 %1541
  %1543 = vrot.lane.b32.xlu0 %v1348, 8
  %v1544 = vpop.permute.xlu0 %1543
  %1545 = vrot.lane.b32.xlu0 %v1349, 8
  %v1546 = vpop.permute.xlu0 %1545
  %1547 = vrot.lane.b32.xlu0 %v1350, 8
  %v1548 = vpop.permute.xlu0 %1547
  %1549 = vrot.lane.b32.xlu0 %v1351, 8
  %v1550 = vpop.permute.xlu0 %1549
  %1551 = vrot.lane.b32.xlu0 %v1352, 8
  %v1552 = vpop.permute.xlu0 %1551
  %1553 = vrot.lane.b32.xlu0 %v1353, 8
  %v1554 = vpop.permute.xlu0 %1553
  %1555 = vrot.lane.b32.xlu0 %v1354, 8
  %v1556 = vpop.permute.xlu0 %1555
  %1557 = vrot.lane.b32.xlu0 %v1355, 8
  %v1558 = vpop.permute.xlu0 %1557
  %1559 = vrot.lane.b32.xlu0 %v1356, 8
  %v1560 = vpop.permute.xlu0 %1559
  %1561 = vrot.lane.b32.xlu0 %v1357, 8
  %v1562 = vpop.permute.xlu0 %1561
  %1563 = vrot.lane.b32.xlu0 %v1358, 8
  %v1564 = vpop.permute.xlu0 %1563
  %1565 = vrot.lane.b32.xlu0 %v1359, 8
  %v1566 = vpop.permute.xlu0 %1565
  %1567 = vrot.lane.b32.xlu0 %v1360, 8
  %v1568 = vpop.permute.xlu0 %1567
  %1569 = vrot.lane.b32.xlu0 %v1361, 8
  %v1570 = vpop.permute.xlu0 %1569
  %1603 = vrot.lane.b32.xlu0 %v1362, 12
  %v1604 = vpop.permute.xlu0 %1603
  %1605 = vrot.lane.b32.xlu0 %v1363, 12
  %v1606 = vpop.permute.xlu0 %1605
  %1607 = vrot.lane.b32.xlu0 %v1364, 12
  %v1608 = vpop.permute.xlu0 %1607
  %1609 = vrot.lane.b32.xlu0 %v1365, 12
  %v1610 = vpop.permute.xlu0 %1609
  %1611 = vrot.lane.b32.xlu0 %v1366, 12
  %v1612 = vpop.permute.xlu0 %1611
  %1613 = vrot.lane.b32.xlu0 %v1367, 12
  %v1614 = vpop.permute.xlu0 %1613
  %1615 = vrot.lane.b32.xlu0 %v1368, 12
  %v1616 = vpop.permute.xlu0 %1615
  %1617 = vrot.lane.b32.xlu0 %v1369, 12
  %v1618 = vpop.permute.xlu0 %1617
  %1619 = vrot.lane.b32.xlu0 %v1370, 12
  %v1620 = vpop.permute.xlu0 %1619
  %1621 = vrot.lane.b32.xlu0 %v1371, 12
  %v1622 = vpop.permute.xlu0 %1621
  %1623 = vrot.lane.b32.xlu0 %v1372, 12
  %v1624 = vpop.permute.xlu0 %1623
  %1625 = vrot.lane.b32.xlu0 %v1373, 12
  %v1626 = vpop.permute.xlu0 %1625
  %1627 = vrot.lane.b32.xlu0 %v1374, 12
  %v1628 = vpop.permute.xlu0 %1627
  %1629 = vrot.lane.b32.xlu0 %v1375, 12
  %v1630 = vpop.permute.xlu0 %1629
  %1631 = vrot.lane.b32.xlu0 %v1376, 12
  %v1632 = vpop.permute.xlu0 %1631
  %1633 = vrot.lane.b32.xlu0 %v1377, 12
  %v1634 = vpop.permute.xlu0 %1633
  %1667 = vrot.lane.b32.xlu0 %v1378, 16
  %v1668 = vpop.permute.xlu0 %1667
  %1669 = vrot.lane.b32.xlu0 %v1379, 16
  %v1670 = vpop.permute.xlu0 %1669
  %1671 = vrot.lane.b32.xlu0 %v1380, 16
  %v1672 = vpop.permute.xlu0 %1671
  %1673 = vrot.lane.b32.xlu0 %v1381, 16
  %v1674 = vpop.permute.xlu0 %1673
  %1675 = vrot.lane.b32.xlu0 %v1382, 16
  %v1676 = vpop.permute.xlu0 %1675
  %1677 = vrot.lane.b32.xlu0 %v1383, 16
  %v1678 = vpop.permute.xlu0 %1677
  %1679 = vrot.lane.b32.xlu0 %v1384, 16
  %v1680 = vpop.permute.xlu0 %1679
  %1681 = vrot.lane.b32.xlu0 %v1385, 16
  %v1682 = vpop.permute.xlu0 %1681
  %1683 = vrot.lane.b32.xlu0 %v1386, 16
  %v1684 = vpop.permute.xlu0 %1683
  %1685 = vrot.lane.b32.xlu0 %v1387, 16
  %v1686 = vpop.permute.xlu0 %1685
  %1687 = vrot.lane.b32.xlu0 %v1388, 16
  %v1688 = vpop.permute.xlu0 %1687
  %1689 = vrot.lane.b32.xlu0 %v1389, 16
  %v1690 = vpop.permute.xlu0 %1689
  %1691 = vrot.lane.b32.xlu0 %v1390, 16
  %v1692 = vpop.permute.xlu0 %1691
  %1693 = vrot.lane.b32.xlu0 %v1391, 16
  %v1694 = vpop.permute.xlu0 %1693
  %1695 = vrot.lane.b32.xlu0 %v1392, 16
  %v1696 = vpop.permute.xlu0 %1695
  %1697 = vrot.lane.b32.xlu0 %v1393, 16
  %v1698 = vpop.permute.xlu0 %1697
  %1731 = vrot.lane.b32.xlu0 %v1394, 20
  %v1732 = vpop.permute.xlu0 %1731
  %1733 = vrot.lane.b32.xlu0 %v1395, 20
  %v1734 = vpop.permute.xlu0 %1733
  %1735 = vrot.lane.b32.xlu0 %v1396, 20
  %v1736 = vpop.permute.xlu0 %1735
  %1737 = vrot.lane.b32.xlu0 %v1397, 20
  %v1738 = vpop.permute.xlu0 %1737
  %1739 = vrot.lane.b32.xlu0 %v1398, 20
  %v1740 = vpop.permute.xlu0 %1739
  %1741 = vrot.lane.b32.xlu0 %v1399, 20
  %v1742 = vpop.permute.xlu0 %1741
  %1743 = vrot.lane.b32.xlu0 %v1400, 20
  %v1744 = vpop.permute.xlu0 %1743
  %1745 = vrot.lane.b32.xlu0 %v1401, 20
  %v1746 = vpop.permute.xlu0 %1745
  %1747 = vrot.lane.b32.xlu0 %v1402, 20
  %v1748 = vpop.permute.xlu0 %1747
  %1749 = vrot.lane.b32.xlu0 %v1403, 20
  %v1750 = vpop.permute.xlu0 %1749
  %1751 = vrot.lane.b32.xlu0 %v1404, 20
  %v1752 = vpop.permute.xlu0 %1751
  %1753 = vrot.lane.b32.xlu0 %v1405, 20
  %v1754 = vpop.permute.xlu0 %1753
  %1755 = vrot.lane.b32.xlu0 %v1406, 20
  %v1756 = vpop.permute.xlu0 %1755
  %1757 = vrot.lane.b32.xlu0 %v1407, 20
  %v1758 = vpop.permute.xlu0 %1757
  %1759 = vrot.lane.b32.xlu0 %v1408, 20
  %v1760 = vpop.permute.xlu0 %1759
  %1761 = vrot.lane.b32.xlu0 %v1409, 20
  %v1762 = vpop.permute.xlu0 %1761
  %1795 = vrot.lane.b32.xlu0 %v1411, 24
  %v1796 = vpop.permute.xlu0 %1795
  %1797 = vrot.lane.b32.xlu0 %v1412, 24
  %v1798 = vpop.permute.xlu0 %1797
  %1799 = vrot.lane.b32.xlu0 %v1413, 24
  %v1800 = vpop.permute.xlu0 %1799
  %1801 = vrot.lane.b32.xlu0 %v1414, 24
  %v1802 = vpop.permute.xlu0 %1801
  %1803 = vrot.lane.b32.xlu0 %v1415, 24
  %v1804 = vpop.permute.xlu0 %1803
  %1805 = vrot.lane.b32.xlu0 %v1416, 24
  %v1806 = vpop.permute.xlu0 %1805
  %1807 = vrot.lane.b32.xlu0 %v1417, 24
  %v1808 = vpop.permute.xlu0 %1807
  %1809 = vrot.lane.b32.xlu0 %v1418, 24
  %v1810 = vpop.permute.xlu0 %1809
  %1811 = vrot.lane.b32.xlu0 %v1419, 24
  %v1812 = vpop.permute.xlu0 %1811
  %1813 = vrot.lane.b32.xlu0 %v1420, 24
  %v1814 = vpop.permute.xlu0 %1813
  %1815 = vrot.lane.b32.xlu0 %v1421, 24
  %v1816 = vpop.permute.xlu0 %1815
  %1817 = vrot.lane.b32.xlu0 %v1422, 24
  %v1818 = vpop.permute.xlu0 %1817
  %1819 = vrot.lane.b32.xlu0 %v1423, 24
  %v1820 = vpop.permute.xlu0 %1819
  %1821 = vrot.lane.b32.xlu0 %v1424, 24
  %v1822 = vpop.permute.xlu0 %1821
  %1823 = vrot.lane.b32.xlu0 %v1425, 24
  %v1824 = vpop.permute.xlu0 %1823
  %1825 = vrot.lane.b32.xlu0 %v1426, 24
  %v1826 = vpop.permute.xlu0 %1825
  %1859 = vrot.lane.b32.xlu0 %v1427, 28
  %v1860 = vpop.permute.xlu0 %1859
  %1861 = vrot.lane.b32.xlu0 %v1428, 28
  %v1862 = vpop.permute.xlu0 %1861
  %1863 = vrot.lane.b32.xlu0 %v1429, 28
  %v1864 = vpop.permute.xlu0 %1863
  %1865 = vrot.lane.b32.xlu0 %v1430, 28
  %v1866 = vpop.permute.xlu0 %1865
  %1867 = vrot.lane.b32.xlu0 %v1431, 28
  %v1868 = vpop.permute.xlu0 %1867
  %1869 = vrot.lane.b32.xlu0 %v1432, 28
  %v1870 = vpop.permute.xlu0 %1869
  %1871 = vrot.lane.b32.xlu0 %v1433, 28
  %v1872 = vpop.permute.xlu0 %1871
  %1873 = vrot.lane.b32.xlu0 %v1434, 28
  %v1874 = vpop.permute.xlu0 %1873
  %1875 = vrot.lane.b32.xlu0 %v1435, 28
  %v1876 = vpop.permute.xlu0 %1875
  %1877 = vrot.lane.b32.xlu0 %v1436, 28
  %v1878 = vpop.permute.xlu0 %1877
  %1879 = vrot.lane.b32.xlu0 %v1437, 28
  %v1880 = vpop.permute.xlu0 %1879
  %1881 = vrot.lane.b32.xlu0 %v1438, 28
  %v1882 = vpop.permute.xlu0 %1881
  %1883 = vrot.lane.b32.xlu0 %v1439, 28
  %v1884 = vpop.permute.xlu0 %1883
  %1885 = vrot.lane.b32.xlu0 %v1440, 28
  %v1886 = vpop.permute.xlu0 %1885
  %1887 = vrot.lane.b32.xlu0 %v1441, 28
  %v1888 = vpop.permute.xlu0 %1887
  %1889 = vrot.lane.b32.xlu0 %v1442, 28
  %v1890 = vpop.permute.xlu0 %1889
  %1923 = vrot.lane.b32.xlu0 %v1443, 32
  %v1924 = vpop.permute.xlu0 %1923
  %1925 = vrot.lane.b32.xlu0 %v1444, 32
  %v1926 = vpop.permute.xlu0 %1925
  %1927 = vrot.lane.b32.xlu0 %v1445, 32
  %v1928 = vpop.permute.xlu0 %1927
  %1929 = vrot.lane.b32.xlu0 %v1446, 32
  %v1930 = vpop.permute.xlu0 %1929
  %1931 = vrot.lane.b32.xlu0 %v1447, 32
  %v1932 = vpop.permute.xlu0 %1931
  %1933 = vrot.lane.b32.xlu0 %v1448, 32
  %v1934 = vpop.permute.xlu0 %1933
  %1935 = vrot.lane.b32.xlu0 %v1449, 32
  %v1936 = vpop.permute.xlu0 %1935
  %1937 = vrot.lane.b32.xlu0 %v1450, 32
  %v1938 = vpop.permute.xlu0 %1937
  %1939 = vrot.lane.b32.xlu0 %v1451, 32
  %v1940 = vpop.permute.xlu0 %1939
  %1941 = vrot.lane.b32.xlu0 %v1452, 32
  %v1942 = vpop.permute.xlu0 %1941
  %1943 = vrot.lane.b32.xlu0 %v1453, 32
  %v1944 = vpop.permute.xlu0 %1943
  %1945 = vrot.lane.b32.xlu0 %v1454, 32
  %v1946 = vpop.permute.xlu0 %1945
  %1947 = vrot.lane.b32.xlu0 %v1455, 32
  %v1948 = vpop.permute.xlu0 %1947
  %1949 = vrot.lane.b32.xlu0 %v1456, 32
  %v1950 = vpop.permute.xlu0 %1949
  %1951 = vrot.lane.b32.xlu0 %v1457, 32
  %v1952 = vpop.permute.xlu0 %1951
  %1953 = vrot.lane.b32.xlu0 %v1458, 32
  %v1954 = vpop.permute.xlu0 %1953
  %v1971 = vsel %vm864, %v1314, %v1476
  %v1972 = vsel %vm864, %v1315, %v1478
  %v1973 = vsel %vm864, %v1316, %v1480
  %v1974 = vsel %vm864, %v1317, %v1482
  %v1975 = vsel %vm864, %v1318, %v1484
  %v1976 = vsel %vm864, %v1319, %v1486
  %v1977 = vsel %vm864, %v1320, %v1488
  %v1978 = vsel %vm864, %v1321, %v1490
  %v1979 = vsel %vm864, %v1322, %v1492
  %v1980 = vsel %vm864, %v1323, %v1494
  %v1981 = vsel %vm864, %v1324, %v1496
  %v1982 = vsel %vm864, %v1325, %v1498
  %v1983 = vsel %vm864, %v1326, %v1500
  %v1984 = vsel %vm864, %v1327, %v1502
  %v1985 = vsel %vm864, %v1328, %v1504
  %v1986 = vsel %vm864, %v1329, %v1506
  %vm1987 = vcmask 64512
  %v1988 = vsel %vm1987, %v1971, %v1540
  %v1989 = vsel %vm1987, %v1972, %v1542
  %v1990 = vsel %vm1987, %v1973, %v1544
  %v1991 = vsel %vm1987, %v1974, %v1546
  %v1992 = vsel %vm1987, %v1975, %v1548
  %v1993 = vsel %vm1987, %v1976, %v1550
  %v1994 = vsel %vm1987, %v1977, %v1552
  %v1995 = vsel %vm1987, %v1978, %v1554
  %v1996 = vsel %vm1987, %v1979, %v1556
  %v1997 = vsel %vm1987, %v1980, %v1558
  %v1998 = vsel %vm1987, %v1981, %v1560
  %v1999 = vsel %vm1987, %v1982, %v1562
  %v2000 = vsel %vm1987, %v1983, %v1564
  %v2001 = vsel %vm1987, %v1984, %v1566
  %v2002 = vsel %vm1987, %v1985, %v1568
  %v2003 = vsel %vm1987, %v1986, %v1570
  %vm2004 = vcmask 97280
  %v2005 = vsel %vm2004, %v1988, %v1604
  %v2006 = vsel %vm2004, %v1989, %v1606
  %v2007 = vsel %vm2004, %v1990, %v1608
  %v2008 = vsel %vm2004, %v1991, %v1610
  %v2009 = vsel %vm2004, %v1992, %v1612
  %v2010 = vsel %vm2004, %v1993, %v1614
  %v2011 = vsel %vm2004, %v1994, %v1616
  %v2012 = vsel %vm2004, %v1995, %v1618
  %v2013 = vsel %vm2004, %v1996, %v1620
  %v2014 = vsel %vm2004, %v1997, %v1622
  %v2015 = vsel %vm2004, %v1998, %v1624
  %v2016 = vsel %vm2004, %v1999, %v1626
  %v2017 = vsel %vm2004, %v2000, %v1628
  %v2018 = vsel %vm2004, %v2001, %v1630
  %v2019 = vsel %vm2004, %v2002, %v1632
  %v2020 = vsel %vm2004, %v2003, %v1634
  %vm2021 = vcmask 130048
  %v2022 = vsel %vm2021, %v2005, %v1668
  %v2023 = vsel %vm2021, %v2006, %v1670
  %v2024 = vsel %vm2021, %v2007, %v1672
  %v2025 = vsel %vm2021, %v2008, %v1674
  %v2026 = vsel %vm2021, %v2009, %v1676
  %v2027 = vsel %vm2021, %v2010, %v1678
  %v2028 = vsel %vm2021, %v2011, %v1680
  %v2029 = vsel %vm2021, %v2012, %v1682
  %v2030 = vsel %vm2021, %v2013, %v1684
  %v2031 = vsel %vm2021, %v2014, %v1686
  %v2032 = vsel %vm2021, %v2015, %v1688
  %v2033 = vsel %vm2021, %v2016, %v1690
  %v2034 = vsel %vm2021, %v2017, %v1692
  %v2035 = vsel %vm2021, %v2018, %v1694
  %v2036 = vsel %vm2021, %v2019, %v1696
  %v2037 = vsel %vm2021, %v2020, %v1698
  %vm2038 = vcmask 162816
  %v2039 = vsel %vm2038, %v2022, %v1732
  %v2040 = vsel %vm2038, %v2023, %v1734
  %v2041 = vsel %vm2038, %v2024, %v1736
  %v2042 = vsel %vm2038, %v2025, %v1738
  %v2043 = vsel %vm2038, %v2026, %v1740
  %v2044 = vsel %vm2038, %v2027, %v1742
  %v2045 = vsel %vm2038, %v2028, %v1744
  %v2046 = vsel %vm2038, %v2029, %v1746
  %v2047 = vsel %vm2038, %v2030, %v1748
  %v2048 = vsel %vm2038, %v2031, %v1750
  %v2049 = vsel %vm2038, %v2032, %v1752
  %v2050 = vsel %vm2038, %v2033, %v1754
  %v2051 = vsel %vm2038, %v2034, %v1756
  %v2052 = vsel %vm2038, %v2035, %v1758
  %v2053 = vsel %vm2038, %v2036, %v1760
  %v2054 = vsel %vm2038, %v2037, %v1762
  %vm2055 = vcmask 195584
  %v2056 = vsel %vm2055, %v2039, %v1796
  %v2057 = vsel %vm2055, %v2040, %v1798
  %v2058 = vsel %vm2055, %v2041, %v1800
  %v2059 = vsel %vm2055, %v2042, %v1802
  %v2060 = vsel %vm2055, %v2043, %v1804
  %v2061 = vsel %vm2055, %v2044, %v1806
  %v2062 = vsel %vm2055, %v2045, %v1808
  %v2063 = vsel %vm2055, %v2046, %v1810
  %v2064 = vsel %vm2055, %v2047, %v1812
  %v2065 = vsel %vm2055, %v2048, %v1814
  %v2066 = vsel %vm2055, %v2049, %v1816
  %v2067 = vsel %vm2055, %v2050, %v1818
  %v2068 = vsel %vm2055, %v2051, %v1820
  %v2069 = vsel %vm2055, %v2052, %v1822
  %v2070 = vsel %vm2055, %v2053, %v1824
  %v2071 = vsel %vm2055, %v2054, %v1826
  %vm2072 = vcmask 228352
  %v2073 = vsel %vm2072, %v2056, %v1860
  %v2074 = vsel %vm2072, %v2057, %v1862
  %v2075 = vsel %vm2072, %v2058, %v1864
  %v2076 = vsel %vm2072, %v2059, %v1866
  %v2077 = vsel %vm2072, %v2060, %v1868
  %v2078 = vsel %vm2072, %v2061, %v1870
  %v2079 = vsel %vm2072, %v2062, %v1872
  %v2080 = vsel %vm2072, %v2063, %v1874
  %v2081 = vsel %vm2072, %v2064, %v1876
  %v2082 = vsel %vm2072, %v2065, %v1878
  %v2083 = vsel %vm2072, %v2066, %v1880
  %v2084 = vsel %vm2072, %v2067, %v1882
  %v2085 = vsel %vm2072, %v2068, %v1884
  %v2086 = vsel %vm2072, %v2069, %v1886
  %v2087 = vsel %vm2072, %v2070, %v1888
  %v2088 = vsel %vm2072, %v2071, %v1890
  %vm2089 = vcmask 261120
  %v2090 = vsel %vm2089, %v2073, %v1924
  %v2091 = vsel %vm2089, %v2074, %v1926
  %v2092 = vsel %vm2089, %v2075, %v1928
  %v2093 = vsel %vm2089, %v2076, %v1930
  %v2094 = vsel %vm2089, %v2077, %v1932
  %v2095 = vsel %vm2089, %v2078, %v1934
  %v2096 = vsel %vm2089, %v2079, %v1936
  %v2097 = vsel %vm2089, %v2080, %v1938
  %v2098 = vsel %vm2089, %v2081, %v1940
  %v2099 = vsel %vm2089, %v2082, %v1942
  %v2100 = vsel %vm2089, %v2083, %v1944
  %v2101 = vsel %vm2089, %v2084, %v1946
  %v2102 = vsel %vm2089, %v2085, %v1948
  %v2103 = vsel %vm2089, %v2086, %v1950
  %v2104 = vsel %vm2089, %v2087, %v1952
  %v2105 = vsel %vm2089, %v2088, %v1954
  %v2106 = vld [vmem:[%s1] sm:$0xff]
  %v2107 = vld [vmem:[%s1 + $0x8] sm:$0xff]
  %v2108 = vld [vmem:[%s1 + $0x10] sm:$0xff]
  %v2109 = vld [vmem:[%s1 + $0x18] sm:$0xff]
  %v2110 = vld [vmem:[%s1 + $0x20] sm:$0xf]
  %v2111 = vld [vmem:[%s2] sm:$0x1]
  %v2113 = vperm.slane %v2111, 0
  %vm2115 = vcmask 293888
  %v2117 = vsel %vm2115, %v2090, 0
  %v2120 = vsel %vm2115, %v2091, 0
  %v2123 = vsel %vm2115, %v2092, 0
  %v2126 = vsel %vm2115, %v2093, 0
  %v2129 = vsel %vm2115, %v2094, 0
  %v2132 = vsel %vm2115, %v2095, 0
  %v2135 = vsel %vm2115, %v2096, 0
  %v2138 = vsel %vm2115, %v2097, 0
  %v2141 = vsel %vm2115, %v2098, 0
  %v2144 = vsel %vm2115, %v2099, 0
  %v2147 = vsel %vm2115, %v2100, 0
  %v2150 = vsel %vm2115, %v2101, 0
  %v2153 = vsel %vm2115, %v2102, 0
  %v2156 = vsel %vm2115, %v2103, 0
  %v2159 = vsel %vm2115, %v2104, 0
  %v2162 = vsel %vm2115, %v2105, 0
  %vm2164 = vcmask 1043456
  %v2166 = vsel %vm2164, %v2110, 0
  %2168 = vmatpush.msra.mxu0 0.0
  %2169 = vmatpush.msra.mxu0 0.0
  %2170 = vmatpush.msra.mxu0 0.0
  %2171 = vmatpush.msra.mxu0 0.0
  %2172 = vmatpush.msra.mxu0 0.0
  %2173 = vmatpush.msra.mxu0 0.0
  %2174 = vmatpush.msra.mxu0 0.0
  %2175 = vmatpush.msra.mxu0 0.0
  %2176 = vmatpush.msra.mxu0 0.0
  %2177 = vmatpush.msra.mxu0 0.0
  %2178 = vmatpush.msra.mxu0 0.0
  %2179 = vmatpush.msra.mxu0 %v2166
  %2180 = vmatpush.msra.mxu0 %v2109
  %2181 = vmatpush.msra.mxu0 %v2108
  %2182 = vmatpush.msra.mxu0 %v2107
  %2183 = vmatpush.msra.mxu0 %v2106
  %2184 = vmatmul.f32.gmra.mxu0 %v2117
  %v2185 = vpop.f32.mrf.mxu0
  %v2186 = vadd.f32 %v2113, %v2185
  %2187 = vmatmul.f32.gmra.mxu0 %v2120
  %v2188 = vpop.f32.mrf.mxu0
  %v2189 = vadd.f32 %v2113, %v2188
  %2190 = vmatmul.f32.gmra.mxu0 %v2123
  %v2191 = vpop.f32.mrf.mxu0
  %v2192 = vadd.f32 %v2113, %v2191
  %2193 = vmatmul.f32.gmra.mxu0 %v2126
  %v2194 = vpop.f32.mrf.mxu0
  %v2195 = vadd.f32 %v2113, %v2194
  %2196 = vmatmul.f32.gmra.mxu0 %v2129
  %v2197 = vpop.f32.mrf.mxu0
  %v2198 = vadd.f32 %v2113, %v2197
  %2199 = vmatmul.f32.gmra.mxu0 %v2132
  %v2200 = vpop.f32.mrf.mxu0
  %v2201 = vadd.f32 %v2113, %v2200
  %2202 = vmatmul.f32.gmra.mxu0 %v2135
  %v2203 = vpop.f32.mrf.mxu0
  %v2204 = vadd.f32 %v2113, %v2203
  %2205 = vmatmul.f32.gmra.mxu0 %v2138
  %v2206 = vpop.f32.mrf.mxu0
  %v2207 = vadd.f32 %v2113, %v2206
  %2208 = vmatmul.f32.gmra.mxu0 %v2141
  %v2209 = vpop.f32.mrf.mxu0
  %v2210 = vadd.f32 %v2113, %v2209
  %2211 = vmatmul.f32.gmra.mxu0 %v2144
  %v2212 = vpop.f32.mrf.mxu0
  %v2213 = vadd.f32 %v2113, %v2212
  %2214 = vmatmul.f32.gmra.mxu0 %v2147
  %v2215 = vpop.f32.mrf.mxu0
  %v2216 = vadd.f32 %v2113, %v2215
  %2217 = vmatmul.f32.gmra.mxu0 %v2150
  %v2218 = vpop.f32.mrf.mxu0
  %v2219 = vadd.f32 %v2113, %v2218
  %2220 = vmatmul.f32.gmra.mxu0 %v2153
  %v2221 = vpop.f32.mrf.mxu0
  %v2222 = vadd.f32 %v2113, %v2221
  %2223 = vmatmul.f32.gmra.mxu0 %v2156
  %v2224 = vpop.f32.mrf.mxu0
  %v2225 = vadd.f32 %v2113, %v2224
  %2226 = vmatmul.f32.gmra.mxu0 %v2159
  %v2227 = vpop.f32.mrf.mxu0
  %v2228 = vadd.f32 %v2113, %v2227
  %2229 = vmatmul.f32.gmra.mxu0 %v2162
  %v2230 = vpop.f32.mrf.mxu0
  %v2231 = vadd.f32 %v2113, %v2230
  %2232 = vdwg.mxu0
  %v2233 = vsel %vm1987, %v2186, 0.0
  %v2234 = vsel %vm1987, %v2189, 0.0
  %v2235 = vadd.f32 %v2233, %v2234
  %v2236 = vsel %vm1987, %v2192, 0.0
  %v2237 = vadd.f32 %v2235, %v2236
  %v2238 = vsel %vm1987, %v2195, 0.0
  %v2239 = vadd.f32 %v2237, %v2238
  %v2240 = vsel %vm1987, %v2198, 0.0
  %v2241 = vadd.f32 %v2239, %v2240
  %v2242 = vsel %vm1987, %v2201, 0.0
  %v2243 = vadd.f32 %v2241, %v2242
  %v2244 = vsel %vm1987, %v2204, 0.0
  %v2245 = vadd.f32 %v2243, %v2244
  %v2246 = vsel %vm1987, %v2207, 0.0
  %v2247 = vadd.f32 %v2245, %v2246
  %v2248 = vsel %vm1987, %v2210, 0.0
  %v2249 = vadd.f32 %v2247, %v2248
  %v2250 = vsel %vm1987, %v2213, 0.0
  %v2251 = vadd.f32 %v2249, %v2250
  %v2252 = vsel %vm1987, %v2216, 0.0
  %v2253 = vadd.f32 %v2251, %v2252
  %v2254 = vsel %vm1987, %v2219, 0.0
  %v2255 = vadd.f32 %v2253, %v2254
  %v2256 = vsel %vm1987, %v2222, 0.0
  %v2257 = vadd.f32 %v2255, %v2256
  %v2258 = vsel %vm1987, %v2225, 0.0
  %v2259 = vadd.f32 %v2257, %v2258
  %v2260 = vsel %vm1987, %v2228, 0.0
  %v2261 = vadd.f32 %v2259, %v2260
  %v2262 = vsel %vm1987, %v2231, 0.0
  %v2263 = vadd.f32 %v2261, %v2262
  %v2264 = vrot.slane %v2263, 4
  %v2265 = vadd.f32 %v2263, %v2264
  %v2266 = vrot.slane %v2265, 2
  %v2267 = vadd.f32 %v2265, %v2266
  %v2268 = vrot.slane %v2267, 1
  %v2269 = vadd.f32 %v2267, %v2268
  %v2270 = vrcp.pop 128.0
  %v2271 = vmul.f32 128.0, %v2270
  %v2272 = vsub.f32 1.0, %v2271
  %v2273 = vmul.f32 %v2270, %v2272
  %v2274 = vadd.f32 %v2270, %v2273
  %vm2275 = vweird.f32 %v2270
  %v2276 = vsel %vm2275, %v2270, %v2274
  %v2277 = vmul.f32 %v2269, %v2276
  %v2278 = vsub.f32 %v2186, %v2277
  %v2279 = vsub.f32 %v2189, %v2277
  %v2280 = vsub.f32 %v2192, %v2277
  %v2281 = vsub.f32 %v2195, %v2277
  %v2282 = vsub.f32 %v2198, %v2277
  %v2283 = vsub.f32 %v2201, %v2277
  %v2284 = vsub.f32 %v2204, %v2277
  %v2285 = vsub.f32 %v2207, %v2277
  %v2286 = vsub.f32 %v2210, %v2277
  %v2287 = vsub.f32 %v2213, %v2277
  %v2288 = vsub.f32 %v2216, %v2277
  %v2289 = vsub.f32 %v2219, %v2277
  %v2290 = vsub.f32 %v2222, %v2277
  %v2291 = vsub.f32 %v2225, %v2277
  %v2292 = vsub.f32 %v2228, %v2277
  %v2293 = vsub.f32 %v2231, %v2277
  %v2294 = vmul.f32 %v2278, %v2278
  %v2295 = vmul.f32 %v2279, %v2279
  %v2296 = vmul.f32 %v2280, %v2280
  %v2297 = vmul.f32 %v2281, %v2281
  %v2298 = vmul.f32 %v2282, %v2282
  %v2299 = vmul.f32 %v2283, %v2283
  %v2300 = vmul.f32 %v2284, %v2284
  %v2301 = vmul.f32 %v2285, %v2285
  %v2302 = vmul.f32 %v2286, %v2286
  %v2303 = vmul.f32 %v2287, %v2287
  %v2304 = vmul.f32 %v2288, %v2288
  %v2305 = vmul.f32 %v2289, %v2289
  %v2306 = vmul.f32 %v2290, %v2290
  %v2307 = vmul.f32 %v2291, %v2291
  %v2308 = vmul.f32 %v2292, %v2292
  %v2309 = vmul.f32 %v2293, %v2293
  %v2310 = vsel %vm1987, %v2294, 0.0
  %v2311 = vsel %vm1987, %v2295, 0.0
  %v2312 = vadd.f32 %v2310, %v2311
  %v2313 = vsel %vm1987, %v2296, 0.0
  %v2314 = vadd.f32 %v2312, %v2313
  %v2315 = vsel %vm1987, %v2297, 0.0
  %v2316 = vadd.f32 %v2314, %v2315
  %v2317 = vsel %vm1987, %v2298, 0.0
  %v2318 = vadd.f32 %v2316, %v2317
  %v2319 = vsel %vm1987, %v2299, 0.0
  %v2320 = vadd.f32 %v2318, %v2319
  %v2321 = vsel %vm1987, %v2300, 0.0
  %v2322 = vadd.f32 %v2320, %v2321
  %v2323 = vsel %vm1987, %v2301, 0.0
  %v2324 = vadd.f32 %v2322, %v2323
  %v2325 = vsel %vm1987, %v2302, 0.0
  %v2326 = vadd.f32 %v2324, %v2325
  %v2327 = vsel %vm1987, %v2303, 0.0
  %v2328 = vadd.f32 %v2326, %v2327
  %v2329 = vsel %vm1987, %v2304, 0.0
  %v2330 = vadd.f32 %v2328, %v2329
  %v2331 = vsel %vm1987, %v2305, 0.0
  %v2332 = vadd.f32 %v2330, %v2331
  %v2333 = vsel %vm1987, %v2306, 0.0
  %v2334 = vadd.f32 %v2332, %v2333
  %v2335 = vsel %vm1987, %v2307, 0.0
  %v2336 = vadd.f32 %v2334, %v2335
  %v2337 = vsel %vm1987, %v2308, 0.0
  %v2338 = vadd.f32 %v2336, %v2337
  %v2339 = vsel %vm1987, %v2309, 0.0
  %v2340 = vadd.f32 %v2338, %v2339
  %v2341 = vrot.slane %v2340, 4
  %v2342 = vadd.f32 %v2340, %v2341
  %v2343 = vrot.slane %v2342, 2
  %v2344 = vadd.f32 %v2342, %v2343
  %v2345 = vrot.slane %v2344, 1
  %v2346 = vadd.f32 %v2344, %v2345
  %v2347 = vmul.f32 %v2346, %v2276
  %v2348 = vld [vmem:[%s3] sm:$0x1]
  %v2349 = vadd.f32 %v2347, 1e-05
  %v2350 = vrsqrt.pop %v2349
  %v2351 = vmul.f32 %v2350, %v2349
  %v2352 = vmul.f32 %v2351, %v2350
  %v2353 = vmul.f32 0.5, %v2352
  %v2354 = vsub.f32 1.5, %v2353
  %v2355 = vmul.f32 %v2350, %v2354
  %vm2356 = vweird.f32 %v2349
  %vm2357 = vweird.f32 %v2350
  %vm2358 = vmor %vm2356, %vm2357
  %v2359 = vsel %vm2358, %v2350, %v2355
  %v2360 = vmul.f32 %v2348, %v2359
  %v2361 = vld [vmem:[%s4] sm:$0x1]
  %v2362 = vmul.f32 %v2277, %v2360
  %v2363 = vsub.f32 %v2361, %v2362
  %v2365 = vperm.slane %v2360, 0
  %v2367 = vmul.f32 %v2186, %v2365
  %v2368 = vmul.f32 %v2189, %v2365
  %v2369 = vmul.f32 %v2192, %v2365
  %v2370 = vmul.f32 %v2195, %v2365
  %v2371 = vmul.f32 %v2198, %v2365
  %v2372 = vmul.f32 %v2201, %v2365
  %v2373 = vmul.f32 %v2204, %v2365
  %v2374 = vmul.f32 %v2207, %v2365
  %v2375 = vmul.f32 %v2210, %v2365
  %v2376 = vmul.f32 %v2213, %v2365
  %v2377 = vmul.f32 %v2216, %v2365
  %v2378 = vmul.f32 %v2219, %v2365
  %v2379 = vmul.f32 %v2222, %v2365
  %v2380 = vmul.f32 %v2225, %v2365
  %v2381 = vmul.f32 %v2228, %v2365
  %v2382 = vmul.f32 %v2231, %v2365
  %v2384 = vperm.slane %v2363, 0
  %v2386 = vadd.f32 %v2367, %v2384
  %v2387 = vadd.f32 %v2368, %v2384
  %v2388 = vadd.f32 %v2369, %v2384
  %v2389 = vadd.f32 %v2370, %v2384
  %v2390 = vadd.f32 %v2371, %v2384
  %v2391 = vadd.f32 %v2372, %v2384
  %v2392 = vadd.f32 %v2373, %v2384
  %v2393 = vadd.f32 %v2374, %v2384
  %v2394 = vadd.f32 %v2375, %v2384
  %v2395 = vadd.f32 %v2376, %v2384
  %v2396 = vadd.f32 %v2377, %v2384
  %v2397 = vadd.f32 %v2378, %v2384
  %v2398 = vadd.f32 %v2379, %v2384
  %v2399 = vadd.f32 %v2380, %v2384
  %v2400 = vadd.f32 %v2381, %v2384
  %v2401 = vadd.f32 %v2382, %v2384
  %v2402 = vmax.f32 %v2386, 0.0
  %v2403 = vmax.f32 %v2387, 0.0
  %v2404 = vmax.f32 %v2388, 0.0
  %v2405 = vmax.f32 %v2389, 0.0
  %v2406 = vmax.f32 %v2390, 0.0
  %v2407 = vmax.f32 %v2391, 0.0
  %v2408 = vmax.f32 %v2392, 0.0
  %v2409 = vmax.f32 %v2393, 0.0
  %v2410 = vmax.f32 %v2394, 0.0
  %v2411 = vmax.f32 %v2395, 0.0
  %v2412 = vmax.f32 %v2396, 0.0
  %v2413 = vmax.f32 %v2397, 0.0
  %v2414 = vmax.f32 %v2398, 0.0
  %v2415 = vmax.f32 %v2399, 0.0
  %v2416 = vmax.f32 %v2400, 0.0
  %v2417 = vmax.f32 %v2401, 0.0
  %2418 = vst.msk [vmem:[#allocation3] sm:$0xff] %vm1987, 0.0
  %vm2419 = vcmask 58368
  %2420 = vst.msk [vmem:[#allocation3 + $0x8] sm:$0x3] %vm2419, 0.0
  %2421 = vst.msk [vmem:[#allocation3 + $0x10] sm:$0xff] %vm1987, 0.0
  %2422 = vst.msk [vmem:[#allocation3 + $0x18] sm:$0x3] %vm2419, 0.0
  %2423 = vst.msk [vmem:[#allocation3 + $0x20] sm:$0xff] %vm1987, 0.0
  %2424 = vst.msk [vmem:[#allocation3 + $0x28] sm:$0x3] %vm2419, 0.0
  %2425 = vst.msk [vmem:[#allocation3 + $0x30] sm:$0xff] %vm1987, 0.0
  %2426 = vst.msk [vmem:[#allocation3 + $0x38] sm:$0x3] %vm2419, 0.0
  %2427 = vst.msk [vmem:[#allocation3 + $0x40] sm:$0xff] %vm1987, 0.0
  %2428 = vst.msk [vmem:[#allocation3 + $0x48] sm:$0x3] %vm2419, 0.0
  %2429 = vst.msk [vmem:[#allocation3 + $0x50] sm:$0xff] %vm1987, 0.0
  %2430 = vst.msk [vmem:[#allocation3 + $0x58] sm:$0x3] %vm2419, 0.0
  %2431 = vst.msk [vmem:[#allocation3 + $0x60] sm:$0xff] %vm1987, 0.0
  %2432 = vst.msk [vmem:[#allocation3 + $0x68] sm:$0x3] %vm2419, 0.0
  %2433 = vst.msk [vmem:[#allocation3 + $0x70] sm:$0xff] %vm1987, 0.0
  %2434 = vst.msk [vmem:[#allocation3 + $0x78] sm:$0x3] %vm2419, 0.0
  %2435 = vst.msk [vmem:[#allocation3 + $0x80] sm:$0xff] %vm1987, 0.0
  %2436 = vst.msk [vmem:[#allocation3 + $0x88] sm:$0x3] %vm2419, 0.0
  %2437 = vst.msk [vmem:[#allocation3 + $0x90] sm:$0xff] %vm1987, 0.0
  %2438 = vst.msk [vmem:[#allocation3 + $0x98] sm:$0x3] %vm2419, 0.0
  %2439 = vst.msk [vmem:[#allocation3 + $0xa0] sm:$0xff] %vm1987, 0.0
  %2440 = vst.msk [vmem:[#allocation3 + $0xa8] sm:$0x3] %vm2419, 0.0
  %2441 = vst.msk [vmem:[#allocation3 + $0xb0] sm:$0xff] %vm1987, 0.0
  %2442 = vst.msk [vmem:[#allocation3 + $0xb8] sm:$0x3] %vm2419, 0.0
  %2443 = vst.msk [vmem:[#allocation3 + $0xc0] sm:$0xff] %vm1987, 0.0
  %2444 = vst.msk [vmem:[#allocation3 + $0xc8] sm:$0x3] %vm2419, 0.0
  %2445 = vst.msk [vmem:[#allocation3 + $0xd0] sm:$0xff] %vm1987, 0.0
  %2446 = vst.msk [vmem:[#allocation3 + $0xd8] sm:$0x3] %vm2419, 0.0
  %2447 = vst.msk [vmem:[#allocation3 + $0xe0] sm:$0xff] %vm1987, 0.0
  %2448 = vst.msk [vmem:[#allocation3 + $0xe8] sm:$0x3] %vm2419, 0.0
  %2449 = vst.msk [vmem:[#allocation3 + $0xf0] sm:$0xff] %vm1987, 0.0
  %2450 = vst.msk [vmem:[#allocation3 + $0xf8] sm:$0x3] %vm2419, 0.0
  %2451 = vst.msk [vmem:[#allocation3 + $0x100] sm:$0xff] %vm1987, 0.0
  %2452 = vst.msk [vmem:[#allocation3 + $0x108] sm:$0x3] %vm2419, 0.0
  %2453 = vst.msk [vmem:[#allocation3 + $0x110] sm:$0xff] %vm1987, 0.0
  %2454 = vst.msk [vmem:[#allocation3 + $0x118] sm:$0x3] %vm2419, 0.0
  %2455 = vst.msk [vmem:[#allocation3 + $0x120] sm:$0xff] %vm1987, 0.0
  %2456 = vst.msk [vmem:[#allocation3 + $0x128] sm:$0x3] %vm2419, 0.0
  %2457 = vst.msk [vmem:[#allocation3 + $0x130] sm:$0xff] %vm1987, 0.0
  %2458 = vst.msk [vmem:[#allocation3 + $0x138] sm:$0x3] %vm2419, 0.0
  %s2459 = scalar_lea.vmem [#allocation3], 16
  %2460 = vst.msk [vmem:[%s2459 + $0x1] sm:$0xff] %vm1987, %v2402
  %2461 = vst.msk [vmem:[%s2459 + $0x11] sm:$0xff] %vm1987, %v2403
  %2462 = vst.msk [vmem:[%s2459 + $0x21] sm:$0xff] %vm1987, %v2404
  %2463 = vst.msk [vmem:[%s2459 + $0x31] sm:$0xff] %vm1987, %v2405
  %2464 = vst.msk [vmem:[%s2459 + $0x41] sm:$0xff] %vm1987, %v2406
  %2465 = vst.msk [vmem:[%s2459 + $0x51] sm:$0xff] %vm1987, %v2407
  %2466 = vst.msk [vmem:[%s2459 + $0x61] sm:$0xff] %vm1987, %v2408
  %2467 = vst.msk [vmem:[%s2459 + $0x71] sm:$0xff] %vm1987, %v2409
  %2468 = vst.msk [vmem:[%s2459 + $0xa1] sm:$0xff] %vm1987, %v2410
  %2469 = vst.msk [vmem:[%s2459 + $0xb1] sm:$0xff] %vm1987, %v2411
  %2470 = vst.msk [vmem:[%s2459 + $0xc1] sm:$0xff] %vm1987, %v2412
  %2471 = vst.msk [vmem:[%s2459 + $0xd1] sm:$0xff] %vm1987, %v2413
  %2472 = vst.msk [vmem:[%s2459 + $0xe1] sm:$0xff] %vm1987, %v2414
  %2473 = vst.msk [vmem:[%s2459 + $0xf1] sm:$0xff] %vm1987, %v2415
  %2474 = vst.msk [vmem:[%s2459 + $0x101] sm:$0xff] %vm1987, %v2416
  %2475 = vst.msk [vmem:[%s2459 + $0x111] sm:$0xff] %vm1987, %v2417
  %v2476 = vld [vmem:[#allocation3] sm:$0xff]
  %v2477 = vld [vmem:[#allocation3 + $0x10] sm:$0xff]
  %v2478 = vld [vmem:[#allocation3 + $0x20] sm:$0xff]
  %v2479 = vld [vmem:[#allocation3 + $0x30] sm:$0xff]
  %v2480 = vld [vmem:[#allocation3 + $0x40] sm:$0xff]
  %v2481 = vld [vmem:[#allocation3 + $0x50] sm:$0xff]
  %v2482 = vld [vmem:[#allocation3 + $0x60] sm:$0xff]
  %v2483 = vld [vmem:[#allocation3 + $0x70] sm:$0xff]
  %v2484 = vld [vmem:[#allocation3 + $0xa0] sm:$0xff]
  %v2485 = vld [vmem:[#allocation3 + $0xb0] sm:$0xff]
  %v2486 = vld [vmem:[#allocation3 + $0xc0] sm:$0xff]
  %v2487 = vld [vmem:[#allocation3 + $0xd0] sm:$0xff]
  %v2488 = vld [vmem:[#allocation3 + $0xe0] sm:$0xff]
  %v2489 = vld [vmem:[#allocation3 + $0xf0] sm:$0xff]
  %v2490 = vld [vmem:[#allocation3 + $0x100] sm:$0xff]
  %v2491 = vld [vmem:[#allocation3 + $0x110] sm:$0xff]
  %v2492 = vld [vmem:[#allocation3 + $0x1] sm:$0xff]
  %v2493 = vld [vmem:[#allocation3 + $0x11] sm:$0xff]
  %v2494 = vld [vmem:[#allocation3 + $0x21] sm:$0xff]
  %v2495 = vld [vmem:[#allocation3 + $0x31] sm:$0xff]
  %v2496 = vld [vmem:[#allocation3 + $0x41] sm:$0xff]
  %v2497 = vld [vmem:[#allocation3 + $0x51] sm:$0xff]
  %v2498 = vld [vmem:[#allocation3 + $0x61] sm:$0xff]
  %v2499 = vld [vmem:[#allocation3 + $0x71] sm:$0xff]
  %v2500 = vld [vmem:[#allocation3 + $0xa1] sm:$0xff]
  %v2501 = vld [vmem:[#allocation3 + $0xb1] sm:$0xff]
  %v2502 = vld [vmem:[#allocation3 + $0xc1] sm:$0xff]
  %v2503 = vld [vmem:[#allocation3 + $0xd1] sm:$0xff]
  %v2504 = vld [vmem:[#allocation3 + $0xe1] sm:$0xff]
  %v2505 = vld [vmem:[#allocation3 + $0xf1] sm:$0xff]
  %v2506 = vld [vmem:[#allocation3 + $0x101] sm:$0xff]
  %v2507 = vld [vmem:[#allocation3 + $0x111] sm:$0xff]
  %v2508 = vld [vmem:[#allocation3 + $0x2] sm:$0xff]
  %v2509 = vld [vmem:[#allocation3 + $0x12] sm:$0xff]
  %v2510 = vld [vmem:[#allocation3 + $0x22] sm:$0xff]
  %v2511 = vld [vmem:[#allocation3 + $0x32] sm:$0xff]
  %v2512 = vld [vmem:[#allocation3 + $0x42] sm:$0xff]
  %v2513 = vld [vmem:[#allocation3 + $0x52] sm:$0xff]
  %v2514 = vld [vmem:[#allocation3 + $0x62] sm:$0xff]
  %v2515 = vld [vmem:[#allocation3 + $0x72] sm:$0xff]
  %v2516 = vld [vmem:[#allocation3 + $0xa2] sm:$0xff]
  %v2517 = vld [vmem:[#allocation3 + $0xb2] sm:$0xff]
  %v2518 = vld [vmem:[#allocation3 + $0xc2] sm:$0xff]
  %v2519 = vld [vmem:[#allocation3 + $0xd2] sm:$0xff]
  %v2520 = vld [vmem:[#allocation3 + $0xe2] sm:$0xff]
  %v2521 = vld [vmem:[#allocation3 + $0xf2] sm:$0xff]
  %v2522 = vld [vmem:[#allocation3 + $0x102] sm:$0xff]
  %v2523 = vld [vmem:[#allocation3 + $0x112] sm:$0xff]
  %v2524 = vld [vmem:[%s2459] sm:$0xff]
  %v2525 = vld [vmem:[%s2459 + $0x10] sm:$0xff]
  %v2526 = vld [vmem:[%s2459 + $0x20] sm:$0xff]
  %v2527 = vld [vmem:[%s2459 + $0x30] sm:$0xff]
  %v2528 = vld [vmem:[%s2459 + $0x40] sm:$0xff]
  %v2529 = vld [vmem:[%s2459 + $0x50] sm:$0xff]
  %v2530 = vld [vmem:[%s2459 + $0x60] sm:$0xff]
  %v2531 = vld [vmem:[%s2459 + $0x70] sm:$0xff]
  %v2532 = vld [vmem:[%s2459 + $0xa0] sm:$0xff]
  %v2533 = vld [vmem:[%s2459 + $0xb0] sm:$0xff]
  %v2534 = vld [vmem:[%s2459 + $0xc0] sm:$0xff]
  %v2535 = vld [vmem:[%s2459 + $0xd0] sm:$0xff]
  %v2536 = vld [vmem:[%s2459 + $0xe0] sm:$0xff]
  %v2537 = vld [vmem:[%s2459 + $0xf0] sm:$0xff]
  %v2538 = vld [vmem:[%s2459 + $0x100] sm:$0xff]
  %v2539 = vld [vmem:[%s2459 + $0x110] sm:$0xff]
  %v2540 = vld [vmem:[%s2459 + $0x1] sm:$0xff]
  %v2541 = vld [vmem:[%s2459 + $0x11] sm:$0xff]
  %v2542 = vld [vmem:[%s2459 + $0x21] sm:$0xff]
  %v2543 = vld [vmem:[%s2459 + $0x31] sm:$0xff]
  %v2544 = vld [vmem:[%s2459 + $0x41] sm:$0xff]
  %v2545 = vld [vmem:[%s2459 + $0x51] sm:$0xff]
  %v2546 = vld [vmem:[%s2459 + $0x61] sm:$0xff]
  %v2547 = vld [vmem:[%s2459 + $0x71] sm:$0xff]
  %v2548 = vld [vmem:[%s2459 + $0xa1] sm:$0xff]
  %v2549 = vld [vmem:[%s2459 + $0xb1] sm:$0xff]
  %v2550 = vld [vmem:[%s2459 + $0xc1] sm:$0xff]
  %v2551 = vld [vmem:[%s2459 + $0xd1] sm:$0xff]
  %v2552 = vld [vmem:[%s2459 + $0xe1] sm:$0xff]
  %v2553 = vld [vmem:[%s2459 + $0xf1] sm:$0xff]
  %v2554 = vld [vmem:[%s2459 + $0x101] sm:$0xff]
  %v2555 = vld [vmem:[%s2459 + $0x111] sm:$0xff]
  %v2556 = vld [vmem:[%s2459 + $0x2] sm:$0xff]
  %v2557 = vld [vmem:[%s2459 + $0x12] sm:$0xff]
  %v2558 = vld [vmem:[%s2459 + $0x22] sm:$0xff]
  %v2559 = vld [vmem:[%s2459 + $0x32] sm:$0xff]
  %v2560 = vld [vmem:[%s2459 + $0x42] sm:$0xff]
  %v2561 = vld [vmem:[%s2459 + $0x52] sm:$0xff]
  %v2562 = vld [vmem:[%s2459 + $0x62] sm:$0xff]
  %v2563 = vld [vmem:[%s2459 + $0x72] sm:$0xff]
  %v2564 = vld [vmem:[%s2459 + $0xa2] sm:$0xff]
  %v2565 = vld [vmem:[%s2459 + $0xb2] sm:$0xff]
  %v2566 = vld [vmem:[%s2459 + $0xc2] sm:$0xff]
  %v2567 = vld [vmem:[%s2459 + $0xd2] sm:$0xff]
  %v2568 = vld [vmem:[%s2459 + $0xe2] sm:$0xff]
  %v2569 = vld [vmem:[%s2459 + $0xf2] sm:$0xff]
  %v2570 = vld [vmem:[%s2459 + $0x102] sm:$0xff]
  %v2571 = vld [vmem:[%s2459 + $0x112] sm:$0xff]
  %s2572 = scalar_lea.vmem [#allocation3], 32
  %v2573 = vld [vmem:[%s2572] sm:$0xff]
  %v2574 = vld [vmem:[%s2572 + $0x10] sm:$0xff]
  %v2575 = vld [vmem:[%s2572 + $0x20] sm:$0xff]
  %v2576 = vld [vmem:[%s2572 + $0x30] sm:$0xff]
  %v2577 = vld [vmem:[%s2572 + $0x40] sm:$0xff]
  %v2578 = vld [vmem:[%s2572 + $0x50] sm:$0xff]
  %v2579 = vld [vmem:[%s2572 + $0x60] sm:$0xff]
  %v2580 = vld [vmem:[%s2572 + $0x70] sm:$0xff]
  %v2581 = vld [vmem:[%s2572 + $0xa0] sm:$0xff]
  %v2582 = vld [vmem:[%s2572 + $0xb0] sm:$0xff]
  %v2583 = vld [vmem:[%s2572 + $0xc0] sm:$0xff]
  %v2584 = vld [vmem:[%s2572 + $0xd0] sm:$0xff]
  %v2585 = vld [vmem:[%s2572 + $0xe0] sm:$0xff]
  %v2586 = vld [vmem:[%s2572 + $0xf0] sm:$0xff]
  %v2587 = vld [vmem:[%s2572 + $0x100] sm:$0xff]
  %v2588 = vld [vmem:[%s2572 + $0x110] sm:$0xff]
  %v2589 = vld [vmem:[%s2572 + $0x1] sm:$0xff]
  %v2590 = vld [vmem:[%s2572 + $0x11] sm:$0xff]
  %v2591 = vld [vmem:[%s2572 + $0x21] sm:$0xff]
  %v2592 = vld [vmem:[%s2572 + $0x31] sm:$0xff]
  %v2593 = vld [vmem:[%s2572 + $0x41] sm:$0xff]
  %v2594 = vld [vmem:[%s2572 + $0x51] sm:$0xff]
  %v2595 = vld [vmem:[%s2572 + $0x61] sm:$0xff]
  %v2596 = vld [vmem:[%s2572 + $0x71] sm:$0xff]
  %v2597 = vld [vmem:[%s2572 + $0xa1] sm:$0xff]
  %v2598 = vld [vmem:[%s2572 + $0xb1] sm:$0xff]
  %v2599 = vld [vmem:[%s2572 + $0xc1] sm:$0xff]
  %v2600 = vld [vmem:[%s2572 + $0xd1] sm:$0xff]
  %v2601 = vld [vmem:[%s2572 + $0xe1] sm:$0xff]
  %v2602 = vld [vmem:[%s2572 + $0xf1] sm:$0xff]
  %v2603 = vld [vmem:[%s2572 + $0x101] sm:$0xff]
  %v2604 = vld [vmem:[%s2572 + $0x111] sm:$0xff]
  %v2605 = vld [vmem:[%s2572 + $0x2] sm:$0xff]
  %v2606 = vld [vmem:[%s2572 + $0x12] sm:$0xff]
  %v2607 = vld [vmem:[%s2572 + $0x22] sm:$0xff]
  %v2608 = vld [vmem:[%s2572 + $0x32] sm:$0xff]
  %v2609 = vld [vmem:[%s2572 + $0x42] sm:$0xff]
  %v2610 = vld [vmem:[%s2572 + $0x52] sm:$0xff]
  %v2611 = vld [vmem:[%s2572 + $0x62] sm:$0xff]
  %v2612 = vld [vmem:[%s2572 + $0x72] sm:$0xff]
  %v2613 = vld [vmem:[%s2572 + $0xa2] sm:$0xff]
  %v2614 = vld [vmem:[%s2572 + $0xb2] sm:$0xff]
  %v2615 = vld [vmem:[%s2572 + $0xc2] sm:$0xff]
  %v2616 = vld [vmem:[%s2572 + $0xd2] sm:$0xff]
  %v2617 = vld [vmem:[%s2572 + $0xe2] sm:$0xff]
  %v2618 = vld [vmem:[%s2572 + $0xf2] sm:$0xff]
  %v2619 = vld [vmem:[%s2572 + $0x102] sm:$0xff]
  %v2620 = vld [vmem:[%s2572 + $0x112] sm:$0xff]
  %2637 = vrot.lane.b32.xlu0 %v2492, 8
  %v2638 = vpop.permute.xlu0 %2637
  %2639 = vrot.lane.b32.xlu0 %v2493, 8
  %v2640 = vpop.permute.xlu0 %2639
  %2641 = vrot.lane.b32.xlu0 %v2494, 8
  %v2642 = vpop.permute.xlu0 %2641
  %2643 = vrot.lane.b32.xlu0 %v2495, 8
  %v2644 = vpop.permute.xlu0 %2643
  %2645 = vrot.lane.b32.xlu0 %v2496, 8
  %v2646 = vpop.permute.xlu0 %2645
  %2647 = vrot.lane.b32.xlu0 %v2497, 8
  %v2648 = vpop.permute.xlu0 %2647
  %2649 = vrot.lane.b32.xlu0 %v2498, 8
  %v2650 = vpop.permute.xlu0 %2649
  %2651 = vrot.lane.b32.xlu0 %v2499, 8
  %v2652 = vpop.permute.xlu0 %2651
  %2653 = vrot.lane.b32.xlu0 %v2500, 8
  %v2654 = vpop.permute.xlu0 %2653
  %2655 = vrot.lane.b32.xlu0 %v2501, 8
  %v2656 = vpop.permute.xlu0 %2655
  %2657 = vrot.lane.b32.xlu0 %v2502, 8
  %v2658 = vpop.permute.xlu0 %2657
  %2659 = vrot.lane.b32.xlu0 %v2503, 8
  %v2660 = vpop.permute.xlu0 %2659
  %2661 = vrot.lane.b32.xlu0 %v2504, 8
  %v2662 = vpop.permute.xlu0 %2661
  %2663 = vrot.lane.b32.xlu0 %v2505, 8
  %v2664 = vpop.permute.xlu0 %2663
  %2665 = vrot.lane.b32.xlu0 %v2506, 8
  %v2666 = vpop.permute.xlu0 %2665
  %2667 = vrot.lane.b32.xlu0 %v2507, 8
  %v2668 = vpop.permute.xlu0 %2667
  %2701 = vrot.lane.b32.xlu0 %v2508, 16
  %v2702 = vpop.permute.xlu0 %2701
  %2703 = vrot.lane.b32.xlu0 %v2509, 16
  %v2704 = vpop.permute.xlu0 %2703
  %2705 = vrot.lane.b32.xlu0 %v2510, 16
  %v2706 = vpop.permute.xlu0 %2705
  %2707 = vrot.lane.b32.xlu0 %v2511, 16
  %v2708 = vpop.permute.xlu0 %2707
  %2709 = vrot.lane.b32.xlu0 %v2512, 16
  %v2710 = vpop.permute.xlu0 %2709
  %2711 = vrot.lane.b32.xlu0 %v2513, 16
  %v2712 = vpop.permute.xlu0 %2711
  %2713 = vrot.lane.b32.xlu0 %v2514, 16
  %v2714 = vpop.permute.xlu0 %2713
  %2715 = vrot.lane.b32.xlu0 %v2515, 16
  %v2716 = vpop.permute.xlu0 %2715
  %2717 = vrot.lane.b32.xlu0 %v2516, 16
  %v2718 = vpop.permute.xlu0 %2717
  %2719 = vrot.lane.b32.xlu0 %v2517, 16
  %v2720 = vpop.permute.xlu0 %2719
  %2721 = vrot.lane.b32.xlu0 %v2518, 16
  %v2722 = vpop.permute.xlu0 %2721
  %2723 = vrot.lane.b32.xlu0 %v2519, 16
  %v2724 = vpop.permute.xlu0 %2723
  %2725 = vrot.lane.b32.xlu0 %v2520, 16
  %v2726 = vpop.permute.xlu0 %2725
  %2727 = vrot.lane.b32.xlu0 %v2521, 16
  %v2728 = vpop.permute.xlu0 %2727
  %2729 = vrot.lane.b32.xlu0 %v2522, 16
  %v2730 = vpop.permute.xlu0 %2729
  %2731 = vrot.lane.b32.xlu0 %v2523, 16
  %v2732 = vpop.permute.xlu0 %2731
  %2765 = vrot.lane.b32.xlu0 %v2524, 24
  %v2766 = vpop.permute.xlu0 %2765
  %2767 = vrot.lane.b32.xlu0 %v2525, 24
  %v2768 = vpop.permute.xlu0 %2767
  %2769 = vrot.lane.b32.xlu0 %v2526, 24
  %v2770 = vpop.permute.xlu0 %2769
  %2771 = vrot.lane.b32.xlu0 %v2527, 24
  %v2772 = vpop.permute.xlu0 %2771
  %2773 = vrot.lane.b32.xlu0 %v2528, 24
  %v2774 = vpop.permute.xlu0 %2773
  %2775 = vrot.lane.b32.xlu0 %v2529, 24
  %v2776 = vpop.permute.xlu0 %2775
  %2777 = vrot.lane.b32.xlu0 %v2530, 24
  %v2778 = vpop.permute.xlu0 %2777
  %2779 = vrot.lane.b32.xlu0 %v2531, 24
  %v2780 = vpop.permute.xlu0 %2779
  %2781 = vrot.lane.b32.xlu0 %v2532, 24
  %v2782 = vpop.permute.xlu0 %2781
  %2783 = vrot.lane.b32.xlu0 %v2533, 24
  %v2784 = vpop.permute.xlu0 %2783
  %2785 = vrot.lane.b32.xlu0 %v2534, 24
  %v2786 = vpop.permute.xlu0 %2785
  %2787 = vrot.lane.b32.xlu0 %v2535, 24
  %v2788 = vpop.permute.xlu0 %2787
  %2789 = vrot.lane.b32.xlu0 %v2536, 24
  %v2790 = vpop.permute.xlu0 %2789
  %2791 = vrot.lane.b32.xlu0 %v2537, 24
  %v2792 = vpop.permute.xlu0 %2791
  %2793 = vrot.lane.b32.xlu0 %v2538, 24
  %v2794 = vpop.permute.xlu0 %2793
  %2795 = vrot.lane.b32.xlu0 %v2539, 24
  %v2796 = vpop.permute.xlu0 %2795
  %2829 = vrot.lane.b32.xlu0 %v2540, 32
  %v2830 = vpop.permute.xlu0 %2829
  %2831 = vrot.lane.b32.xlu0 %v2541, 32
  %v2832 = vpop.permute.xlu0 %2831
  %2833 = vrot.lane.b32.xlu0 %v2542, 32
  %v2834 = vpop.permute.xlu0 %2833
  %2835 = vrot.lane.b32.xlu0 %v2543, 32
  %v2836 = vpop.permute.xlu0 %2835
  %2837 = vrot.lane.b32.xlu0 %v2544, 32
  %v2838 = vpop.permute.xlu0 %2837
  %2839 = vrot.lane.b32.xlu0 %v2545, 32
  %v2840 = vpop.permute.xlu0 %2839
  %2841 = vrot.lane.b32.xlu0 %v2546, 32
  %v2842 = vpop.permute.xlu0 %2841
  %2843 = vrot.lane.b32.xlu0 %v2547, 32
  %v2844 = vpop.permute.xlu0 %2843
  %2845 = vrot.lane.b32.xlu0 %v2548, 32
  %v2846 = vpop.permute.xlu0 %2845
  %2847 = vrot.lane.b32.xlu0 %v2549, 32
  %v2848 = vpop.permute.xlu0 %2847
  %2849 = vrot.lane.b32.xlu0 %v2550, 32
  %v2850 = vpop.permute.xlu0 %2849
  %2851 = vrot.lane.b32.xlu0 %v2551, 32
  %v2852 = vpop.permute.xlu0 %2851
  %2853 = vrot.lane.b32.xlu0 %v2552, 32
  %v2854 = vpop.permute.xlu0 %2853
  %2855 = vrot.lane.b32.xlu0 %v2553, 32
  %v2856 = vpop.permute.xlu0 %2855
  %2857 = vrot.lane.b32.xlu0 %v2554, 32
  %v2858 = vpop.permute.xlu0 %2857
  %2859 = vrot.lane.b32.xlu0 %v2555, 32
  %v2860 = vpop.permute.xlu0 %2859
  %2893 = vrot.lane.b32.xlu0 %v2556, 40
  %v2894 = vpop.permute.xlu0 %2893
  %2895 = vrot.lane.b32.xlu0 %v2557, 40
  %v2896 = vpop.permute.xlu0 %2895
  %2897 = vrot.lane.b32.xlu0 %v2558, 40
  %v2898 = vpop.permute.xlu0 %2897
  %2899 = vrot.lane.b32.xlu0 %v2559, 40
  %v2900 = vpop.permute.xlu0 %2899
  %2901 = vrot.lane.b32.xlu0 %v2560, 40
  %v2902 = vpop.permute.xlu0 %2901
  %2903 = vrot.lane.b32.xlu0 %v2561, 40
  %v2904 = vpop.permute.xlu0 %2903
  %2905 = vrot.lane.b32.xlu0 %v2562, 40
  %v2906 = vpop.permute.xlu0 %2905
  %2907 = vrot.lane.b32.xlu0 %v2563, 40
  %v2908 = vpop.permute.xlu0 %2907
  %2909 = vrot.lane.b32.xlu0 %v2564, 40
  %v2910 = vpop.permute.xlu0 %2909
  %2911 = vrot.lane.b32.xlu0 %v2565, 40
  %v2912 = vpop.permute.xlu0 %2911
  %2913 = vrot.lane.b32.xlu0 %v2566, 40
  %v2914 = vpop.permute.xlu0 %2913
  %2915 = vrot.lane.b32.xlu0 %v2567, 40
  %v2916 = vpop.permute.xlu0 %2915
  %2917 = vrot.lane.b32.xlu0 %v2568, 40
  %v2918 = vpop.permute.xlu0 %2917
  %2919 = vrot.lane.b32.xlu0 %v2569, 40
  %v2920 = vpop.permute.xlu0 %2919
  %2921 = vrot.lane.b32.xlu0 %v2570, 40
  %v2922 = vpop.permute.xlu0 %2921
  %2923 = vrot.lane.b32.xlu0 %v2571, 40
  %v2924 = vpop.permute.xlu0 %2923
  %2957 = vrot.lane.b32.xlu0 %v2573, 48
  %v2958 = vpop.permute.xlu0 %2957
  %2959 = vrot.lane.b32.xlu0 %v2574, 48
  %v2960 = vpop.permute.xlu0 %2959
  %2961 = vrot.lane.b32.xlu0 %v2575, 48
  %v2962 = vpop.permute.xlu0 %2961
  %2963 = vrot.lane.b32.xlu0 %v2576, 48
  %v2964 = vpop.permute.xlu0 %2963
  %2965 = vrot.lane.b32.xlu0 %v2577, 48
  %v2966 = vpop.permute.xlu0 %2965
  %2967 = vrot.lane.b32.xlu0 %v2578, 48
  %v2968 = vpop.permute.xlu0 %2967
  %2969 = vrot.lane.b32.xlu0 %v2579, 48
  %v2970 = vpop.permute.xlu0 %2969
  %2971 = vrot.lane.b32.xlu0 %v2580, 48
  %v2972 = vpop.permute.xlu0 %2971
  %2973 = vrot.lane.b32.xlu0 %v2581, 48
  %v2974 = vpop.permute.xlu0 %2973
  %2975 = vrot.lane.b32.xlu0 %v2582, 48
  %v2976 = vpop.permute.xlu0 %2975
  %2977 = vrot.lane.b32.xlu0 %v2583, 48
  %v2978 = vpop.permute.xlu0 %2977
  %2979 = vrot.lane.b32.xlu0 %v2584, 48
  %v2980 = vpop.permute.xlu0 %2979
  %2981 = vrot.lane.b32.xlu0 %v2585, 48
  %v2982 = vpop.permute.xlu0 %2981
  %2983 = vrot.lane.b32.xlu0 %v2586, 48
  %v2984 = vpop.permute.xlu0 %2983
  %2985 = vrot.lane.b32.xlu0 %v2587, 48
  %v2986 = vpop.permute.xlu0 %2985
  %2987 = vrot.lane.b32.xlu0 %v2588, 48
  %v2988 = vpop.permute.xlu0 %2987
  %3021 = vrot.lane.b32.xlu0 %v2589, 56
  %v3022 = vpop.permute.xlu0 %3021
  %3023 = vrot.lane.b32.xlu0 %v2590, 56
  %v3024 = vpop.permute.xlu0 %3023
  %3025 = vrot.lane.b32.xlu0 %v2591, 56
  %v3026 = vpop.permute.xlu0 %3025
  %3027 = vrot.lane.b32.xlu0 %v2592, 56
  %v3028 = vpop.permute.xlu0 %3027
  %3029 = vrot.lane.b32.xlu0 %v2593, 56
  %v3030 = vpop.permute.xlu0 %3029
  %3031 = vrot.lane.b32.xlu0 %v2594, 56
  %v3032 = vpop.permute.xlu0 %3031
  %3033 = vrot.lane.b32.xlu0 %v2595, 56
  %v3034 = vpop.permute.xlu0 %3033
  %3035 = vrot.lane.b32.xlu0 %v2596, 56
  %v3036 = vpop.permute.xlu0 %3035
  %3037 = vrot.lane.b32.xlu0 %v2597, 56
  %v3038 = vpop.permute.xlu0 %3037
  %3039 = vrot.lane.b32.xlu0 %v2598, 56
  %v3040 = vpop.permute.xlu0 %3039
  %3041 = vrot.lane.b32.xlu0 %v2599, 56
  %v3042 = vpop.permute.xlu0 %3041
  %3043 = vrot.lane.b32.xlu0 %v2600, 56
  %v3044 = vpop.permute.xlu0 %3043
  %3045 = vrot.lane.b32.xlu0 %v2601, 56
  %v3046 = vpop.permute.xlu0 %3045
  %3047 = vrot.lane.b32.xlu0 %v2602, 56
  %v3048 = vpop.permute.xlu0 %3047
  %3049 = vrot.lane.b32.xlu0 %v2603, 56
  %v3050 = vpop.permute.xlu0 %3049
  %3051 = vrot.lane.b32.xlu0 %v2604, 56
  %v3052 = vpop.permute.xlu0 %3051
  %3085 = vrot.lane.b32.xlu0 %v2605, 64
  %v3086 = vpop.permute.xlu0 %3085
  %3087 = vrot.lane.b32.xlu0 %v2606, 64
  %v3088 = vpop.permute.xlu0 %3087
  %3089 = vrot.lane.b32.xlu0 %v2607, 64
  %v3090 = vpop.permute.xlu0 %3089
  %3091 = vrot.lane.b32.xlu0 %v2608, 64
  %v3092 = vpop.permute.xlu0 %3091
  %3093 = vrot.lane.b32.xlu0 %v2609, 64
  %v3094 = vpop.permute.xlu0 %3093
  %3095 = vrot.lane.b32.xlu0 %v2610, 64
  %v3096 = vpop.permute.xlu0 %3095
  %3097 = vrot.lane.b32.xlu0 %v2611, 64
  %v3098 = vpop.permute.xlu0 %3097
  %3099 = vrot.lane.b32.xlu0 %v2612, 64
  %v3100 = vpop.permute.xlu0 %3099
  %3101 = vrot.lane.b32.xlu0 %v2613, 64
  %v3102 = vpop.permute.xlu0 %3101
  %3103 = vrot.lane.b32.xlu0 %v2614, 64
  %v3104 = vpop.permute.xlu0 %3103
  %3105 = vrot.lane.b32.xlu0 %v2615, 64
  %v3106 = vpop.permute.xlu0 %3105
  %3107 = vrot.lane.b32.xlu0 %v2616, 64
  %v3108 = vpop.permute.xlu0 %3107
  %3109 = vrot.lane.b32.xlu0 %v2617, 64
  %v3110 = vpop.permute.xlu0 %3109
  %3111 = vrot.lane.b32.xlu0 %v2618, 64
  %v3112 = vpop.permute.xlu0 %3111
  %3113 = vrot.lane.b32.xlu0 %v2619, 64
  %v3114 = vpop.permute.xlu0 %3113
  %3115 = vrot.lane.b32.xlu0 %v2620, 64
  %v3116 = vpop.permute.xlu0 %3115
  %v3133 = vsel %vm1987, %v2476, %v2638
  %v3134 = vsel %vm1987, %v2477, %v2640
  %v3135 = vsel %vm1987, %v2478, %v2642
  %v3136 = vsel %vm1987, %v2479, %v2644
  %v3137 = vsel %vm1987, %v2480, %v2646
  %v3138 = vsel %vm1987, %v2481, %v2648
  %v3139 = vsel %vm1987, %v2482, %v2650
  %v3140 = vsel %vm1987, %v2483, %v2652
  %v3141 = vsel %vm1987, %v2484, %v2654
  %v3142 = vsel %vm1987, %v2485, %v2656
  %v3143 = vsel %vm1987, %v2486, %v2658
  %v3144 = vsel %vm1987, %v2487, %v2660
  %v3145 = vsel %vm1987, %v2488, %v2662
  %v3146 = vsel %vm1987, %v2489, %v2664
  %v3147 = vsel %vm1987, %v2490, %v2666
  %v3148 = vsel %vm1987, %v2491, %v2668
  %v3149 = vsel %vm2021, %v3133, %v2702
  %v3150 = vsel %vm2021, %v3134, %v2704
  %v3151 = vsel %vm2021, %v3135, %v2706
  %v3152 = vsel %vm2021, %v3136, %v2708
  %v3153 = vsel %vm2021, %v3137, %v2710
  %v3154 = vsel %vm2021, %v3138, %v2712
  %v3155 = vsel %vm2021, %v3139, %v2714
  %v3156 = vsel %vm2021, %v3140, %v2716
  %v3157 = vsel %vm2021, %v3141, %v2718
  %v3158 = vsel %vm2021, %v3142, %v2720
  %v3159 = vsel %vm2021, %v3143, %v2722
  %v3160 = vsel %vm2021, %v3144, %v2724
  %v3161 = vsel %vm2021, %v3145, %v2726
  %v3162 = vsel %vm2021, %v3146, %v2728
  %v3163 = vsel %vm2021, %v3147, %v2730
  %v3164 = vsel %vm2021, %v3148, %v2732
  %v3165 = vsel %vm2055, %v3149, %v2766
  %v3166 = vsel %vm2055, %v3150, %v2768
  %v3167 = vsel %vm2055, %v3151, %v2770
  %v3168 = vsel %vm2055, %v3152, %v2772
  %v3169 = vsel %vm2055, %v3153, %v2774
  %v3170 = vsel %vm2055, %v3154, %v2776
  %v3171 = vsel %vm2055, %v3155, %v2778
  %v3172 = vsel %vm2055, %v3156, %v2780
  %v3173 = vsel %vm2055, %v3157, %v2782
  %v3174 = vsel %vm2055, %v3158, %v2784
  %v3175 = vsel %vm2055, %v3159, %v2786
  %v3176 = vsel %vm2055, %v3160, %v2788
  %v3177 = vsel %vm2055, %v3161, %v2790
  %v3178 = vsel %vm2055, %v3162, %v2792
  %v3179 = vsel %vm2055, %v3163, %v2794
  %v3180 = vsel %vm2055, %v3164, %v2796
  %v3181 = vsel %vm2089, %v3165, %v2830
  %v3182 = vsel %vm2089, %v3166, %v2832
  %v3183 = vsel %vm2089, %v3167, %v2834
  %v3184 = vsel %vm2089, %v3168, %v2836
  %v3185 = vsel %vm2089, %v3169, %v2838
  %v3186 = vsel %vm2089, %v3170, %v2840
  %v3187 = vsel %vm2089, %v3171, %v2842
  %v3188 = vsel %vm2089, %v3172, %v2844
  %v3189 = vsel %vm2089, %v3173, %v2846
  %v3190 = vsel %vm2089, %v3174, %v2848
  %v3191 = vsel %vm2089, %v3175, %v2850
  %v3192 = vsel %vm2089, %v3176, %v2852
  %v3193 = vsel %vm2089, %v3177, %v2854
  %v3194 = vsel %vm2089, %v3178, %v2856
  %v3195 = vsel %vm2089, %v3179, %v2858
  %v3196 = vsel %vm2089, %v3180, %v2860
  %vm3197 = vcmask 326656
  %v3198 = vsel %vm3197, %v3181, %v2894
  %v3199 = vsel %vm3197, %v3182, %v2896
  %v3200 = vsel %vm3197, %v3183, %v2898
  %v3201 = vsel %vm3197, %v3184, %v2900
  %v3202 = vsel %vm3197, %v3185, %v2902
  %v3203 = vsel %vm3197, %v3186, %v2904
  %v3204 = vsel %vm3197, %v3187, %v2906
  %v3205 = vsel %vm3197, %v3188, %v2908
  %v3206 = vsel %vm3197, %v3189, %v2910
  %v3207 = vsel %vm3197, %v3190, %v2912
  %v3208 = vsel %vm3197, %v3191, %v2914
  %v3209 = vsel %vm3197, %v3192, %v2916
  %v3210 = vsel %vm3197, %v3193, %v2918
  %v3211 = vsel %vm3197, %v3194, %v2920
  %v3212 = vsel %vm3197, %v3195, %v2922
  %v3213 = vsel %vm3197, %v3196, %v2924
  %vm3214 = vcmask 392192
  %v3215 = vsel %vm3214, %v3198, %v2958
  %v3216 = vsel %vm3214, %v3199, %v2960
  %v3217 = vsel %vm3214, %v3200, %v2962
  %v3218 = vsel %vm3214, %v3201, %v2964
  %v3219 = vsel %vm3214, %v3202, %v2966
  %v3220 = vsel %vm3214, %v3203, %v2968
  %v3221 = vsel %vm3214, %v3204, %v2970
  %v3222 = vsel %vm3214, %v3205, %v2972
  %v3223 = vsel %vm3214, %v3206, %v2974
  %v3224 = vsel %vm3214, %v3207, %v2976
  %v3225 = vsel %vm3214, %v3208, %v2978
  %v3226 = vsel %vm3214, %v3209, %v2980
  %v3227 = vsel %vm3214, %v3210, %v2982
  %v3228 = vsel %vm3214, %v3211, %v2984
  %v3229 = vsel %vm3214, %v3212, %v2986
  %v3230 = vsel %vm3214, %v3213, %v2988
  %vm3231 = vcmask 457728
  %v3232 = vsel %vm3231, %v3215, %v3022
  %v3233 = vsel %vm3231, %v3216, %v3024
  %v3234 = vsel %vm3231, %v3217, %v3026
  %v3235 = vsel %vm3231, %v3218, %v3028
  %v3236 = vsel %vm3231, %v3219, %v3030
  %v3237 = vsel %vm3231, %v3220, %v3032
  %v3238 = vsel %vm3231, %v3221, %v3034
  %v3239 = vsel %vm3231, %v3222, %v3036
  %v3240 = vsel %vm3231, %v3223, %v3038
  %v3241 = vsel %vm3231, %v3224, %v3040
  %v3242 = vsel %vm3231, %v3225, %v3042
  %v3243 = vsel %vm3231, %v3226, %v3044
  %v3244 = vsel %vm3231, %v3227, %v3046
  %v3245 = vsel %vm3231, %v3228, %v3048
  %v3246 = vsel %vm3231, %v3229, %v3050
  %v3247 = vsel %vm3231, %v3230, %v3052
  %vm3248 = vcmask 523264
  %v3249 = vsel %vm3248, %v3232, %v3086
  %v3250 = vsel %vm3248, %v3233, %v3088
  %v3251 = vsel %vm3248, %v3234, %v3090
  %v3252 = vsel %vm3248, %v3235, %v3092
  %v3253 = vsel %vm3248, %v3236, %v3094
  %v3254 = vsel %vm3248, %v3237, %v3096
  %v3255 = vsel %vm3248, %v3238, %v3098
  %v3256 = vsel %vm3248, %v3239, %v3100
  %v3257 = vsel %vm3248, %v3240, %v3102
  %v3258 = vsel %vm3248, %v3241, %v3104
  %v3259 = vsel %vm3248, %v3242, %v3106
  %v3260 = vsel %vm3248, %v3243, %v3108
  %v3261 = vsel %vm3248, %v3244, %v3110
  %v3262 = vsel %vm3248, %v3245, %v3112
  %v3263 = vsel %vm3248, %v3246, %v3114
  %v3264 = vsel %vm3248, %v3247, %v3116
  %v3265 = vld [vmem:[%s5] sm:$0xff]
  %v3266 = vld [vmem:[%s5 + $0x8] sm:$0xff]
  %v3267 = vld [vmem:[%s5 + $0x10] sm:$0xff]
  %v3268 = vld [vmem:[%s5 + $0x18] sm:$0xff]
  %v3269 = vld [vmem:[%s5 + $0x20] sm:$0xff]
  %v3270 = vld [vmem:[%s5 + $0x28] sm:$0xff]
  %v3271 = vld [vmem:[%s5 + $0x30] sm:$0xff]
  %v3272 = vld [vmem:[%s5 + $0x38] sm:$0xff]
  %v3273 = vld [vmem:[%s5 + $0x40] sm:$0xff]
  %v3274 = vld [vmem:[%s6] sm:$0x1]
  %v3276 = vperm.slane %v3274, 0
  %vm3278 = vcmask 588800
  %v3280 = vsel %vm3278, %v3249, 0
  %v3283 = vsel %vm3278, %v3250, 0
  %v3286 = vsel %vm3278, %v3251, 0
  %v3289 = vsel %vm3278, %v3252, 0
  %v3292 = vsel %vm3278, %v3253, 0
  %v3295 = vsel %vm3278, %v3254, 0
  %v3298 = vsel %vm3278, %v3255, 0
  %v3301 = vsel %vm3278, %v3256, 0
  %v3304 = vsel %vm3278, %v3257, 0
  %v3307 = vsel %vm3278, %v3258, 0
  %v3310 = vsel %vm3278, %v3259, 0
  %v3313 = vsel %vm3278, %v3260, 0
  %v3316 = vsel %vm3278, %v3261, 0
  %v3319 = vsel %vm3278, %v3262, 0
  %v3322 = vsel %vm3278, %v3263, 0
  %v3325 = vsel %vm3278, %v3264, 0
  %3327 = vmatpush.msra.mxu0 0.0
  %3328 = vmatpush.msra.mxu0 0.0
  %3329 = vmatpush.msra.mxu0 0.0
  %3330 = vmatpush.msra.mxu0 0.0
  %3331 = vmatpush.msra.mxu0 0.0
  %3332 = vmatpush.msra.mxu0 0.0
  %3333 = vmatpush.msra.mxu0 0.0
  %3334 = vmatpush.msra.mxu0 %v3273
  %3335 = vmatpush.msra.mxu0 %v3272
  %3336 = vmatpush.msra.mxu0 %v3271
  %3337 = vmatpush.msra.mxu0 %v3270
  %3338 = vmatpush.msra.mxu0 %v3269
  %3339 = vmatpush.msra.mxu0 %v3268
  %3340 = vmatpush.msra.mxu0 %v3267
  %3341 = vmatpush.msra.mxu0 %v3266
  %3342 = vmatpush.msra.mxu0 %v3265
  %3343 = vmatmul.f32.gmra.mxu0 %v3280
  %v3344 = vpop.f32.mrf.mxu0
  %v3345 = vadd.f32 %v3276, %v3344
  %3346 = vmatmul.f32.gmra.mxu0 %v3283
  %v3347 = vpop.f32.mrf.mxu0
  %v3348 = vadd.f32 %v3276, %v3347
  %3349 = vmatmul.f32.gmra.mxu0 %v3286
  %v3350 = vpop.f32.mrf.mxu0
  %v3351 = vadd.f32 %v3276, %v3350
  %3352 = vmatmul.f32.gmra.mxu0 %v3289
  %v3353 = vpop.f32.mrf.mxu0
  %v3354 = vadd.f32 %v3276, %v3353
  %3355 = vmatmul.f32.gmra.mxu0 %v3292
  %v3356 = vpop.f32.mrf.mxu0
  %v3357 = vadd.f32 %v3276, %v3356
  %3358 = vmatmul.f32.gmra.mxu0 %v3295
  %v3359 = vpop.f32.mrf.mxu0
  %v3360 = vadd.f32 %v3276, %v3359
  %3361 = vmatmul.f32.gmra.mxu0 %v3298
  %v3362 = vpop.f32.mrf.mxu0
  %v3363 = vadd.f32 %v3276, %v3362
  %3364 = vmatmul.f32.gmra.mxu0 %v3301
  %v3365 = vpop.f32.mrf.mxu0
  %v3366 = vadd.f32 %v3276, %v3365
  %3367 = vmatmul.f32.gmra.mxu0 %v3304
  %v3368 = vpop.f32.mrf.mxu0
  %v3369 = vadd.f32 %v3276, %v3368
  %3370 = vmatmul.f32.gmra.mxu0 %v3307
  %v3371 = vpop.f32.mrf.mxu0
  %v3372 = vadd.f32 %v3276, %v3371
  %3373 = vmatmul.f32.gmra.mxu0 %v3310
  %v3374 = vpop.f32.mrf.mxu0
  %v3375 = vadd.f32 %v3276, %v3374
  %3376 = vmatmul.f32.gmra.mxu0 %v3313
  %v3377 = vpop.f32.mrf.mxu0
  %v3378 = vadd.f32 %v3276, %v3377
  %3379 = vmatmul.f32.gmra.mxu0 %v3316
  %v3380 = vpop.f32.mrf.mxu0
  %v3381 = vadd.f32 %v3276, %v3380
  %3382 = vmatmul.f32.gmra.mxu0 %v3319
  %v3383 = vpop.f32.mrf.mxu0
  %v3384 = vadd.f32 %v3276, %v3383
  %3385 = vmatmul.f32.gmra.mxu0 %v3322
  %v3386 = vpop.f32.mrf.mxu0
  %v3387 = vadd.f32 %v3276, %v3386
  %3388 = vmatmul.f32.gmra.mxu0 %v3325
  %v3389 = vpop.f32.mrf.mxu0
  %v3390 = vadd.f32 %v3276, %v3389
  %3391 = vdwg.mxu0
  %v3392 = vsel %vm1987, %v3345, 0.0
  %v3393 = vsel %vm1987, %v3348, 0.0
  %v3394 = vadd.f32 %v3392, %v3393
  %v3395 = vsel %vm1987, %v3351, 0.0
  %v3396 = vadd.f32 %v3394, %v3395
  %v3397 = vsel %vm1987, %v3354, 0.0
  %v3398 = vadd.f32 %v3396, %v3397
  %v3399 = vsel %vm1987, %v3357, 0.0
  %v3400 = vadd.f32 %v3398, %v3399
  %v3401 = vsel %vm1987, %v3360, 0.0
  %v3402 = vadd.f32 %v3400, %v3401
  %v3403 = vsel %vm1987, %v3363, 0.0
  %v3404 = vadd.f32 %v3402, %v3403
  %v3405 = vsel %vm1987, %v3366, 0.0
  %v3406 = vadd.f32 %v3404, %v3405
  %v3407 = vsel %vm1987, %v3369, 0.0
  %v3408 = vadd.f32 %v3406, %v3407
  %v3409 = vsel %vm1987, %v3372, 0.0
  %v3410 = vadd.f32 %v3408, %v3409
  %v3411 = vsel %vm1987, %v3375, 0.0
  %v3412 = vadd.f32 %v3410, %v3411
  %v3413 = vsel %vm1987, %v3378, 0.0
  %v3414 = vadd.f32 %v3412, %v3413
  %v3415 = vsel %vm1987, %v3381, 0.0
  %v3416 = vadd.f32 %v3414, %v3415
  %v3417 = vsel %vm1987, %v3384, 0.0
  %v3418 = vadd.f32 %v3416, %v3417
  %v3419 = vsel %vm1987, %v3387, 0.0
  %v3420 = vadd.f32 %v3418, %v3419
  %v3421 = vsel %vm1987, %v3390, 0.0
  %v3422 = vadd.f32 %v3420, %v3421
  %v3423 = vrot.slane %v3422, 4
  %v3424 = vadd.f32 %v3422, %v3423
  %v3425 = vrot.slane %v3424, 2
  %v3426 = vadd.f32 %v3424, %v3425
  %v3427 = vrot.slane %v3426, 1
  %v3428 = vadd.f32 %v3426, %v3427
  %v3429 = vmul.f32 %v3428, %v2276
  %v3430 = vsub.f32 %v3345, %v3429
  %v3431 = vsub.f32 %v3348, %v3429
  %v3432 = vsub.f32 %v3351, %v3429
  %v3433 = vsub.f32 %v3354, %v3429
  %v3434 = vsub.f32 %v3357, %v3429
  %v3435 = vsub.f32 %v3360, %v3429
  %v3436 = vsub.f32 %v3363, %v3429
  %v3437 = vsub.f32 %v3366, %v3429
  %v3438 = vsub.f32 %v3369, %v3429
  %v3439 = vsub.f32 %v3372, %v3429
  %v3440 = vsub.f32 %v3375, %v3429
  %v3441 = vsub.f32 %v3378, %v3429
  %v3442 = vsub.f32 %v3381, %v3429
  %v3443 = vsub.f32 %v3384, %v3429
  %v3444 = vsub.f32 %v3387, %v3429
  %v3445 = vsub.f32 %v3390, %v3429
  %v3446 = vmul.f32 %v3430, %v3430
  %v3447 = vmul.f32 %v3431, %v3431
  %v3448 = vmul.f32 %v3432, %v3432
  %v3449 = vmul.f32 %v3433, %v3433
  %v3450 = vmul.f32 %v3434, %v3434
  %v3451 = vmul.f32 %v3435, %v3435
  %v3452 = vmul.f32 %v3436, %v3436
  %v3453 = vmul.f32 %v3437, %v3437
  %v3454 = vmul.f32 %v3438, %v3438
  %v3455 = vmul.f32 %v3439, %v3439
  %v3456 = vmul.f32 %v3440, %v3440
  %v3457 = vmul.f32 %v3441, %v3441
  %v3458 = vmul.f32 %v3442, %v3442
  %v3459 = vmul.f32 %v3443, %v3443
  %v3460 = vmul.f32 %v3444, %v3444
  %v3461 = vmul.f32 %v3445, %v3445
  %v3462 = vsel %vm1987, %v3446, 0.0
  %v3463 = vsel %vm1987, %v3447, 0.0
  %v3464 = vadd.f32 %v3462, %v3463
  %v3465 = vsel %vm1987, %v3448, 0.0
  %v3466 = vadd.f32 %v3464, %v3465
  %v3467 = vsel %vm1987, %v3449, 0.0
  %v3468 = vadd.f32 %v3466, %v3467
  %v3469 = vsel %vm1987, %v3450, 0.0
  %v3470 = vadd.f32 %v3468, %v3469
  %v3471 = vsel %vm1987, %v3451, 0.0
  %v3472 = vadd.f32 %v3470, %v3471
  %v3473 = vsel %vm1987, %v3452, 0.0
  %v3474 = vadd.f32 %v3472, %v3473
  %v3475 = vsel %vm1987, %v3453, 0.0
  %v3476 = vadd.f32 %v3474, %v3475
  %v3477 = vsel %vm1987, %v3454, 0.0
  %v3478 = vadd.f32 %v3476, %v3477
  %v3479 = vsel %vm1987, %v3455, 0.0
  %v3480 = vadd.f32 %v3478, %v3479
  %v3481 = vsel %vm1987, %v3456, 0.0
  %v3482 = vadd.f32 %v3480, %v3481
  %v3483 = vsel %vm1987, %v3457, 0.0
  %v3484 = vadd.f32 %v3482, %v3483
  %v3485 = vsel %vm1987, %v3458, 0.0
  %v3486 = vadd.f32 %v3484, %v3485
  %v3487 = vsel %vm1987, %v3459, 0.0
  %v3488 = vadd.f32 %v3486, %v3487
  %v3489 = vsel %vm1987, %v3460, 0.0
  %v3490 = vadd.f32 %v3488, %v3489
  %v3491 = vsel %vm1987, %v3461, 0.0
  %v3492 = vadd.f32 %v3490, %v3491
  %v3493 = vrot.slane %v3492, 4
  %v3494 = vadd.f32 %v3492, %v3493
  %v3495 = vrot.slane %v3494, 2
  %v3496 = vadd.f32 %v3494, %v3495
  %v3497 = vrot.slane %v3496, 1
  %v3498 = vadd.f32 %v3496, %v3497
  %v3499 = vmul.f32 %v3498, %v2276
  %v3500 = vld [vmem:[%s7] sm:$0x1]
  %v3501 = vadd.f32 %v3499, 1e-05
  %v3502 = vrsqrt.pop %v3501
  %v3503 = vmul.f32 %v3502, %v3501
  %v3504 = vmul.f32 %v3503, %v3502
  %v3505 = vmul.f32 0.5, %v3504
  %v3506 = vsub.f32 1.5, %v3505
  %v3507 = vmul.f32 %v3502, %v3506
  %vm3508 = vweird.f32 %v3501
  %vm3509 = vweird.f32 %v3502
  %vm3510 = vmor %vm3508, %vm3509
  %v3511 = vsel %vm3510, %v3502, %v3507
  %v3512 = vmul.f32 %v3500, %v3511
  %v3513 = vld [vmem:[%s8] sm:$0x1]
  %v3514 = vmul.f32 %v3429, %v3512
  %v3515 = vsub.f32 %v3513, %v3514
  %v3517 = vperm.slane %v3512, 0
  %v3519 = vmul.f32 %v3345, %v3517
  %v3520 = vmul.f32 %v3348, %v3517
  %v3521 = vmul.f32 %v3351, %v3517
  %v3522 = vmul.f32 %v3354, %v3517
  %v3523 = vmul.f32 %v3357, %v3517
  %v3524 = vmul.f32 %v3360, %v3517
  %v3525 = vmul.f32 %v3363, %v3517
  %v3526 = vmul.f32 %v3366, %v3517
  %v3527 = vmul.f32 %v3369, %v3517
  %v3528 = vmul.f32 %v3372, %v3517
  %v3529 = vmul.f32 %v3375, %v3517
  %v3530 = vmul.f32 %v3378, %v3517
  %v3531 = vmul.f32 %v3381, %v3517
  %v3532 = vmul.f32 %v3384, %v3517
  %v3533 = vmul.f32 %v3387, %v3517
  %v3534 = vmul.f32 %v3390, %v3517
  %v3536 = vperm.slane %v3515, 0
  %v3538 = vadd.f32 %v3519, %v3536
  %v3539 = vadd.f32 %v3520, %v3536
  %v3540 = vadd.f32 %v3521, %v3536
  %v3541 = vadd.f32 %v3522, %v3536
  %v3542 = vadd.f32 %v3523, %v3536
  %v3543 = vadd.f32 %v3524, %v3536
  %v3544 = vadd.f32 %v3525, %v3536
  %v3545 = vadd.f32 %v3526, %v3536
  %v3546 = vadd.f32 %v3527, %v3536
  %v3547 = vadd.f32 %v3528, %v3536
  %v3548 = vadd.f32 %v3529, %v3536
  %v3549 = vadd.f32 %v3530, %v3536
  %v3550 = vadd.f32 %v3531, %v3536
  %v3551 = vadd.f32 %v3532, %v3536
  %v3552 = vadd.f32 %v3533, %v3536
  %v3553 = vadd.f32 %v3534, %v3536
  %v3554 = vmax.f32 %v3538, 0.0
  %v3555 = vmax.f32 %v3539, 0.0
  %v3556 = vmax.f32 %v3540, 0.0
  %v3557 = vmax.f32 %v3541, 0.0
  %v3558 = vmax.f32 %v3542, 0.0
  %v3559 = vmax.f32 %v3543, 0.0
  %v3560 = vmax.f32 %v3544, 0.0
  %v3561 = vmax.f32 %v3545, 0.0
  %v3562 = vmax.f32 %v3546, 0.0
  %v3563 = vmax.f32 %v3547, 0.0
  %v3564 = vmax.f32 %v3548, 0.0
  %v3565 = vmax.f32 %v3549, 0.0
  %v3566 = vmax.f32 %v3550, 0.0
  %v3567 = vmax.f32 %v3551, 0.0
  %v3568 = vmax.f32 %v3552, 0.0
  %v3569 = vmax.f32 %v3553, 0.0
  %3570 = vxpose.xlu0.b32.start [1/16] %v3554, 128
  %3571 = vxpose.xlu0.b32.cont [2/16] %v3555, 128
  %3572 = vxpose.xlu0.b32.cont [3/16] %v3556, 128
  %3573 = vxpose.xlu0.b32.cont [4/16] %v3557, 128
  %3574 = vxpose.xlu0.b32.cont [5/16] %v3558, 128
  %3575 = vxpose.xlu0.b32.cont [6/16] %v3559, 128
  %3576 = vxpose.xlu0.b32.cont [7/16] %v3560, 128
  %3577 = vxpose.xlu0.b32.cont [8/16] %v3561, 128
  %3578 = vxpose.xlu0.b32.cont [9/16] %v3562, 128
  %3579 = vxpose.xlu0.b32.cont [10/16] %v3563, 128
  %3580 = vxpose.xlu0.b32.cont [11/16] %v3564, 128
  %3581 = vxpose.xlu0.b32.cont [12/16] %v3565, 128
  %3582 = vxpose.xlu0.b32.cont [13/16] %v3566, 128
  %3583 = vxpose.xlu0.b32.cont [14/16] %v3567, 128
  %3584 = vxpose.xlu0.b32.cont [15/16] %v3568, 128
  %3585 = vxpose.xlu0.b32.end [16/16] %v3569, 128
  %v3586 = vpop.trf.xlu0
  %v3587 = vpop.trf.xlu0
  %v3588 = vpop.trf.xlu0
  %v3589 = vpop.trf.xlu0
  %v3590 = vpop.trf.xlu0
  %v3591 = vpop.trf.xlu0
  %v3592 = vpop.trf.xlu0
  %v3593 = vpop.trf.xlu0
  %v3594 = vpop.trf.xlu0
  %v3595 = vpop.trf.xlu0
  %v3596 = vpop.trf.xlu0
  %v3597 = vpop.trf.xlu0
  %v3598 = vpop.trf.xlu0
  %v3599 = vpop.trf.xlu0
  %v3600 = vpop.trf.xlu0
  %v3601 = vpop.trf.xlu0
  %3602 = vst.msk [vmem:[%s9] sm:$0xff] %vm3248, %v3586
  %3604 = vrot.lane.b32.xlu0 %v3586, 64
  %v3605 = vpop.permute.xlu0 %3604
  %s3607 = scalar_lea.vmem %s9, 8
  %3608 = vst.msk [vmem:[%s3607] sm:$0xff] %vm3248, %v3605
  // Predicated region
  $region38: #{down_conv_forward.1} parent=0 // pred_check
    _
  $region39: #{down_conv_forward.1} parent=0 // pred_check_branch
    %3610 = sbr.rel (0) target = $region41
  $region40: #{down_conv_forward.1} parent=0 // pred_region
    _
  $region41: #{down_conv_forward.1} parent=0 // pred_fallthru
    _
  // Predicated region
  $region42: #{down_conv_forward.1} parent=0 // pred_check
    _
  $region43: #{down_conv_forward.1} parent=0 // pred_check_branch
    %3612 = sbr.rel (0) target = $region45
  $region44: #{down_conv_forward.1} parent=0 // pred_region
    _
  $region45: #{down_conv_forward.1} parent=0 // pred_fallthru
    _

</llo_original>
